<compile_context>
chip_gen: v6e
topology: v6e:2x2x1
jax: 0.10.0
libtpu: 0.0.40
codegen_flags: <defaults>
</compile_context>

<pallas_src>
import functools
import math

import jax
import jax.numpy as jnp
from jax import lax
from jax.experimental import pallas as pl
from jax.experimental.pallas import tpu as pltpu


# ----------------------------------------------------------------------------
# Pallas kernels: fused decoder (+ cost / NLL heads), everything VMEM-resident
# ----------------------------------------------------------------------------
def _softplus(x):
    # numerically stable softplus (VPU + EUP ops inside the kernel)
    return jnp.maximum(x, 0.0) + jnp.log1p(jnp.exp(-jnp.abs(x)))


def _decoder_logits(z_ref, w_refs, b_refs):
    """5 dense layers (fc + 3 ConvT + final Conv as dense ops), ReLU on all but last."""
    h = z_ref[...]
    n = len(w_refs)
    for i in range(n):
        h = jnp.dot(h, w_refs[i][...], preferred_element_type=jnp.float32)
        h = h + b_refs[i][...]            # (1, N) bias broadcasts over rows
        if i < n - 1:
            h = jnp.maximum(h, 0.0)
    return h                              # (B, P) Bernoulli logits, lane-dense (P=256)


def _decoder_cost_kernel(z_ref, xt_ref,
                         w0, w1, w2, w3, w4, b0, b1, b2, b3, b4,
                         cost_ref):
    # cost[s, d] = sum_p softplus(L[s,p]) - sum_p X[d,p] * L[s,p]   (solver orientation)
    logits = _decoder_logits(z_ref, (w0, w1, w2, w3, w4), (b0, b1, b2, b3, b4))
    sp_sum = _softplus(logits).sum(axis=1, keepdims=True)                   # (B, 1)
    dot = jnp.dot(logits, xt_ref[...], preferred_element_type=jnp.float32)  # (B, D)
    cost_ref[...] = sp_sum - dot


def _decoder_nll_kernel(z_ref, x_ref,
                        w0, w1, w2, w3, w4, b0, b1, b2, b3, b4,
                        nll_ref):
    # NLL fused with the decoder: logits consumed straight from VMEM, never hit HBM.
    logits = _decoder_logits(z_ref, (w0, w1, w2, w3, w4), (b0, b1, b2, b3, b4))
    x = x_ref[...]
    nll_ref[...] = (_softplus(logits) - x * logits).sum(axis=1, keepdims=True)


def _fused_call(kernel, z, x2d, mats, biases, out_shape):
    ins = ([z.astype(jnp.float32), x2d.astype(jnp.float32)]
           + [m.astype(jnp.float32) for m in mats]
           + [b.reshape(1, -1).astype(jnp.float32) for b in biases])
    return pl.pallas_call(
        kernel,
        out_shape=jax.ShapeDtypeStruct(out_shape, jnp.float32),
        grid=(1,),
        in_specs=[pl.BlockSpec(a.shape, lambda i: (0, 0)) for a in ins],
        out_specs=pl.BlockSpec(out_shape, lambda i: (0, 0)),
        compiler_params=pltpu.CompilerParams(dimension_semantics=("arbitrary",)),
    )(*ins)


def fused_decoder_cost(z, x_flat, mats, biases):
    """z (S, latent), x_flat (D, P) -> cost (S, D) (already transposed for solver)."""
    return _fused_call(_decoder_cost_kernel, z, x_flat.T, mats, biases,
                       (z.shape[0], x_flat.shape[0]))


def fused_decoder_nll(z, x_rows, mats, biases):
    """Per-row Bernoulli NLL: rows of x_rows pair with rows of decoder(z)."""
    out = _fused_call(_decoder_nll_kernel, z, x_rows, mats, biases, (z.shape[0], 1))
    return out[:, 0]


# ----------------------------------------------------------------------------
# Dense linear operators for the conv / conv-transpose layers (tiny XLA work,
# built once per forward under jit).  Stride / padding folded into the operator.
# Flattening is NCHW channel-major, matching torch's .view(-1, C, H, W).
# ----------------------------------------------------------------------------
def convt_dense_matrix(w_t, H, W, stride, padding, output_padding):
    """ConvTranspose2d weight (Cin, Cout, kh, kw) -> dense (Cin*H*W, Cout*Ho*Wo)."""
    Cin, Cout, kh, kw = w_t.shape
    Ho = (H - 1) * stride - 2 * padding + kh + output_padding
    Wo = (W - 1) * stride - 2 * padding + kw + output_padding
    # out[oy] gets in[iy] with kernel tap ky = oy + padding - stride*iy
    ky = jnp.arange(Ho)[None, :] + padding - stride * jnp.arange(H)[:, None]   # (H, Ho)
    kx = jnp.arange(Wo)[None, :] + padding - stride * jnp.arange(W)[:, None]   # (W, Wo)
    my = (ky >= 0) & (ky < kh)
    mx = (kx >= 0) & (kx < kw)
    g = w_t[:, :, jnp.clip(ky, 0, kh - 1), :]          # (Cin, Cout, H, Ho, kw)
    g = g[:, :, :, :, jnp.clip(kx, 0, kw - 1)]         # (Cin, Cout, H, Ho, W, Wo)
    mask = my[None, None, :, :, None, None] & mx[None, None, None, None, :, :]
    g = g * mask.astype(g.dtype)
    g = g.transpose(0, 2, 4, 1, 3, 5)                  # (Cin, H, W, Cout, Ho, Wo)
    return g.reshape(Cin * H * W, Cout * Ho * Wo)


def conv_dense_matrix(w, H, W, padding):
    """Conv2d weight (Cout, Cin, kh, kw), stride 1 -> dense (Cin*H*W, Cout*Ho*Wo)."""
    Cout, Cin, kh, kw = w.shape
    Ho = H + 2 * padding - kh + 1
    Wo = W + 2 * padding - kw + 1
    # in[iy] contributes to out[oy] via tap ky = iy - oy + padding
    ky = jnp.arange(H)[:, None] - jnp.arange(Ho)[None, :] + padding            # (H, Ho)
    kx = jnp.arange(W)[:, None] - jnp.arange(Wo)[None, :] + padding            # (W, Wo)
    my = (ky >= 0) & (ky < kh)
    mx = (kx >= 0) & (kx < kw)
    wt = w.transpose(1, 0, 2, 3)                       # (Cin, Cout, kh, kw)
    g = wt[:, :, jnp.clip(ky, 0, kh - 1), :]
    g = g[:, :, :, :, jnp.clip(kx, 0, kw - 1)]
    mask = my[None, None, :, :, None, None] & mx[None, None, None, None, :, :]
    g = g * mask.astype(g.dtype)
    g = g.transpose(0, 2, 4, 1, 3, 5)
    return g.reshape(Cin * H * W, Cout * Ho * Wo)


# ----------------------------------------------------------------------------
# Config / params (small shapes consistent with the module)
# ----------------------------------------------------------------------------
class Config:
    in_channels = 1
    latent_dim = 8
    img_size = 16
    n_channels = (8, 8, 4)
    num_data = 32
    n_sample = 16
    epsilon = 1.0
    maxiter = 50
    first_layer_width = math.ceil(img_size / 2 ** len(n_channels))   # = 2


def init_params(key, cfg):
    flw = cfg.first_layer_width
    ks = jax.random.split(key, 8)

    def w(k, shape, scale=0.1):
        return scale * jax.random.normal(k, shape, dtype=jnp.float32)

    n = cfg.n_channels
    return dict(
        fc_w=w(ks[0], (cfg.latent_dim, n[0] * flw * flw)),
        fc_b=jnp.zeros((n[0] * flw * flw,), jnp.float32),
        ct1_w=w(ks[1], (n[0], n[1], 3, 3)),      # ConvTranspose2d weight (Cin,Cout,3,3)
        ct1_b=jnp.zeros((n[1],), jnp.float32),
        ct2_w=w(ks[2], (n[1], n[2], 3, 3)),
        ct2_b=jnp.zeros((n[2],), jnp.float32),
        fct_w=w(ks[3], (n[2], n[2], 3, 3)),      # final ConvTranspose2d
        fct_b=jnp.zeros((n[2],), jnp.float32),
        fcv_w=w(ks[4], (cfg.in_channels, n[2], 3, 3)),   # final Conv2d (Cout,Cin,3,3)
        fcv_b=jnp.zeros((cfg.in_channels,), jnp.float32),
    )


def build_dense_decoder(params, cfg):
    """Decoder as 5 dense layers: fc, ConvT1, ConvT2, final ConvT, final Conv."""
    flw = cfg.first_layer_width
    # img_size != 28 -> every ConvTranspose2d uses output_padding=1
    m1 = convt_dense_matrix(params["ct1_w"], flw, flw, 2, 1, 1)
    m2 = convt_dense_matrix(params["ct2_w"], 2 * flw, 2 * flw, 2, 1, 1)
    m3 = convt_dense_matrix(params["fct_w"], 4 * flw, 4 * flw, 2, 1, 1)
    m4 = conv_dense_matrix(params["fcv_w"], 8 * flw, 8 * flw, 1)
    mats = (params["fc_w"], m1, m2, m3, m4)
    biases = (params["fc_b"],
              jnp.repeat(params["ct1_b"], (2 * flw) ** 2),
              jnp.repeat(params["ct2_b"], (4 * flw) ** 2),
              jnp.repeat(params["fct_b"], (8 * flw) ** 2),
              jnp.repeat(params["fcv_b"], (8 * flw) ** 2))
    return mats, biases


# ----------------------------------------------------------------------------
# Semi-dual entropic OT solver
# TODO(synk): source of external `solver.solve_semi_dual_entropic` not provided;
#             a standard gradient-ascent on the semi-dual entropic objective is
#             implemented in plain JAX (warm-started dual v, lr=100 as in module).
# ----------------------------------------------------------------------------
def solve_semi_dual_entropic(px, C, reg, num_iter_max, cur_v, lr):
    """C: (n_sample, num_data); source marginal uniform over samples; target px."""
    ns, _ = C.shape
    a = jnp.ones((ns,), jnp.float32) / ns
    logb = jnp.log(px)

    def plan(v):
        logits = (v[None, :] - C) / reg + logb[None, :]
        return a[:, None] * jax.nn.softmax(logits, axis=1)

    def step(_, v):
        pi = plan(v)
        grad = px - pi.sum(axis=0)
        return v + lr * grad

    v = lax.fori_loop(0, num_iter_max, step, cur_v)
    pi = plan(v)
    u = -reg * jax.nn.logsumexp((v[None, :] - C) / reg + logb[None, :], axis=1)
    loss = jnp.sum(a * u) + jnp.sum(px * v)
    return pi, u, v, loss


# ----------------------------------------------------------------------------
# CoopCommSemiDual2 forward
# ----------------------------------------------------------------------------
def coop_comm_forward(params, data, idx, key, cfg, n_resample=2):
    num_data = data.shape[0]
    px = jnp.ones((num_data,), jnp.float32) / num_data
    x_flat_all = data.reshape(num_data, -1).astype(jnp.float32)

    mats, biases = build_dense_decoder(params, cfg)

    # One batched z draw + ONE fused decoder+cost Pallas call for all resample passes.
    key, zk = jax.random.split(key)
    z_all = jax.random.normal(zk, (n_resample * cfg.n_sample, cfg.latent_dim),
                              dtype=jnp.float32)
    cost_all = fused_decoder_cost(z_all, x_flat_all, mats, biases)   # (R*S, D)

    v = jnp.zeros((num_data,), jnp.float32)   # warm-started dual across resamples
    w_xz = None
    for r in range(n_resample):
        c = cost_all[r * cfg.n_sample:(r + 1) * cfg.n_sample]        # (n_sample, num_data)
        pi, _u, v, _loss = solve_semi_dual_entropic(
            px, c, cfg.epsilon, cfg.maxiter, v, lr=100.0)
        w_xz = pi.T                                                  # (num_data, n_sample)

    z_last = z_all[(n_resample - 1) * cfg.n_sample:]                 # last resample's z

    x = data[idx]
    w_rows = w_xz[idx]                                               # (batch, n_sample)
    key, sk = jax.random.split(key)
    s = jax.random.categorical(sk, jnp.log(w_rows + 1e-30), axis=-1)
    z_sample = z_last[s]                                             # (batch, latent_dim)
    # fused decoder + Bernoulli NLL head (final logits never leave VMEM)
    C = fused_decoder_nll(z_sample, x.reshape(x.shape[0], -1), mats, biases)
    return C, z_sample


# ----------------------------------------------------------------------------
if __name__ == "__main__":
    cfg = Config()
    key = jax.random.PRNGKey(0)
    key, pk, dk = jax.random.split(key, 3)

    params = init_params(pk, cfg)
    # binary "images" (Bernoulli data), shape (num_data, in_channels, 16, 16)
    data = (jax.random.uniform(dk, (cfg.num_data, cfg.in_channels,
                                    cfg.img_size, cfg.img_size)) > 0.5
            ).astype(jnp.float32)
    idx = jnp.array([0, 3, 7, 11], dtype=jnp.int32)

    forward = jax.jit(functools.partial(coop_comm_forward, cfg=cfg, n_resample=2))
    C, z_sample = forward(params, data, idx, key)
    jax.block_until_ready((C, z_sample))

    assert C.shape == (idx.shape[0],)
    assert z_sample.shape == (idx.shape[0], cfg.latent_dim)
    assert bool(jnp.all(jnp.isfinite(C))) and bool(jnp.all(jnp.isfinite(z_sample)))
    print("KERNEL_OK")
</pallas_src>

<mosaic_0001>
module attributes {stable_mosaic.version = 11 : i64} {
  func.func @_decoder_cost_kernel(%arg0: i32, %arg1: memref<32x8xf32, #tpu.memory_space<vmem>>, %arg2: memref<256x32xf32, #tpu.memory_space<vmem>>, %arg3: memref<8x32xf32, #tpu.memory_space<vmem>>, %arg4: memref<32x128xf32, #tpu.memory_space<vmem>>, %arg5: memref<128x256xf32, #tpu.memory_space<vmem>>, %arg6: memref<256x1024xf32, #tpu.memory_space<vmem>>, %arg7: memref<1024x256xf32, #tpu.memory_space<vmem>>, %arg8: memref<1x32xf32, #tpu.memory_space<vmem>>, %arg9: memref<1x128xf32, #tpu.memory_space<vmem>>, %arg10: memref<1x256xf32, #tpu.memory_space<vmem>>, %arg11: memref<1x1024xf32, #tpu.memory_space<vmem>>, %arg12: memref<1x256xf32, #tpu.memory_space<vmem>>, %arg13: memref<32x32xf32, #tpu.memory_space<vmem>>) attributes {dimension_semantics = [#tpu.dimension_semantics<arbitrary>], iteration_bounds = array<i64: 1>, scalar_prefetch = 0 : i64, scratch_operands = 0 : i64, tpu.core_type = #tpu.core_type<tc>, window_params = [{pipeline_mode = #tpu.pipeline_mode<synchronous>, transform_indices = @transform_0, window_bounds = array<i64: 32, 8>}, {pipeline_mode = #tpu.pipeline_mode<synchronous>, transform_indices = @transform_1, window_bounds = array<i64: 256, 32>}, {pipeline_mode = #tpu.pipeline_mode<synchronous>, transform_indices = @transform_2, window_bounds = array<i64: 8, 32>}, {pipeline_mode = #tpu.pipeline_mode<synchronous>, transform_indices = @transform_3, window_bounds = array<i64: 32, 128>}, {pipeline_mode = #tpu.pipeline_mode<synchronous>, transform_indices = @transform_4, window_bounds = array<i64: 128, 256>}, {pipeline_mode = #tpu.pipeline_mode<synchronous>, transform_indices = @transform_5, window_bounds = array<i64: 256, 1024>}, {pipeline_mode = #tpu.pipeline_mode<synchronous>, transform_indices = @transform_6, window_bounds = array<i64: 1024, 256>}, {pipeline_mode = #tpu.pipeline_mode<synchronous>, transform_indices = @transform_7, window_bounds = array<i64: 1, 32>}, {pipeline_mode = #tpu.pipeline_mode<synchronous>, transform_indices = @transform_8, window_bounds = array<i64: 1, 128>}, {pipeline_mode = #tpu.pipeline_mode<synchronous>, transform_indices = @transform_9, window_bounds = array<i64: 1, 256>}, {pipeline_mode = #tpu.pipeline_mode<synchronous>, transform_indices = @transform_10, window_bounds = array<i64: 1, 1024>}, {pipeline_mode = #tpu.pipeline_mode<synchronous>, transform_indices = @transform_11, window_bounds = array<i64: 1, 256>}, {pipeline_mode = #tpu.pipeline_mode<synchronous>, transform_indices = @transform_12, window_bounds = array<i64: 32, 32>}]} {
    %c0 = arith.constant 0 : index
    %c0_0 = arith.constant 0 : index
    %0 = vector.load %arg1[%c0, %c0_0] : memref<32x8xf32, #tpu.memory_space<vmem>>, vector<32x8xf32>
    %c0_1 = arith.constant 0 : index
    %c0_2 = arith.constant 0 : index
    %1 = vector.load %arg3[%c0_1, %c0_2] : memref<8x32xf32, #tpu.memory_space<vmem>>, vector<8x32xf32>
    %cst = arith.constant dense<0.000000e+00> : vector<32x32xf32>
    %2 = tpu.matmul %0, %1, %cst {dimension_numbers = #tpu.dot_dimension_numbers<[1], [0], [0], [1], [0, 0, 1, 1], [], []>} : vector<32x8xf32>, vector<8x32xf32>, vector<32x32xf32> -> vector<32x32xf32>
    %c0_3 = arith.constant 0 : index
    %c0_4 = arith.constant 0 : index
    %3 = vector.load %arg8[%c0_3, %c0_4] : memref<1x32xf32, #tpu.memory_space<vmem>>, vector<1x32xf32>
    %4 = vector.broadcast %3 : vector<1x32xf32> to vector<32x32xf32>
    %5 = arith.addf %2, %4 : vector<32x32xf32>
    %cst_5 = arith.constant 0.000000e+00 : f32
    %6 = vector.broadcast %cst_5 : f32 to vector<32x32xf32>
    %7 = arith.maximumf %5, %6 : vector<32x32xf32>
    %c0_6 = arith.constant 0 : index
    %c0_7 = arith.constant 0 : index
    %8 = vector.load %arg4[%c0_6, %c0_7] : memref<32x128xf32, #tpu.memory_space<vmem>>, vector<32x128xf32>
    %cst_8 = arith.constant dense<0.000000e+00> : vector<32x128xf32>
    %9 = tpu.matmul %7, %8, %cst_8 {dimension_numbers = #tpu.dot_dimension_numbers<[1], [0], [0], [1], [0, 0, 1, 1], [], []>} : vector<32x32xf32>, vector<32x128xf32>, vector<32x128xf32> -> vector<32x128xf32>
    %c0_9 = arith.constant 0 : index
    %c0_10 = arith.constant 0 : index
    %10 = vector.load %arg9[%c0_9, %c0_10] : memref<1x128xf32, #tpu.memory_space<vmem>>, vector<1x128xf32>
    %11 = vector.broadcast %10 : vector<1x128xf32> to vector<32x128xf32>
    %12 = arith.addf %9, %11 : vector<32x128xf32>
    %cst_11 = arith.constant 0.000000e+00 : f32
    %13 = vector.broadcast %cst_11 : f32 to vector<32x128xf32>
    %14 = arith.maximumf %12, %13 : vector<32x128xf32>
    %c0_12 = arith.constant 0 : index
    %c0_13 = arith.constant 0 : index
    %15 = vector.load %arg5[%c0_12, %c0_13] : memref<128x256xf32, #tpu.memory_space<vmem>>, vector<128x256xf32>
    %cst_14 = arith.constant dense<0.000000e+00> : vector<32x256xf32>
    %16 = tpu.matmul %14, %15, %cst_14 {dimension_numbers = #tpu.dot_dimension_numbers<[1], [0], [0], [1], [0, 0, 1, 1], [], []>} : vector<32x128xf32>, vector<128x256xf32>, vector<32x256xf32> -> vector<32x256xf32>
    %c0_15 = arith.constant 0 : index
    %c0_16 = arith.constant 0 : index
    %17 = vector.load %arg10[%c0_15, %c0_16] : memref<1x256xf32, #tpu.memory_space<vmem>>, vector<1x256xf32>
    %18 = vector.broadcast %17 : vector<1x256xf32> to vector<32x256xf32>
    %19 = arith.addf %16, %18 : vector<32x256xf32>
    %cst_17 = arith.constant 0.000000e+00 : f32
    %20 = vector.broadcast %cst_17 : f32 to vector<32x256xf32>
    %21 = arith.maximumf %19, %20 : vector<32x256xf32>
    %c0_18 = arith.constant 0 : index
    %c0_19 = arith.constant 0 : index
    %22 = vector.load %arg6[%c0_18, %c0_19] : memref<256x1024xf32, #tpu.memory_space<vmem>>, vector<256x1024xf32>
    %cst_20 = arith.constant dense<0.000000e+00> : vector<32x1024xf32>
    %23 = tpu.matmul %21, %22, %cst_20 {dimension_numbers = #tpu.dot_dimension_numbers<[1], [0], [0], [1], [0, 0, 1, 1], [], []>} : vector<32x256xf32>, vector<256x1024xf32>, vector<32x1024xf32> -> vector<32x1024xf32>
    %c0_21 = arith.constant 0 : index
    %c0_22 = arith.constant 0 : index
    %24 = vector.load %arg11[%c0_21, %c0_22] : memref<1x1024xf32, #tpu.memory_space<vmem>>, vector<1x1024xf32>
    %25 = vector.broadcast %24 : vector<1x1024xf32> to vector<32x1024xf32>
    %26 = arith.addf %23, %25 : vector<32x1024xf32>
    %cst_23 = arith.constant 0.000000e+00 : f32
    %27 = vector.broadcast %cst_23 : f32 to vector<32x1024xf32>
    %28 = arith.maximumf %26, %27 : vector<32x1024xf32>
    %c0_24 = arith.constant 0 : index
    %c0_25 = arith.constant 0 : index
    %29 = vector.load %arg7[%c0_24, %c0_25] : memref<1024x256xf32, #tpu.memory_space<vmem>>, vector<1024x256xf32>
    %cst_26 = arith.constant dense<0.000000e+00> : vector<32x256xf32>
    %30 = tpu.matmul %28, %29, %cst_26 {dimension_numbers = #tpu.dot_dimension_numbers<[1], [0], [0], [1], [0, 0, 1, 1], [], []>} : vector<32x1024xf32>, vector<1024x256xf32>, vector<32x256xf32> -> vector<32x256xf32>
    %c0_27 = arith.constant 0 : index
    %c0_28 = arith.constant 0 : index
    %31 = vector.load %arg12[%c0_27, %c0_28] : memref<1x256xf32, #tpu.memory_space<vmem>>, vector<1x256xf32>
    %32 = vector.broadcast %31 : vector<1x256xf32> to vector<32x256xf32>
    %33 = arith.addf %30, %32 : vector<32x256xf32>
    %cst_29 = arith.constant 0.000000e+00 : f32
    %34 = vector.broadcast %cst_29 : f32 to vector<32x256xf32>
    %35 = arith.maximumf %33, %34 : vector<32x256xf32>
    %36 = math.absf %33 : vector<32x256xf32>
    %cst_30 = arith.constant 0.000000e+00 : f32
    %37 = vector.broadcast %cst_30 : f32 to vector<32x256xf32>
    %38 = arith.subf %37, %36 : vector<32x256xf32>
    %39 = math.exp %38 : vector<32x256xf32>
    %40 = math.log1p %39 : vector<32x256xf32>
    %41 = arith.addf %35, %40 : vector<32x256xf32>
    %cst_31 = arith.constant dense<0.000000e+00> : vector<32xf32>
    %42 = vector.multi_reduction <add>, %41, %cst_31 [1] : vector<32x256xf32> to vector<32xf32>
    %43 = vector.shape_cast %42 : vector<32xf32> to vector<32x1xf32>
    %c0_32 = arith.constant 0 : index
    %c0_33 = arith.constant 0 : index
    %44 = vector.load %arg2[%c0_32, %c0_33] : memref<256x32xf32, #tpu.memory_space<vmem>>, vector<256x32xf32>
    %cst_34 = arith.constant dense<0.000000e+00> : vector<32x32xf32>
    %45 = tpu.matmul %33, %44, %cst_34 {dimension_numbers = #tpu.dot_dimension_numbers<[1], [0], [0], [1], [0, 0, 1, 1], [], []>} : vector<32x256xf32>, vector<256x32xf32>, vector<32x32xf32> -> vector<32x32xf32>
    %46 = vector.broadcast %43 : vector<32x1xf32> to vector<32x32xf32>
    %47 = arith.subf %46, %45 : vector<32x32xf32>
    %c0_35 = arith.constant 0 : index
    %c0_36 = arith.constant 0 : index
    %48 = vector.load %arg13[%c0_35, %c0_36] : memref<32x32xf32, #tpu.memory_space<vmem>>, vector<32x32xf32>
    tpu.vector_store %arg13[%c0_35, %c0_36], %47 {strides = array<i32>} : memref<32x32xf32, #tpu.memory_space<vmem>>, vector<32x32xf32>,
    return
  }
  func.func @transform_0(%arg0: i32) -> (i32, i32) {
    %c0_i32 = arith.constant 0 : i32
    %c0_i32_0 = arith.constant 0 : i32
    %c0_i32_1 = arith.constant 0 : i32
    return %c0_i32, %c0_i32_0 : i32, i32
  }
  func.func @transform_1(%arg0: i32) -> (i32, i32) {
    %c0_i32 = arith.constant 0 : i32
    %c0_i32_0 = arith.constant 0 : i32
    %c0_i32_1 = arith.constant 0 : i32
    return %c0_i32, %c0_i32_0 : i32, i32
  }
  func.func @transform_2(%arg0: i32) -> (i32, i32) {
    %c0_i32 = arith.constant 0 : i32
    %c0_i32_0 = arith.constant 0 : i32
    %c0_i32_1 = arith.constant 0 : i32
    return %c0_i32, %c0_i32_0 : i32, i32
  }
  func.func @transform_3(%arg0: i32) -> (i32, i32) {
    %c0_i32 = arith.constant 0 : i32
    %c0_i32_0 = arith.constant 0 : i32
    %c0_i32_1 = arith.constant 0 : i32
    return %c0_i32, %c0_i32_0 : i32, i32
  }
  func.func @transform_4(%arg0: i32) -> (i32, i32) {
    %c0_i32 = arith.constant 0 : i32
    %c0_i32_0 = arith.constant 0 : i32
    %c0_i32_1 = arith.constant 0 : i32
    return %c0_i32, %c0_i32_0 : i32, i32
  }
  func.func @transform_5(%arg0: i32) -> (i32, i32) {
    %c0_i32 = arith.constant 0 : i32
    %c0_i32_0 = arith.constant 0 : i32
    %c0_i32_1 = arith.constant 0 : i32
    return %c0_i32, %c0_i32_0 : i32, i32
  }
  func.func @transform_6(%arg0: i32) -> (i32, i32) {
    %c0_i32 = arith.constant 0 : i32
    %c0_i32_0 = arith.constant 0 : i32
    %c0_i32_1 = arith.constant 0 : i32
    return %c0_i32, %c0_i32_0 : i32, i32
  }
  func.func @transform_7(%arg0: i32) -> (i32, i32) {
    %c0_i32 = arith.constant 0 : i32
    %c0_i32_0 = arith.constant 0 : i32
    %c0_i32_1 = arith.constant 0 : i32
    return %c0_i32, %c0_i32_0 : i32, i32
  }
  func.func @transform_8(%arg0: i32) -> (i32, i32) {
    %c0_i32 = arith.constant 0 : i32
    %c0_i32_0 = arith.constant 0 : i32
    %c0_i32_1 = arith.constant 0 : i32
    return %c0_i32, %c0_i32_0 : i32, i32
  }
  func.func @transform_9(%arg0: i32) -> (i32, i32) {
    %c0_i32 = arith.constant 0 : i32
    %c0_i32_0 = arith.constant 0 : i32
    %c0_i32_1 = arith.constant 0 : i32
    return %c0_i32, %c0_i32_0 : i32, i32
  }
  func.func @transform_10(%arg0: i32) -> (i32, i32) {
    %c0_i32 = arith.constant 0 : i32
    %c0_i32_0 = arith.constant 0 : i32
    %c0_i32_1 = arith.constant 0 : i32
    return %c0_i32, %c0_i32_0 : i32, i32
  }
  func.func @transform_11(%arg0: i32) -> (i32, i32) {
    %c0_i32 = arith.constant 0 : i32
    %c0_i32_0 = arith.constant 0 : i32
    %c0_i32_1 = arith.constant 0 : i32
    return %c0_i32, %c0_i32_0 : i32, i32
  }
  func.func @transform_12(%arg0: i32) -> (i32, i32) {
    %c0_i32 = arith.constant 0 : i32
    %c0_i32_0 = arith.constant 0 : i32
    %c0_i32_1 = arith.constant 0 : i32
    return %c0_i32, %c0_i32_0 : i32, i32
  }
}

module attributes {stable_mosaic.version = 11 : i64} {
  func.func @_decoder_nll_kernel(%arg0: i32, %arg1: memref<4x8xf32, #tpu.memory_space<vmem>>, %arg2: memref<4x256xf32, #tpu.memory_space<vmem>>, %arg3: memref<8x32xf32, #tpu.memory_space<vmem>>, %arg4: memref<32x128xf32, #tpu.memory_space<vmem>>, %arg5: memref<128x256xf32, #tpu.memory_space<vmem>>, %arg6: memref<256x1024xf32, #tpu.memory_space<vmem>>, %arg7: memref<1024x256xf32, #tpu.memory_space<vmem>>, %arg8: memref<1x32xf32, #tpu.memory_space<vmem>>, %arg9: memref<1x128xf32, #tpu.memory_space<vmem>>, %arg10: memref<1x256xf32, #tpu.memory_space<vmem>>, %arg11: memref<1x1024xf32, #tpu.memory_space<vmem>>, %arg12: memref<1x256xf32, #tpu.memory_space<vmem>>, %arg13: memref<4x1xf32, #tpu.memory_space<vmem>>) attributes {dimension_semantics = [#tpu.dimension_semantics<arbitrary>], iteration_bounds = array<i64: 1>, scalar_prefetch = 0 : i64, scratch_operands = 0 : i64, tpu.core_type = #tpu.core_type<tc>, window_params = [{pipeline_mode = #tpu.pipeline_mode<synchronous>, transform_indices = @transform_0, window_bounds = array<i64: 4, 8>}, {pipeline_mode = #tpu.pipeline_mode<synchronous>, transform_indices = @transform_1, window_bounds = array<i64: 4, 256>}, {pipeline_mode = #tpu.pipeline_mode<synchronous>, transform_indices = @transform_2, window_bounds = array<i64: 8, 32>}, {pipeline_mode = #tpu.pipeline_mode<synchronous>, transform_indices = @transform_3, window_bounds = array<i64: 32, 128>}, {pipeline_mode = #tpu.pipeline_mode<synchronous>, transform_indices = @transform_4, window_bounds = array<i64: 128, 256>}, {pipeline_mode = #tpu.pipeline_mode<synchronous>, transform_indices = @transform_5, window_bounds = array<i64: 256, 1024>}, {pipeline_mode = #tpu.pipeline_mode<synchronous>, transform_indices = @transform_6, window_bounds = array<i64: 1024, 256>}, {pipeline_mode = #tpu.pipeline_mode<synchronous>, transform_indices = @transform_7, window_bounds = array<i64: 1, 32>}, {pipeline_mode = #tpu.pipeline_mode<synchronous>, transform_indices = @transform_8, window_bounds = array<i64: 1, 128>}, {pipeline_mode = #tpu.pipeline_mode<synchronous>, transform_indices = @transform_9, window_bounds = array<i64: 1, 256>}, {pipeline_mode = #tpu.pipeline_mode<synchronous>, transform_indices = @transform_10, window_bounds = array<i64: 1, 1024>}, {pipeline_mode = #tpu.pipeline_mode<synchronous>, transform_indices = @transform_11, window_bounds = array<i64: 1, 256>}, {pipeline_mode = #tpu.pipeline_mode<synchronous>, transform_indices = @transform_12, window_bounds = array<i64: 4, 1>}]} {
    %c0 = arith.constant 0 : index
    %c0_0 = arith.constant 0 : index
    %0 = vector.load %arg1[%c0, %c0_0] : memref<4x8xf32, #tpu.memory_space<vmem>>, vector<4x8xf32>
    %c0_1 = arith.constant 0 : index
    %c0_2 = arith.constant 0 : index
    %1 = vector.load %arg3[%c0_1, %c0_2] : memref<8x32xf32, #tpu.memory_space<vmem>>, vector<8x32xf32>
    %cst = arith.constant dense<0.000000e+00> : vector<4x32xf32>
    %2 = tpu.matmul %0, %1, %cst {dimension_numbers = #tpu.dot_dimension_numbers<[1], [0], [0], [1], [0, 0, 1, 1], [], []>} : vector<4x8xf32>, vector<8x32xf32>, vector<4x32xf32> -> vector<4x32xf32>
    %c0_3 = arith.constant 0 : index
    %c0_4 = arith.constant 0 : index
    %3 = vector.load %arg8[%c0_3, %c0_4] : memref<1x32xf32, #tpu.memory_space<vmem>>, vector<1x32xf32>
    %4 = vector.broadcast %3 : vector<1x32xf32> to vector<4x32xf32>
    %5 = arith.addf %2, %4 : vector<4x32xf32>
    %cst_5 = arith.constant 0.000000e+00 : f32
    %6 = vector.broadcast %cst_5 : f32 to vector<4x32xf32>
    %7 = arith.maximumf %5, %6 : vector<4x32xf32>
    %c0_6 = arith.constant 0 : index
    %c0_7 = arith.constant 0 : index
    %8 = vector.load %arg4[%c0_6, %c0_7] : memref<32x128xf32, #tpu.memory_space<vmem>>, vector<32x128xf32>
    %cst_8 = arith.constant dense<0.000000e+00> : vector<4x128xf32>
    %9 = tpu.matmul %7, %8, %cst_8 {dimension_numbers = #tpu.dot_dimension_numbers<[1], [0], [0], [1], [0, 0, 1, 1], [], []>} : vector<4x32xf32>, vector<32x128xf32>, vector<4x128xf32> -> vector<4x128xf32>
    %c0_9 = arith.constant 0 : index
    %c0_10 = arith.constant 0 : index
    %10 = vector.load %arg9[%c0_9, %c0_10] : memref<1x128xf32, #tpu.memory_space<vmem>>, vector<1x128xf32>
    %11 = vector.broadcast %10 : vector<1x128xf32> to vector<4x128xf32>
    %12 = arith.addf %9, %11 : vector<4x128xf32>
    %cst_11 = arith.constant 0.000000e+00 : f32
    %13 = vector.broadcast %cst_11 : f32 to vector<4x128xf32>
    %14 = arith.maximumf %12, %13 : vector<4x128xf32>
    %c0_12 = arith.constant 0 : index
    %c0_13 = arith.constant 0 : index
    %15 = vector.load %arg5[%c0_12, %c0_13] : memref<128x256xf32, #tpu.memory_space<vmem>>, vector<128x256xf32>
    %cst_14 = arith.constant dense<0.000000e+00> : vector<4x256xf32>
    %16 = tpu.matmul %14, %15, %cst_14 {dimension_numbers = #tpu.dot_dimension_numbers<[1], [0], [0], [1], [0, 0, 1, 1], [], []>} : vector<4x128xf32>, vector<128x256xf32>, vector<4x256xf32> -> vector<4x256xf32>
    %c0_15 = arith.constant 0 : index
    %c0_16 = arith.constant 0 : index
    %17 = vector.load %arg10[%c0_15, %c0_16] : memref<1x256xf32, #tpu.memory_space<vmem>>, vector<1x256xf32>
    %18 = vector.broadcast %17 : vector<1x256xf32> to vector<4x256xf32>
    %19 = arith.addf %16, %18 : vector<4x256xf32>
    %cst_17 = arith.constant 0.000000e+00 : f32
    %20 = vector.broadcast %cst_17 : f32 to vector<4x256xf32>
    %21 = arith.maximumf %19, %20 : vector<4x256xf32>
    %c0_18 = arith.constant 0 : index
    %c0_19 = arith.constant 0 : index
    %22 = vector.load %arg6[%c0_18, %c0_19] : memref<256x1024xf32, #tpu.memory_space<vmem>>, vector<256x1024xf32>
    %cst_20 = arith.constant dense<0.000000e+00> : vector<4x1024xf32>
    %23 = tpu.matmul %21, %22, %cst_20 {dimension_numbers = #tpu.dot_dimension_numbers<[1], [0], [0], [1], [0, 0, 1, 1], [], []>} : vector<4x256xf32>, vector<256x1024xf32>, vector<4x1024xf32> -> vector<4x1024xf32>
    %c0_21 = arith.constant 0 : index
    %c0_22 = arith.constant 0 : index
    %24 = vector.load %arg11[%c0_21, %c0_22] : memref<1x1024xf32, #tpu.memory_space<vmem>>, vector<1x1024xf32>
    %25 = vector.broadcast %24 : vector<1x1024xf32> to vector<4x1024xf32>
    %26 = arith.addf %23, %25 : vector<4x1024xf32>
    %cst_23 = arith.constant 0.000000e+00 : f32
    %27 = vector.broadcast %cst_23 : f32 to vector<4x1024xf32>
    %28 = arith.maximumf %26, %27 : vector<4x1024xf32>
    %c0_24 = arith.constant 0 : index
    %c0_25 = arith.constant 0 : index
    %29 = vector.load %arg7[%c0_24, %c0_25] : memref<1024x256xf32, #tpu.memory_space<vmem>>, vector<1024x256xf32>
    %cst_26 = arith.constant dense<0.000000e+00> : vector<4x256xf32>
    %30 = tpu.matmul %28, %29, %cst_26 {dimension_numbers = #tpu.dot_dimension_numbers<[1], [0], [0], [1], [0, 0, 1, 1], [], []>} : vector<4x1024xf32>, vector<1024x256xf32>, vector<4x256xf32> -> vector<4x256xf32>
    %c0_27 = arith.constant 0 : index
    %c0_28 = arith.constant 0 : index
    %31 = vector.load %arg12[%c0_27, %c0_28] : memref<1x256xf32, #tpu.memory_space<vmem>>, vector<1x256xf32>
    %32 = vector.broadcast %31 : vector<1x256xf32> to vector<4x256xf32>
    %33 = arith.addf %30, %32 : vector<4x256xf32>
    %c0_29 = arith.constant 0 : index
    %c0_30 = arith.constant 0 : index
    %34 = vector.load %arg2[%c0_29, %c0_30] : memref<4x256xf32, #tpu.memory_space<vmem>>, vector<4x256xf32>
    %cst_31 = arith.constant 0.000000e+00 : f32
    %35 = vector.broadcast %cst_31 : f32 to vector<4x256xf32>
    %36 = arith.maximumf %33, %35 : vector<4x256xf32>
    %37 = math.absf %33 : vector<4x256xf32>
    %cst_32 = arith.constant 0.000000e+00 : f32
    %38 = vector.broadcast %cst_32 : f32 to vector<4x256xf32>
    %39 = arith.subf %38, %37 : vector<4x256xf32>
    %40 = math.exp %39 : vector<4x256xf32>
    %41 = math.log1p %40 : vector<4x256xf32>
    %42 = arith.addf %36, %41 : vector<4x256xf32>
    %43 = arith.mulf %34, %33 : vector<4x256xf32>
    %44 = arith.subf %42, %43 : vector<4x256xf32>
    %cst_33 = arith.constant dense<0.000000e+00> : vector<4xf32>
    %45 = vector.multi_reduction <add>, %44, %cst_33 [1] : vector<4x256xf32> to vector<4xf32>
    %46 = vector.shape_cast %45 : vector<4xf32> to vector<4x1xf32>
    %c0_34 = arith.constant 0 : index
    %c0_35 = arith.constant 0 : index
    %47 = vector.load %arg13[%c0_34, %c0_35] : memref<4x1xf32, #tpu.memory_space<vmem>>, vector<4x1xf32>
    tpu.vector_store %arg13[%c0_34, %c0_35], %46 {strides = array<i32>} : memref<4x1xf32, #tpu.memory_space<vmem>>, vector<4x1xf32>,
    return
  }
  func.func @transform_0(%arg0: i32) -> (i32, i32) {
    %c0_i32 = arith.constant 0 : i32
    %c0_i32_0 = arith.constant 0 : i32
    %c0_i32_1 = arith.constant 0 : i32
    return %c0_i32, %c0_i32_0 : i32, i32
  }
  func.func @transform_1(%arg0: i32) -> (i32, i32) {
    %c0_i32 = arith.constant 0 : i32
    %c0_i32_0 = arith.constant 0 : i32
    %c0_i32_1 = arith.constant 0 : i32
    return %c0_i32, %c0_i32_0 : i32, i32
  }
  func.func @transform_2(%arg0: i32) -> (i32, i32) {
    %c0_i32 = arith.constant 0 : i32
    %c0_i32_0 = arith.constant 0 : i32
    %c0_i32_1 = arith.constant 0 : i32
    return %c0_i32, %c0_i32_0 : i32, i32
  }
  func.func @transform_3(%arg0: i32) -> (i32, i32) {
    %c0_i32 = arith.constant 0 : i32
    %c0_i32_0 = arith.constant 0 : i32
    %c0_i32_1 = arith.constant 0 : i32
    return %c0_i32, %c0_i32_0 : i32, i32
  }
  func.func @transform_4(%arg0: i32) -> (i32, i32) {
    %c0_i32 = arith.constant 0 : i32
    %c0_i32_0 = arith.constant 0 : i32
    %c0_i32_1 = arith.constant 0 : i32
    return %c0_i32, %c0_i32_0 : i32, i32
  }
  func.func @transform_5(%arg0: i32) -> (i32, i32) {
    %c0_i32 = arith.constant 0 : i32
    %c0_i32_0 = arith.constant 0 : i32
    %c0_i32_1 = arith.constant 0 : i32
    return %c0_i32, %c0_i32_0 : i32, i32
  }
  func.func @transform_6(%arg0: i32) -> (i32, i32) {
    %c0_i32 = arith.constant 0 : i32
    %c0_i32_0 = arith.constant 0 : i32
    %c0_i32_1 = arith.constant 0 : i32
    return %c0_i32, %c0_i32_0 : i32, i32
  }
  func.func @transform_7(%arg0: i32) -> (i32, i32) {
    %c0_i32 = arith.constant 0 : i32
    %c0_i32_0 = arith.constant 0 : i32
    %c0_i32_1 = arith.constant 0 : i32
    return %c0_i32, %c0_i32_0 : i32, i32
  }
  func.func @transform_8(%arg0: i32) -> (i32, i32) {
    %c0_i32 = arith.constant 0 : i32
    %c0_i32_0 = arith.constant 0 : i32
    %c0_i32_1 = arith.constant 0 : i32
    return %c0_i32, %c0_i32_0 : i32, i32
  }
  func.func @transform_9(%arg0: i32) -> (i32, i32) {
    %c0_i32 = arith.constant 0 : i32
    %c0_i32_0 = arith.constant 0 : i32
    %c0_i32_1 = arith.constant 0 : i32
    return %c0_i32, %c0_i32_0 : i32, i32
  }
  func.func @transform_10(%arg0: i32) -> (i32, i32) {
    %c0_i32 = arith.constant 0 : i32
    %c0_i32_0 = arith.constant 0 : i32
    %c0_i32_1 = arith.constant 0 : i32
    return %c0_i32, %c0_i32_0 : i32, i32
  }
  func.func @transform_11(%arg0: i32) -> (i32, i32) {
    %c0_i32 = arith.constant 0 : i32
    %c0_i32_0 = arith.constant 0 : i32
    %c0_i32_1 = arith.constant 0 : i32
    return %c0_i32, %c0_i32_0 : i32, i32
  }
  func.func @transform_12(%arg0: i32) -> (i32, i32) {
    %c0_i32 = arith.constant 0 : i32
    %c0_i32_0 = arith.constant 0 : i32
    %c0_i32_1 = arith.constant 0 : i32
    return %c0_i32, %c0_i32_0 : i32, i32
  }
}

</mosaic_0001>

<llo_original>
// kernel: coop_comm_forward.2
$region0: #{coop_comm_forward.2}
  #allocation0 [shape = 'u32[]', space=smem, size = 0x4, offset = 0x4, fixed_abs, tag = 'smem constant byte address 0x4 - core index']
  #allocation1 [shape = 'u32[144,128]{1,0:T(1,128)}', space=vmem, size = 0x12000, scoped, tag = 'internal scratch']
  %s0 = inlined_call_operand.vmem [shape: f32[32,8], index: 0, kind: input, shape index: {}]
  %s1 = inlined_call_operand.vmem [shape: f32[256,32], index: 1, kind: input, shape index: {}]
  %s2 = inlined_call_operand.vmem [shape: f32[8,32], index: 2, kind: input, shape index: {}]
  %s3 = inlined_call_operand.vmem [shape: f32[32,128], index: 3, kind: input, shape index: {}]
  %s4 = inlined_call_operand.vmem [shape: f32[128,256], index: 4, kind: input, shape index: {}]
  %s5 = inlined_call_operand.vmem [shape: f32[256,1024], index: 5, kind: input, shape index: {}]
  %s6 = inlined_call_operand.vmem [shape: f32[1024,256], index: 6, kind: input, shape index: {}]
  %s7 = inlined_call_operand.vmem [shape: f32[1,32], index: 7, kind: input, shape index: {}]
  %s8 = inlined_call_operand.vmem [shape: f32[1,128], index: 8, kind: input, shape index: {}]
  %s9 = inlined_call_operand.vmem [shape: f32[1,256], index: 9, kind: input, shape index: {}]
  %s10 = inlined_call_operand.vmem [shape: f32[1,1024], index: 10, kind: input, shape index: {}]
  %s11 = inlined_call_operand.vmem [shape: f32[1,256], index: 11, kind: input, shape index: {}]
  %s12 = inlined_call_operand.vmem [shape: f32[32,32], index: 12, kind: output, shape index: {}]
  %s13 = sld [smem:[#allocation0]]
  $region58: #{coop_comm_forward.2} parent=0
    _
  %s15 = ssub.s32 1, %s13
  %s16 = scalar_select 0, %s15, %s13
  // Predicated region
  $region2: #{coop_comm_forward.2} parent=0 // pred_check
    _
  $region3: #{coop_comm_forward.2} parent=0 // pred_check_branch
    %18 = sbr.rel (0) target = $region5
  $region4: #{coop_comm_forward.2} parent=0 // pred_region
    _
  $region5: #{coop_comm_forward.2} parent=0 // pred_fallthru
    _
  // Predicated region
  $region6: #{coop_comm_forward.2} parent=0 // pred_check
    _
  $region7: #{coop_comm_forward.2} parent=0 // pred_check_branch
    %20 = sbr.rel (0) target = $region9
  $region8: #{coop_comm_forward.2} parent=0 // pred_region
    _
  $region9: #{coop_comm_forward.2} parent=0 // pred_fallthru
    _
  // Predicated region
  $region10: #{coop_comm_forward.2} parent=0 // pred_check
    _
  $region11: #{coop_comm_forward.2} parent=0 // pred_check_branch
    %22 = sbr.rel (0) target = $region13
  $region12: #{coop_comm_forward.2} parent=0 // pred_region
    _
  $region13: #{coop_comm_forward.2} parent=0 // pred_fallthru
    _
  // Predicated region
  $region14: #{coop_comm_forward.2} parent=0 // pred_check
    _
  $region15: #{coop_comm_forward.2} parent=0 // pred_check_branch
    %24 = sbr.rel (0) target = $region17
  $region16: #{coop_comm_forward.2} parent=0 // pred_region
    _
  $region17: #{coop_comm_forward.2} parent=0 // pred_fallthru
    _
  // Predicated region
  $region18: #{coop_comm_forward.2} parent=0 // pred_check
    _
  $region19: #{coop_comm_forward.2} parent=0 // pred_check_branch
    %26 = sbr.rel (0) target = $region21
  $region20: #{coop_comm_forward.2} parent=0 // pred_region
    _
  $region21: #{coop_comm_forward.2} parent=0 // pred_fallthru
    _
  // Predicated region
  $region22: #{coop_comm_forward.2} parent=0 // pred_check
    _
  $region23: #{coop_comm_forward.2} parent=0 // pred_check_branch
    %28 = sbr.rel (0) target = $region25
  $region24: #{coop_comm_forward.2} parent=0 // pred_region
    _
  $region25: #{coop_comm_forward.2} parent=0 // pred_fallthru
    _
  // Predicated region
  $region26: #{coop_comm_forward.2} parent=0 // pred_check
    _
  $region27: #{coop_comm_forward.2} parent=0 // pred_check_branch
    %30 = sbr.rel (0) target = $region29
  $region28: #{coop_comm_forward.2} parent=0 // pred_region
    _
  $region29: #{coop_comm_forward.2} parent=0 // pred_fallthru
    _
  // Predicated region
  $region30: #{coop_comm_forward.2} parent=0 // pred_check
    _
  $region31: #{coop_comm_forward.2} parent=0 // pred_check_branch
    %32 = sbr.rel (0) target = $region33
  $region32: #{coop_comm_forward.2} parent=0 // pred_region
    _
  $region33: #{coop_comm_forward.2} parent=0 // pred_fallthru
    _
  // Predicated region
  $region34: #{coop_comm_forward.2} parent=0 // pred_check
    _
  $region35: #{coop_comm_forward.2} parent=0 // pred_check_branch
    %34 = sbr.rel (0) target = $region37
  $region36: #{coop_comm_forward.2} parent=0 // pred_region
    _
  $region37: #{coop_comm_forward.2} parent=0 // pred_fallthru
    _
  // Predicated region
  $region38: #{coop_comm_forward.2} parent=0 // pred_check
    _
  $region39: #{coop_comm_forward.2} parent=0 // pred_check_branch
    %36 = sbr.rel (0) target = $region41
  $region40: #{coop_comm_forward.2} parent=0 // pred_region
    _
  $region41: #{coop_comm_forward.2} parent=0 // pred_fallthru
    _
  // Predicated region
  $region42: #{coop_comm_forward.2} parent=0 // pred_check
    _
  $region43: #{coop_comm_forward.2} parent=0 // pred_check_branch
    %38 = sbr.rel (0) target = $region45
  $region44: #{coop_comm_forward.2} parent=0 // pred_region
    _
  $region45: #{coop_comm_forward.2} parent=0 // pred_fallthru
    _
  // Predicated region
  $region46: #{coop_comm_forward.2} parent=0 // pred_check
    _
  $region47: #{coop_comm_forward.2} parent=0 // pred_check_branch
    %40 = sbr.rel (0) target = $region49
  $region48: #{coop_comm_forward.2} parent=0 // pred_region
    _
  $region49: #{coop_comm_forward.2} parent=0 // pred_fallthru
    _
  %v41 = vld [vmem:[%s0] sm:$0xff]
  %v42 = vld [vmem:[%s0 + $0x8] sm:$0xff]
  %v43 = vld [vmem:[%s0 + $0x10] sm:$0xff]
  %v44 = vld [vmem:[%s0 + $0x18] sm:$0xff]
  %v45 = vld [vmem:[%s2] sm:$0xff]
  %v46 = vld [vmem:[%s7] sm:$0x1]
  %v48 = vlaneseq
  %v49 = vshrl.u32 %v48, 7
  %v50 = vsub.s32 0, %v49
  %v51 = vrot.slane %v46, %v50
  %vm53 = vcmask 64512
  %v55 = vsel %vm53, %v41, 0
  %v58 = vsel %vm53, %v42, 0
  %v61 = vsel %vm53, %v43, 0
  %v64 = vsel %vm53, %v44, 0
  %66 = vmatprep.subr.mxu0 0.0
  %67 = vmatpush1.msra.mxu0 0.0
  %68 = vmatprep.subr.mxu0 0.0
  %69 = vmatpush1.msra.mxu0 0.0
  %70 = vmatprep.subr.mxu0 0.0
  %71 = vmatpush1.msra.mxu0 0.0
  %72 = vmatprep.subr.mxu0 0.0
  %73 = vmatpush1.msra.mxu0 0.0
  %74 = vmatprep.subr.mxu0 0.0
  %75 = vmatpush1.msra.mxu0 0.0
  %76 = vmatprep.subr.mxu0 0.0
  %77 = vmatpush1.msra.mxu0 0.0
  %78 = vmatprep.subr.mxu0 0.0
  %79 = vmatpush1.msra.mxu0 0.0
  %80 = vmatprep.subr.mxu0 0.0
  %81 = vmatpush1.msra.mxu0 0.0
  %82 = vmatprep.subr.mxu0 0.0
  %83 = vmatpush1.msra.mxu0 0.0
  %84 = vmatprep.subr.mxu0 0.0
  %85 = vmatpush1.msra.mxu0 0.0
  %86 = vmatprep.subr.mxu0 0.0
  %87 = vmatpush1.msra.mxu0 0.0
  %88 = vmatprep.subr.mxu0 0.0
  %89 = vmatpush1.msra.mxu0 0.0
  %90 = vmatprep.subr.mxu0 0.0
  %91 = vmatpush1.msra.mxu0 0.0
  %92 = vmatprep.subr.mxu0 0.0
  %93 = vmatpush1.msra.mxu0 0.0
  %94 = vmatprep.subr.mxu0 0.0
  %95 = vmatpush1.msra.mxu0 0.0
  %96 = vmatprep.subr.mxu0 0.0
  %97 = vmatpush1.msra.mxu0 %v45
  %98 = vmatprep.subr.mxu0 0.0
  %99 = vmatpush2.msra.mxu0 0.0
  %100 = vmatprep.subr.mxu0 0.0
  %101 = vmatpush2.msra.mxu0 0.0
  %102 = vmatprep.subr.mxu0 0.0
  %103 = vmatpush2.msra.mxu0 0.0
  %104 = vmatprep.subr.mxu0 0.0
  %105 = vmatpush2.msra.mxu0 0.0
  %106 = vmatprep.subr.mxu0 0.0
  %107 = vmatpush2.msra.mxu0 0.0
  %108 = vmatprep.subr.mxu0 0.0
  %109 = vmatpush2.msra.mxu0 0.0
  %110 = vmatprep.subr.mxu0 0.0
  %111 = vmatpush2.msra.mxu0 0.0
  %112 = vmatprep.subr.mxu0 0.0
  %113 = vmatpush2.msra.mxu0 0.0
  %114 = vmatprep.subr.mxu0 0.0
  %115 = vmatpush2.msra.mxu0 0.0
  %116 = vmatprep.subr.mxu0 0.0
  %117 = vmatpush2.msra.mxu0 0.0
  %118 = vmatprep.subr.mxu0 0.0
  %119 = vmatpush2.msra.mxu0 0.0
  %120 = vmatprep.subr.mxu0 0.0
  %121 = vmatpush2.msra.mxu0 0.0
  %122 = vmatprep.subr.mxu0 0.0
  %123 = vmatpush2.msra.mxu0 0.0
  %124 = vmatprep.subr.mxu0 0.0
  %125 = vmatpush2.msra.mxu0 0.0
  %126 = vmatprep.subr.mxu0 0.0
  %127 = vmatpush2.msra.mxu0 0.0
  %128 = vmatprep.subr.mxu0 0.0
  %129 = vmatpush2.msra.mxu0 0.0
  %130 = vmatprep.mubr.f32.mxu0 0.0
  %131 = vmatmul.mubr.f32.gmra.mxu0 %v55
  %v132 = vpop.f32.mrf.mxu0
  %v133 = vadd.f32 %v51, %v132
  %v134 = vpop.f32.mrf.mxu0
  %135 = vmatprep.mubr.f32.mxu0 0.0
  %136 = vmatmul.mubr.f32.gmra.mxu0 %v58
  %v137 = vpop.f32.mrf.mxu0
  %v138 = vadd.f32 %v51, %v137
  %v139 = vpop.f32.mrf.mxu0
  %140 = vmatprep.mubr.f32.mxu0 0.0
  %141 = vmatmul.mubr.f32.gmra.mxu0 %v61
  %v142 = vpop.f32.mrf.mxu0
  %v143 = vadd.f32 %v51, %v142
  %v144 = vpop.f32.mrf.mxu0
  %145 = vmatprep.mubr.f32.mxu0 0.0
  %146 = vmatmul.mubr.f32.gmra.mxu0 %v64
  %v147 = vpop.f32.mrf.mxu0
  %v148 = vadd.f32 %v51, %v147
  %v149 = vpop.f32.mrf.mxu0
  %150 = vdwg.mxu0
  %v151 = vmax.f32 %v133, 0.0
  %v152 = vmax.f32 %v138, 0.0
  %v153 = vmax.f32 %v143, 0.0
  %v154 = vmax.f32 %v148, 0.0
  %v155 = vld [vmem:[%s3] sm:$0xff]
  %v156 = vld [vmem:[%s3 + $0x8] sm:$0xff]
  %v157 = vld [vmem:[%s3 + $0x10] sm:$0xff]
  %v158 = vld [vmem:[%s3 + $0x18] sm:$0xff]
  %v159 = vld [vmem:[%s8] sm:$0x1]
  %v161 = vlaneseq
  %v162 = vshrl.u32 %v161, 7
  %v163 = vsub.s32 0, %v162
  %v164 = vrot.slane %v159, %v163
  %vm166 = vcmask 261120
  %v168 = vsel %vm166, %v151, 0
  %v171 = vsel %vm166, %v152, 0
  %v174 = vsel %vm166, %v153, 0
  %v177 = vsel %vm166, %v154, 0
  %179 = vmatprep.subr.mxu0 0.0
  %180 = vmatpush1.msra.mxu0 0.0
  %181 = vmatprep.subr.mxu0 0.0
  %182 = vmatpush1.msra.mxu0 0.0
  %183 = vmatprep.subr.mxu0 0.0
  %184 = vmatpush1.msra.mxu0 0.0
  %185 = vmatprep.subr.mxu0 0.0
  %186 = vmatpush1.msra.mxu0 0.0
  %187 = vmatprep.subr.mxu0 0.0
  %188 = vmatpush1.msra.mxu0 0.0
  %189 = vmatprep.subr.mxu0 0.0
  %190 = vmatpush1.msra.mxu0 0.0
  %191 = vmatprep.subr.mxu0 0.0
  %192 = vmatpush1.msra.mxu0 0.0
  %193 = vmatprep.subr.mxu0 0.0
  %194 = vmatpush1.msra.mxu0 0.0
  %195 = vmatprep.subr.mxu0 0.0
  %196 = vmatpush1.msra.mxu0 0.0
  %197 = vmatprep.subr.mxu0 0.0
  %198 = vmatpush1.msra.mxu0 0.0
  %199 = vmatprep.subr.mxu0 0.0
  %200 = vmatpush1.msra.mxu0 0.0
  %201 = vmatprep.subr.mxu0 0.0
  %202 = vmatpush1.msra.mxu0 0.0
  %203 = vmatprep.subr.mxu0 0.0
  %204 = vmatpush1.msra.mxu0 %v158
  %205 = vmatprep.subr.mxu0 0.0
  %206 = vmatpush1.msra.mxu0 %v157
  %207 = vmatprep.subr.mxu0 0.0
  %208 = vmatpush1.msra.mxu0 %v156
  %209 = vmatprep.subr.mxu0 0.0
  %210 = vmatpush1.msra.mxu0 %v155
  %211 = vmatprep.subr.mxu0 0.0
  %212 = vmatpush2.msra.mxu0 0.0
  %213 = vmatprep.subr.mxu0 0.0
  %214 = vmatpush2.msra.mxu0 0.0
  %215 = vmatprep.subr.mxu0 0.0
  %216 = vmatpush2.msra.mxu0 0.0
  %217 = vmatprep.subr.mxu0 0.0
  %218 = vmatpush2.msra.mxu0 0.0
  %219 = vmatprep.subr.mxu0 0.0
  %220 = vmatpush2.msra.mxu0 0.0
  %221 = vmatprep.subr.mxu0 0.0
  %222 = vmatpush2.msra.mxu0 0.0
  %223 = vmatprep.subr.mxu0 0.0
  %224 = vmatpush2.msra.mxu0 0.0
  %225 = vmatprep.subr.mxu0 0.0
  %226 = vmatpush2.msra.mxu0 0.0
  %227 = vmatprep.subr.mxu0 0.0
  %228 = vmatpush2.msra.mxu0 0.0
  %229 = vmatprep.subr.mxu0 0.0
  %230 = vmatpush2.msra.mxu0 0.0
  %231 = vmatprep.subr.mxu0 0.0
  %232 = vmatpush2.msra.mxu0 0.0
  %233 = vmatprep.subr.mxu0 0.0
  %234 = vmatpush2.msra.mxu0 0.0
  %235 = vmatprep.subr.mxu0 0.0
  %236 = vmatpush2.msra.mxu0 0.0
  %237 = vmatprep.subr.mxu0 0.0
  %238 = vmatpush2.msra.mxu0 0.0
  %239 = vmatprep.subr.mxu0 0.0
  %240 = vmatpush2.msra.mxu0 0.0
  %241 = vmatprep.subr.mxu0 0.0
  %242 = vmatpush2.msra.mxu0 0.0
  %243 = vmatprep.mubr.f32.mxu0 0.0
  %244 = vmatmul.mubr.f32.gmra.mxu0 %v168
  %v245 = vpop.f32.mrf.mxu0
  %v246 = vadd.f32 %v164, %v245
  %v247 = vpop.f32.mrf.mxu0
  %248 = vmatprep.mubr.f32.mxu0 0.0
  %249 = vmatmul.mubr.f32.gmra.mxu0 %v171
  %v250 = vpop.f32.mrf.mxu0
  %v251 = vadd.f32 %v164, %v250
  %v252 = vpop.f32.mrf.mxu0
  %253 = vmatprep.mubr.f32.mxu0 0.0
  %254 = vmatmul.mubr.f32.gmra.mxu0 %v174
  %v255 = vpop.f32.mrf.mxu0
  %v256 = vadd.f32 %v164, %v255
  %v257 = vpop.f32.mrf.mxu0
  %258 = vmatprep.mubr.f32.mxu0 0.0
  %259 = vmatmul.mubr.f32.gmra.mxu0 %v177
  %v260 = vpop.f32.mrf.mxu0
  %v261 = vadd.f32 %v164, %v260
  %v262 = vpop.f32.mrf.mxu0
  %263 = vdwg.mxu0
  %v264 = vmax.f32 %v246, 0.0
  %v265 = vmax.f32 %v251, 0.0
  %v266 = vmax.f32 %v256, 0.0
  %v267 = vmax.f32 %v261, 0.0
  %v268 = vld [vmem:[%s4] sm:$0xff]
  %v269 = vld [vmem:[%s4 + $0x8] sm:$0xff]
  %v270 = vld [vmem:[%s4 + $0x10] sm:$0xff]
  %v271 = vld [vmem:[%s4 + $0x18] sm:$0xff]
  %v272 = vld [vmem:[%s4 + $0x20] sm:$0xff]
  %v273 = vld [vmem:[%s4 + $0x28] sm:$0xff]
  %v274 = vld [vmem:[%s4 + $0x30] sm:$0xff]
  %v275 = vld [vmem:[%s4 + $0x38] sm:$0xff]
  %v276 = vld [vmem:[%s4 + $0x40] sm:$0xff]
  %v277 = vld [vmem:[%s4 + $0x48] sm:$0xff]
  %v278 = vld [vmem:[%s4 + $0x50] sm:$0xff]
  %v279 = vld [vmem:[%s4 + $0x58] sm:$0xff]
  %v280 = vld [vmem:[%s4 + $0x60] sm:$0xff]
  %v281 = vld [vmem:[%s4 + $0x68] sm:$0xff]
  %v282 = vld [vmem:[%s4 + $0x70] sm:$0xff]
  %v283 = vld [vmem:[%s4 + $0x78] sm:$0xff]
  %v284 = vld [vmem:[%s4 + $0x80] sm:$0xff]
  %v285 = vld [vmem:[%s4 + $0x88] sm:$0xff]
  %v286 = vld [vmem:[%s4 + $0x90] sm:$0xff]
  %v287 = vld [vmem:[%s4 + $0x98] sm:$0xff]
  %v288 = vld [vmem:[%s4 + $0xa0] sm:$0xff]
  %v289 = vld [vmem:[%s4 + $0xa8] sm:$0xff]
  %v290 = vld [vmem:[%s4 + $0xb0] sm:$0xff]
  %v291 = vld [vmem:[%s4 + $0xb8] sm:$0xff]
  %v292 = vld [vmem:[%s4 + $0xc0] sm:$0xff]
  %v293 = vld [vmem:[%s4 + $0xc8] sm:$0xff]
  %v294 = vld [vmem:[%s4 + $0xd0] sm:$0xff]
  %v295 = vld [vmem:[%s4 + $0xd8] sm:$0xff]
  %v296 = vld [vmem:[%s4 + $0xe0] sm:$0xff]
  %v297 = vld [vmem:[%s4 + $0xe8] sm:$0xff]
  %v298 = vld [vmem:[%s4 + $0xf0] sm:$0xff]
  %v299 = vld [vmem:[%s4 + $0xf8] sm:$0xff]
  %v300 = vld [vmem:[%s9] sm:$0x3]
  %v302 = vlaneseq
  %v303 = vshrl.u32 %v302, 7
  %v304 = vsub.s32 0, %v303
  %v305 = vrot.slane %v300, %v304
  %v306 = vlaneseq
  %v307 = vshrl.u32 %v306, 7
  %v308 = vsub.s32 1, %v307
  %v309 = vrot.slane %v300, %v308
  %312 = vmatprep.subr.mxu0 %v299
  %313 = vmatpush1.msra.mxu0 %v298
  %314 = vmatprep.subr.mxu0 %v297
  %315 = vmatpush1.msra.mxu0 %v296
  %316 = vmatprep.subr.mxu0 %v295
  %317 = vmatpush1.msra.mxu0 %v294
  %318 = vmatprep.subr.mxu0 %v293
  %319 = vmatpush1.msra.mxu0 %v292
  %320 = vmatprep.subr.mxu0 %v291
  %321 = vmatpush1.msra.mxu0 %v290
  %322 = vmatprep.subr.mxu0 %v289
  %323 = vmatpush1.msra.mxu0 %v288
  %324 = vmatprep.subr.mxu0 %v287
  %325 = vmatpush1.msra.mxu0 %v286
  %326 = vmatprep.subr.mxu0 %v285
  %327 = vmatpush1.msra.mxu0 %v284
  %328 = vmatprep.subr.mxu0 %v283
  %329 = vmatpush1.msra.mxu0 %v282
  %330 = vmatprep.subr.mxu0 %v281
  %331 = vmatpush1.msra.mxu0 %v280
  %332 = vmatprep.subr.mxu0 %v279
  %333 = vmatpush1.msra.mxu0 %v278
  %334 = vmatprep.subr.mxu0 %v277
  %335 = vmatpush1.msra.mxu0 %v276
  %336 = vmatprep.subr.mxu0 %v275
  %337 = vmatpush1.msra.mxu0 %v274
  %338 = vmatprep.subr.mxu0 %v273
  %339 = vmatpush1.msra.mxu0 %v272
  %340 = vmatprep.subr.mxu0 %v271
  %341 = vmatpush1.msra.mxu0 %v270
  %342 = vmatprep.subr.mxu0 %v269
  %343 = vmatpush1.msra.mxu0 %v268
  %344 = vmatprep.subr.mxu0 0.0
  %345 = vmatpush2.msra.mxu0 0.0
  %346 = vmatprep.subr.mxu0 0.0
  %347 = vmatpush2.msra.mxu0 0.0
  %348 = vmatprep.subr.mxu0 0.0
  %349 = vmatpush2.msra.mxu0 0.0
  %350 = vmatprep.subr.mxu0 0.0
  %351 = vmatpush2.msra.mxu0 0.0
  %352 = vmatprep.subr.mxu0 0.0
  %353 = vmatpush2.msra.mxu0 0.0
  %354 = vmatprep.subr.mxu0 0.0
  %355 = vmatpush2.msra.mxu0 0.0
  %356 = vmatprep.subr.mxu0 0.0
  %357 = vmatpush2.msra.mxu0 0.0
  %358 = vmatprep.subr.mxu0 0.0
  %359 = vmatpush2.msra.mxu0 0.0
  %360 = vmatprep.subr.mxu0 0.0
  %361 = vmatpush2.msra.mxu0 0.0
  %362 = vmatprep.subr.mxu0 0.0
  %363 = vmatpush2.msra.mxu0 0.0
  %364 = vmatprep.subr.mxu0 0.0
  %365 = vmatpush2.msra.mxu0 0.0
  %366 = vmatprep.subr.mxu0 0.0
  %367 = vmatpush2.msra.mxu0 0.0
  %368 = vmatprep.subr.mxu0 0.0
  %369 = vmatpush2.msra.mxu0 0.0
  %370 = vmatprep.subr.mxu0 0.0
  %371 = vmatpush2.msra.mxu0 0.0
  %372 = vmatprep.subr.mxu0 0.0
  %373 = vmatpush2.msra.mxu0 0.0
  %374 = vmatprep.subr.mxu0 0.0
  %375 = vmatpush2.msra.mxu0 0.0
  %376 = vmatprep.mubr.f32.mxu0 0.0
  %377 = vmatmul.mubr.f32.gmra.mxu0 %v264
  %v378 = vpop.f32.mrf.mxu0
  %v379 = vadd.f32 %v305, %v378
  %v380 = vpop.f32.mrf.mxu0
  %v381 = vadd.f32 %v309, %v380
  %382 = vmatprep.mubr.f32.mxu0 0.0
  %383 = vmatmul.mubr.f32.gmra.mxu0 %v265
  %v384 = vpop.f32.mrf.mxu0
  %v385 = vadd.f32 %v305, %v384
  %v386 = vpop.f32.mrf.mxu0
  %v387 = vadd.f32 %v309, %v386
  %388 = vmatprep.mubr.f32.mxu0 0.0
  %389 = vmatmul.mubr.f32.gmra.mxu0 %v266
  %v390 = vpop.f32.mrf.mxu0
  %v391 = vadd.f32 %v305, %v390
  %v392 = vpop.f32.mrf.mxu0
  %v393 = vadd.f32 %v309, %v392
  %394 = vmatprep.mubr.f32.mxu0 0.0
  %395 = vmatmul.mubr.f32.gmra.mxu0 %v267
  %v396 = vpop.f32.mrf.mxu0
  %v397 = vadd.f32 %v305, %v396
  %v398 = vpop.f32.mrf.mxu0
  %v399 = vadd.f32 %v309, %v398
  %400 = vdwg.mxu0
  %v401 = vmax.f32 %v379, 0.0
  %v402 = vmax.f32 %v381, 0.0
  %v403 = vmax.f32 %v385, 0.0
  %v404 = vmax.f32 %v387, 0.0
  %v405 = vmax.f32 %v391, 0.0
  %v406 = vmax.f32 %v393, 0.0
  %v407 = vmax.f32 %v397, 0.0
  %v408 = vmax.f32 %v399, 0.0
  %v409 = vld [vmem:[%s5] sm:$0xff]
  %v410 = vld [vmem:[%s5 + $0x8] sm:$0xff]
  %v411 = vld [vmem:[%s5 + $0x10] sm:$0xff]
  %v412 = vld [vmem:[%s5 + $0x18] sm:$0xff]
  %v413 = vld [vmem:[%s5 + $0x20] sm:$0xff]
  %v414 = vld [vmem:[%s5 + $0x28] sm:$0xff]
  %v415 = vld [vmem:[%s5 + $0x30] sm:$0xff]
  %v416 = vld [vmem:[%s5 + $0x38] sm:$0xff]
  %v417 = vld [vmem:[%s5 + $0x40] sm:$0xff]
  %v418 = vld [vmem:[%s5 + $0x48] sm:$0xff]
  %v419 = vld [vmem:[%s5 + $0x50] sm:$0xff]
  %v420 = vld [vmem:[%s5 + $0x58] sm:$0xff]
  %v421 = vld [vmem:[%s5 + $0x60] sm:$0xff]
  %v422 = vld [vmem:[%s5 + $0x68] sm:$0xff]
  %v423 = vld [vmem:[%s5 + $0x70] sm:$0xff]
  %v424 = vld [vmem:[%s5 + $0x78] sm:$0xff]
  %v425 = vld [vmem:[%s5 + $0x80] sm:$0xff]
  %v426 = vld [vmem:[%s5 + $0x88] sm:$0xff]
  %v427 = vld [vmem:[%s5 + $0x90] sm:$0xff]
  %v428 = vld [vmem:[%s5 + $0x98] sm:$0xff]
  %v429 = vld [vmem:[%s5 + $0xa0] sm:$0xff]
  %v430 = vld [vmem:[%s5 + $0xa8] sm:$0xff]
  %v431 = vld [vmem:[%s5 + $0xb0] sm:$0xff]
  %v432 = vld [vmem:[%s5 + $0xb8] sm:$0xff]
  %v433 = vld [vmem:[%s5 + $0xc0] sm:$0xff]
  %v434 = vld [vmem:[%s5 + $0xc8] sm:$0xff]
  %v435 = vld [vmem:[%s5 + $0xd0] sm:$0xff]
  %v436 = vld [vmem:[%s5 + $0xd8] sm:$0xff]
  %v437 = vld [vmem:[%s5 + $0xe0] sm:$0xff]
  %v438 = vld [vmem:[%s5 + $0xe8] sm:$0xff]
  %v439 = vld [vmem:[%s5 + $0xf0] sm:$0xff]
  %v440 = vld [vmem:[%s5 + $0xf8] sm:$0xff]
  %v441 = vld [vmem:[%s5 + $0x100] sm:$0xff]
  %v442 = vld [vmem:[%s5 + $0x108] sm:$0xff]
  %v443 = vld [vmem:[%s5 + $0x110] sm:$0xff]
  %v444 = vld [vmem:[%s5 + $0x118] sm:$0xff]
  %v445 = vld [vmem:[%s5 + $0x120] sm:$0xff]
  %v446 = vld [vmem:[%s5 + $0x128] sm:$0xff]
  %v447 = vld [vmem:[%s5 + $0x130] sm:$0xff]
  %v448 = vld [vmem:[%s5 + $0x138] sm:$0xff]
  %v449 = vld [vmem:[%s5 + $0x140] sm:$0xff]
  %v450 = vld [vmem:[%s5 + $0x148] sm:$0xff]
  %v451 = vld [vmem:[%s5 + $0x150] sm:$0xff]
  %v452 = vld [vmem:[%s5 + $0x158] sm:$0xff]
  %v453 = vld [vmem:[%s5 + $0x160] sm:$0xff]
  %v454 = vld [vmem:[%s5 + $0x168] sm:$0xff]
  %v455 = vld [vmem:[%s5 + $0x170] sm:$0xff]
  %v456 = vld [vmem:[%s5 + $0x178] sm:$0xff]
  %v457 = vld [vmem:[%s5 + $0x180] sm:$0xff]
  %v458 = vld [vmem:[%s5 + $0x188] sm:$0xff]
  %v459 = vld [vmem:[%s5 + $0x190] sm:$0xff]
  %v460 = vld [vmem:[%s5 + $0x198] sm:$0xff]
  %v461 = vld [vmem:[%s5 + $0x1a0] sm:$0xff]
  %v462 = vld [vmem:[%s5 + $0x1a8] sm:$0xff]
  %v463 = vld [vmem:[%s5 + $0x1b0] sm:$0xff]
  %v464 = vld [vmem:[%s5 + $0x1b8] sm:$0xff]
  %v465 = vld [vmem:[%s5 + $0x1c0] sm:$0xff]
  %v466 = vld [vmem:[%s5 + $0x1c8] sm:$0xff]
  %v467 = vld [vmem:[%s5 + $0x1d0] sm:$0xff]
  %v468 = vld [vmem:[%s5 + $0x1d8] sm:$0xff]
  %v469 = vld [vmem:[%s5 + $0x1e0] sm:$0xff]
  %v470 = vld [vmem:[%s5 + $0x1e8] sm:$0xff]
  %v471 = vld [vmem:[%s5 + $0x1f0] sm:$0xff]
  %v472 = vld [vmem:[%s5 + $0x1f8] sm:$0xff]
  %v473 = vld [vmem:[%s5 + $0x200] sm:$0xff]
  %v474 = vld [vmem:[%s5 + $0x208] sm:$0xff]
  %v475 = vld [vmem:[%s5 + $0x210] sm:$0xff]
  %v476 = vld [vmem:[%s5 + $0x218] sm:$0xff]
  %v477 = vld [vmem:[%s5 + $0x220] sm:$0xff]
  %v478 = vld [vmem:[%s5 + $0x228] sm:$0xff]
  %v479 = vld [vmem:[%s5 + $0x230] sm:$0xff]
  %v480 = vld [vmem:[%s5 + $0x238] sm:$0xff]
  %v481 = vld [vmem:[%s5 + $0x240] sm:$0xff]
  %v482 = vld [vmem:[%s5 + $0x248] sm:$0xff]
  %v483 = vld [vmem:[%s5 + $0x250] sm:$0xff]
  %v484 = vld [vmem:[%s5 + $0x258] sm:$0xff]
  %v485 = vld [vmem:[%s5 + $0x260] sm:$0xff]
  %v486 = vld [vmem:[%s5 + $0x268] sm:$0xff]
  %v487 = vld [vmem:[%s5 + $0x270] sm:$0xff]
  %v488 = vld [vmem:[%s5 + $0x278] sm:$0xff]
  %v489 = vld [vmem:[%s5 + $0x280] sm:$0xff]
  %v490 = vld [vmem:[%s5 + $0x288] sm:$0xff]
  %v491 = vld [vmem:[%s5 + $0x290] sm:$0xff]
  %v492 = vld [vmem:[%s5 + $0x298] sm:$0xff]
  %v493 = vld [vmem:[%s5 + $0x2a0] sm:$0xff]
  %v494 = vld [vmem:[%s5 + $0x2a8] sm:$0xff]
  %v495 = vld [vmem:[%s5 + $0x2b0] sm:$0xff]
  %v496 = vld [vmem:[%s5 + $0x2b8] sm:$0xff]
  %v497 = vld [vmem:[%s5 + $0x2c0] sm:$0xff]
  %v498 = vld [vmem:[%s5 + $0x2c8] sm:$0xff]
  %v499 = vld [vmem:[%s5 + $0x2d0] sm:$0xff]
  %v500 = vld [vmem:[%s5 + $0x2d8] sm:$0xff]
  %v501 = vld [vmem:[%s5 + $0x2e0] sm:$0xff]
  %v502 = vld [vmem:[%s5 + $0x2e8] sm:$0xff]
  %v503 = vld [vmem:[%s5 + $0x2f0] sm:$0xff]
  %v504 = vld [vmem:[%s5 + $0x2f8] sm:$0xff]
  %v505 = vld [vmem:[%s5 + $0x300] sm:$0xff]
  %v506 = vld [vmem:[%s5 + $0x308] sm:$0xff]
  %v507 = vld [vmem:[%s5 + $0x310] sm:$0xff]
  %v508 = vld [vmem:[%s5 + $0x318] sm:$0xff]
  %v509 = vld [vmem:[%s5 + $0x320] sm:$0xff]
  %v510 = vld [vmem:[%s5 + $0x328] sm:$0xff]
  %v511 = vld [vmem:[%s5 + $0x330] sm:$0xff]
  %v512 = vld [vmem:[%s5 + $0x338] sm:$0xff]
  %v513 = vld [vmem:[%s5 + $0x340] sm:$0xff]
  %v514 = vld [vmem:[%s5 + $0x348] sm:$0xff]
  %v515 = vld [vmem:[%s5 + $0x350] sm:$0xff]
  %v516 = vld [vmem:[%s5 + $0x358] sm:$0xff]
  %v517 = vld [vmem:[%s5 + $0x360] sm:$0xff]
  %v518 = vld [vmem:[%s5 + $0x368] sm:$0xff]
  %v519 = vld [vmem:[%s5 + $0x370] sm:$0xff]
  %v520 = vld [vmem:[%s5 + $0x378] sm:$0xff]
  %v521 = vld [vmem:[%s5 + $0x380] sm:$0xff]
  %v522 = vld [vmem:[%s5 + $0x388] sm:$0xff]
  %v523 = vld [vmem:[%s5 + $0x390] sm:$0xff]
  %v524 = vld [vmem:[%s5 + $0x398] sm:$0xff]
  %v525 = vld [vmem:[%s5 + $0x3a0] sm:$0xff]
  %v526 = vld [vmem:[%s5 + $0x3a8] sm:$0xff]
  %v527 = vld [vmem:[%s5 + $0x3b0] sm:$0xff]
  %v528 = vld [vmem:[%s5 + $0x3b8] sm:$0xff]
  %v529 = vld [vmem:[%s5 + $0x3c0] sm:$0xff]
  %v530 = vld [vmem:[%s5 + $0x3c8] sm:$0xff]
  %v531 = vld [vmem:[%s5 + $0x3d0] sm:$0xff]
  %v532 = vld [vmem:[%s5 + $0x3d8] sm:$0xff]
  %v533 = vld [vmem:[%s5 + $0x3e0] sm:$0xff]
  %v534 = vld [vmem:[%s5 + $0x3e8] sm:$0xff]
  %v535 = vld [vmem:[%s5 + $0x3f0] sm:$0xff]
  %v536 = vld [vmem:[%s5 + $0x3f8] sm:$0xff]
  %v537 = vld [vmem:[%s5 + $0x400] sm:$0xff]
  %v538 = vld [vmem:[%s5 + $0x408] sm:$0xff]
  %v539 = vld [vmem:[%s5 + $0x410] sm:$0xff]
  %v540 = vld [vmem:[%s5 + $0x418] sm:$0xff]
  %v541 = vld [vmem:[%s5 + $0x420] sm:$0xff]
  %v542 = vld [vmem:[%s5 + $0x428] sm:$0xff]
  %v543 = vld [vmem:[%s5 + $0x430] sm:$0xff]
  %v544 = vld [vmem:[%s5 + $0x438] sm:$0xff]
  %v545 = vld [vmem:[%s5 + $0x440] sm:$0xff]
  %v546 = vld [vmem:[%s5 + $0x448] sm:$0xff]
  %v547 = vld [vmem:[%s5 + $0x450] sm:$0xff]
  %v548 = vld [vmem:[%s5 + $0x458] sm:$0xff]
  %v549 = vld [vmem:[%s5 + $0x460] sm:$0xff]
  %v550 = vld [vmem:[%s5 + $0x468] sm:$0xff]
  %v551 = vld [vmem:[%s5 + $0x470] sm:$0xff]
  %v552 = vld [vmem:[%s5 + $0x478] sm:$0xff]
  %v553 = vld [vmem:[%s5 + $0x480] sm:$0xff]
  %v554 = vld [vmem:[%s5 + $0x488] sm:$0xff]
  %v555 = vld [vmem:[%s5 + $0x490] sm:$0xff]
  %v556 = vld [vmem:[%s5 + $0x498] sm:$0xff]
  %v557 = vld [vmem:[%s5 + $0x4a0] sm:$0xff]
  %v558 = vld [vmem:[%s5 + $0x4a8] sm:$0xff]
  %v559 = vld [vmem:[%s5 + $0x4b0] sm:$0xff]
  %v560 = vld [vmem:[%s5 + $0x4b8] sm:$0xff]
  %v561 = vld [vmem:[%s5 + $0x4c0] sm:$0xff]
  %v562 = vld [vmem:[%s5 + $0x4c8] sm:$0xff]
  %v563 = vld [vmem:[%s5 + $0x4d0] sm:$0xff]
  %v564 = vld [vmem:[%s5 + $0x4d8] sm:$0xff]
  %v565 = vld [vmem:[%s5 + $0x4e0] sm:$0xff]
  %v566 = vld [vmem:[%s5 + $0x4e8] sm:$0xff]
  %v567 = vld [vmem:[%s5 + $0x4f0] sm:$0xff]
  %v568 = vld [vmem:[%s5 + $0x4f8] sm:$0xff]
  %v569 = vld [vmem:[%s5 + $0x500] sm:$0xff]
  %v570 = vld [vmem:[%s5 + $0x508] sm:$0xff]
  %v571 = vld [vmem:[%s5 + $0x510] sm:$0xff]
  %v572 = vld [vmem:[%s5 + $0x518] sm:$0xff]
  %v573 = vld [vmem:[%s5 + $0x520] sm:$0xff]
  %v574 = vld [vmem:[%s5 + $0x528] sm:$0xff]
  %v575 = vld [vmem:[%s5 + $0x530] sm:$0xff]
  %v576 = vld [vmem:[%s5 + $0x538] sm:$0xff]
  %v577 = vld [vmem:[%s5 + $0x540] sm:$0xff]
  %v578 = vld [vmem:[%s5 + $0x548] sm:$0xff]
  %v579 = vld [vmem:[%s5 + $0x550] sm:$0xff]
  %v580 = vld [vmem:[%s5 + $0x558] sm:$0xff]
  %v581 = vld [vmem:[%s5 + $0x560] sm:$0xff]
  %v582 = vld [vmem:[%s5 + $0x568] sm:$0xff]
  %v583 = vld [vmem:[%s5 + $0x570] sm:$0xff]
  %v584 = vld [vmem:[%s5 + $0x578] sm:$0xff]
  %v585 = vld [vmem:[%s5 + $0x580] sm:$0xff]
  %v586 = vld [vmem:[%s5 + $0x588] sm:$0xff]
  %v587 = vld [vmem:[%s5 + $0x590] sm:$0xff]
  %v588 = vld [vmem:[%s5 + $0x598] sm:$0xff]
  %v589 = vld [vmem:[%s5 + $0x5a0] sm:$0xff]
  %v590 = vld [vmem:[%s5 + $0x5a8] sm:$0xff]
  %v591 = vld [vmem:[%s5 + $0x5b0] sm:$0xff]
  %v592 = vld [vmem:[%s5 + $0x5b8] sm:$0xff]
  %v593 = vld [vmem:[%s5 + $0x5c0] sm:$0xff]
  %v594 = vld [vmem:[%s5 + $0x5c8] sm:$0xff]
  %v595 = vld [vmem:[%s5 + $0x5d0] sm:$0xff]
  %v596 = vld [vmem:[%s5 + $0x5d8] sm:$0xff]
  %v597 = vld [vmem:[%s5 + $0x5e0] sm:$0xff]
  %v598 = vld [vmem:[%s5 + $0x5e8] sm:$0xff]
  %v599 = vld [vmem:[%s5 + $0x5f0] sm:$0xff]
  %v600 = vld [vmem:[%s5 + $0x5f8] sm:$0xff]
  %v601 = vld [vmem:[%s5 + $0x600] sm:$0xff]
  %v602 = vld [vmem:[%s5 + $0x608] sm:$0xff]
  %v603 = vld [vmem:[%s5 + $0x610] sm:$0xff]
  %v604 = vld [vmem:[%s5 + $0x618] sm:$0xff]
  %v605 = vld [vmem:[%s5 + $0x620] sm:$0xff]
  %v606 = vld [vmem:[%s5 + $0x628] sm:$0xff]
  %v607 = vld [vmem:[%s5 + $0x630] sm:$0xff]
  %v608 = vld [vmem:[%s5 + $0x638] sm:$0xff]
  %v609 = vld [vmem:[%s5 + $0x640] sm:$0xff]
  %v610 = vld [vmem:[%s5 + $0x648] sm:$0xff]
  %v611 = vld [vmem:[%s5 + $0x650] sm:$0xff]
  %v612 = vld [vmem:[%s5 + $0x658] sm:$0xff]
  %v613 = vld [vmem:[%s5 + $0x660] sm:$0xff]
  %v614 = vld [vmem:[%s5 + $0x668] sm:$0xff]
  %v615 = vld [vmem:[%s5 + $0x670] sm:$0xff]
  %v616 = vld [vmem:[%s5 + $0x678] sm:$0xff]
  %v617 = vld [vmem:[%s5 + $0x680] sm:$0xff]
  %v618 = vld [vmem:[%s5 + $0x688] sm:$0xff]
  %v619 = vld [vmem:[%s5 + $0x690] sm:$0xff]
  %v620 = vld [vmem:[%s5 + $0x698] sm:$0xff]
  %v621 = vld [vmem:[%s5 + $0x6a0] sm:$0xff]
  %v622 = vld [vmem:[%s5 + $0x6a8] sm:$0xff]
  %v623 = vld [vmem:[%s5 + $0x6b0] sm:$0xff]
  %v624 = vld [vmem:[%s5 + $0x6b8] sm:$0xff]
  %v625 = vld [vmem:[%s5 + $0x6c0] sm:$0xff]
  %v626 = vld [vmem:[%s5 + $0x6c8] sm:$0xff]
  %v627 = vld [vmem:[%s5 + $0x6d0] sm:$0xff]
  %v628 = vld [vmem:[%s5 + $0x6d8] sm:$0xff]
  %v629 = vld [vmem:[%s5 + $0x6e0] sm:$0xff]
  %v630 = vld [vmem:[%s5 + $0x6e8] sm:$0xff]
  %v631 = vld [vmem:[%s5 + $0x6f0] sm:$0xff]
  %v632 = vld [vmem:[%s5 + $0x6f8] sm:$0xff]
  %v633 = vld [vmem:[%s5 + $0x700] sm:$0xff]
  %v634 = vld [vmem:[%s5 + $0x708] sm:$0xff]
  %v635 = vld [vmem:[%s5 + $0x710] sm:$0xff]
  %v636 = vld [vmem:[%s5 + $0x718] sm:$0xff]
  %v637 = vld [vmem:[%s5 + $0x720] sm:$0xff]
  %v638 = vld [vmem:[%s5 + $0x728] sm:$0xff]
  %v639 = vld [vmem:[%s5 + $0x730] sm:$0xff]
  %v640 = vld [vmem:[%s5 + $0x738] sm:$0xff]
  %v641 = vld [vmem:[%s5 + $0x740] sm:$0xff]
  %v642 = vld [vmem:[%s5 + $0x748] sm:$0xff]
  %v643 = vld [vmem:[%s5 + $0x750] sm:$0xff]
  %v644 = vld [vmem:[%s5 + $0x758] sm:$0xff]
  %v645 = vld [vmem:[%s5 + $0x760] sm:$0xff]
  %v646 = vld [vmem:[%s5 + $0x768] sm:$0xff]
  %v647 = vld [vmem:[%s5 + $0x770] sm:$0xff]
  %v648 = vld [vmem:[%s5 + $0x778] sm:$0xff]
  %v649 = vld [vmem:[%s5 + $0x780] sm:$0xff]
  %v650 = vld [vmem:[%s5 + $0x788] sm:$0xff]
  %v651 = vld [vmem:[%s5 + $0x790] sm:$0xff]
  %v652 = vld [vmem:[%s5 + $0x798] sm:$0xff]
  %v653 = vld [vmem:[%s5 + $0x7a0] sm:$0xff]
  %v654 = vld [vmem:[%s5 + $0x7a8] sm:$0xff]
  %v655 = vld [vmem:[%s5 + $0x7b0] sm:$0xff]
  %v656 = vld [vmem:[%s5 + $0x7b8] sm:$0xff]
  %v657 = vld [vmem:[%s5 + $0x7c0] sm:$0xff]
  %v658 = vld [vmem:[%s5 + $0x7c8] sm:$0xff]
  %v659 = vld [vmem:[%s5 + $0x7d0] sm:$0xff]
  %v660 = vld [vmem:[%s5 + $0x7d8] sm:$0xff]
  %v661 = vld [vmem:[%s5 + $0x7e0] sm:$0xff]
  %v662 = vld [vmem:[%s5 + $0x7e8] sm:$0xff]
  %v663 = vld [vmem:[%s5 + $0x7f0] sm:$0xff]
  %v664 = vld [vmem:[%s5 + $0x7f8] sm:$0xff]
  %v665 = vld [vmem:[%s10] sm:$0xff]
  %v667 = vlaneseq
  %v668 = vshrl.u32 %v667, 7
  %v669 = vsub.s32 0, %v668
  %v670 = vrot.slane %v665, %v669
  %v671 = vlaneseq
  %v672 = vshrl.u32 %v671, 7
  %v673 = vsub.s32 1, %v672
  %v674 = vrot.slane %v665, %v673
  %v675 = vlaneseq
  %v676 = vshrl.u32 %v675, 7
  %v677 = vsub.s32 2, %v676
  %v678 = vrot.slane %v665, %v677
  %v679 = vlaneseq
  %v680 = vshrl.u32 %v679, 7
  %v681 = vsub.s32 3, %v680
  %v682 = vrot.slane %v665, %v681
  %v683 = vlaneseq
  %v684 = vshrl.u32 %v683, 7
  %v685 = vsub.s32 4, %v684
  %v686 = vrot.slane %v665, %v685
  %v687 = vlaneseq
  %v688 = vshrl.u32 %v687, 7
  %v689 = vsub.s32 5, %v688
  %v690 = vrot.slane %v665, %v689
  %v691 = vlaneseq
  %v692 = vshrl.u32 %v691, 7
  %v693 = vsub.s32 6, %v692
  %v694 = vrot.slane %v665, %v693
  %v695 = vlaneseq
  %v696 = vshrl.u32 %v695, 7
  %v697 = vsub.s32 7, %v696
  %v698 = vrot.slane %v665, %v697
  %707 = vmatprep.subr.mxu0 %v530
  %708 = vmatpush1.msra.mxu0 %v529
  %709 = vmatprep.subr.mxu0 %v522
  %710 = vmatpush1.msra.mxu0 %v521
  %711 = vmatprep.subr.mxu0 %v514
  %712 = vmatpush1.msra.mxu0 %v513
  %713 = vmatprep.subr.mxu0 %v506
  %714 = vmatpush1.msra.mxu0 %v505
  %715 = vmatprep.subr.mxu0 %v498
  %716 = vmatpush1.msra.mxu0 %v497
  %717 = vmatprep.subr.mxu0 %v490
  %718 = vmatpush1.msra.mxu0 %v489
  %719 = vmatprep.subr.mxu0 %v482
  %720 = vmatpush1.msra.mxu0 %v481
  %721 = vmatprep.subr.mxu0 %v474
  %722 = vmatpush1.msra.mxu0 %v473
  %723 = vmatprep.subr.mxu0 %v466
  %724 = vmatpush1.msra.mxu0 %v465
  %725 = vmatprep.subr.mxu0 %v458
  %726 = vmatpush1.msra.mxu0 %v457
  %727 = vmatprep.subr.mxu0 %v450
  %728 = vmatpush1.msra.mxu0 %v449
  %729 = vmatprep.subr.mxu0 %v442
  %730 = vmatpush1.msra.mxu0 %v441
  %731 = vmatprep.subr.mxu0 %v434
  %732 = vmatpush1.msra.mxu0 %v433
  %733 = vmatprep.subr.mxu0 %v426
  %734 = vmatpush1.msra.mxu0 %v425
  %735 = vmatprep.subr.mxu0 %v418
  %736 = vmatpush1.msra.mxu0 %v417
  %737 = vmatprep.subr.mxu0 %v410
  %738 = vmatpush1.msra.mxu0 %v409
  %739 = vmatprep.subr.mxu0 %v658
  %740 = vmatpush2.msra.mxu0 %v657
  %741 = vmatprep.subr.mxu0 %v650
  %742 = vmatpush2.msra.mxu0 %v649
  %743 = vmatprep.subr.mxu0 %v642
  %744 = vmatpush2.msra.mxu0 %v641
  %745 = vmatprep.subr.mxu0 %v634
  %746 = vmatpush2.msra.mxu0 %v633
  %747 = vmatprep.subr.mxu0 %v626
  %748 = vmatpush2.msra.mxu0 %v625
  %749 = vmatprep.subr.mxu0 %v618
  %750 = vmatpush2.msra.mxu0 %v617
  %751 = vmatprep.subr.mxu0 %v610
  %752 = vmatpush2.msra.mxu0 %v609
  %753 = vmatprep.subr.mxu0 %v602
  %754 = vmatpush2.msra.mxu0 %v601
  %755 = vmatprep.subr.mxu0 %v594
  %756 = vmatpush2.msra.mxu0 %v593
  %757 = vmatprep.subr.mxu0 %v586
  %758 = vmatpush2.msra.mxu0 %v585
  %759 = vmatprep.subr.mxu0 %v578
  %760 = vmatpush2.msra.mxu0 %v577
  %761 = vmatprep.subr.mxu0 %v570
  %762 = vmatpush2.msra.mxu0 %v569
  %763 = vmatprep.subr.mxu0 %v562
  %764 = vmatpush2.msra.mxu0 %v561
  %765 = vmatprep.subr.mxu0 %v554
  %766 = vmatpush2.msra.mxu0 %v553
  %767 = vmatprep.subr.mxu0 %v546
  %768 = vmatpush2.msra.mxu0 %v545
  %769 = vmatprep.subr.mxu0 %v538
  %770 = vmatpush2.msra.mxu0 %v537
  %771 = vmatprep.mubr.f32.mxu0 %v402
  %772 = vmatmul.mubr.f32.gmra.mxu0 %v401
  %v773 = vpop.f32.mrf.mxu0
  %v774 = vadd.f32 %v670, %v773
  %v775 = vpop.f32.mrf.mxu0
  %v776 = vadd.f32 %v674, %v775
  %777 = vmatprep.mubr.f32.mxu0 %v404
  %778 = vmatmul.mubr.f32.gmra.mxu0 %v403
  %v779 = vpop.f32.mrf.mxu0
  %v780 = vadd.f32 %v670, %v779
  %v781 = vpop.f32.mrf.mxu0
  %v782 = vadd.f32 %v674, %v781
  %783 = vmatprep.mubr.f32.mxu0 %v406
  %784 = vmatmul.mubr.f32.gmra.mxu0 %v405
  %v785 = vpop.f32.mrf.mxu0
  %v786 = vadd.f32 %v670, %v785
  %v787 = vpop.f32.mrf.mxu0
  %v788 = vadd.f32 %v674, %v787
  %789 = vmatprep.mubr.f32.mxu0 %v408
  %790 = vmatmul.mubr.f32.gmra.mxu0 %v407
  %v791 = vpop.f32.mrf.mxu0
  %v792 = vadd.f32 %v670, %v791
  %v793 = vpop.f32.mrf.mxu0
  %v794 = vadd.f32 %v674, %v793
  %795 = vdwg.mxu0
  %796 = vmatprep.subr.mxu0 %v532
  %797 = vmatpush1.msra.mxu0 %v531
  %798 = vmatprep.subr.mxu0 %v524
  %799 = vmatpush1.msra.mxu0 %v523
  %800 = vmatprep.subr.mxu0 %v516
  %801 = vmatpush1.msra.mxu0 %v515
  %802 = vmatprep.subr.mxu0 %v508
  %803 = vmatpush1.msra.mxu0 %v507
  %804 = vmatprep.subr.mxu0 %v500
  %805 = vmatpush1.msra.mxu0 %v499
  %806 = vmatprep.subr.mxu0 %v492
  %807 = vmatpush1.msra.mxu0 %v491
  %808 = vmatprep.subr.mxu0 %v484
  %809 = vmatpush1.msra.mxu0 %v483
  %810 = vmatprep.subr.mxu0 %v476
  %811 = vmatpush1.msra.mxu0 %v475
  %812 = vmatprep.subr.mxu0 %v468
  %813 = vmatpush1.msra.mxu0 %v467
  %814 = vmatprep.subr.mxu0 %v460
  %815 = vmatpush1.msra.mxu0 %v459
  %816 = vmatprep.subr.mxu0 %v452
  %817 = vmatpush1.msra.mxu0 %v451
  %818 = vmatprep.subr.mxu0 %v444
  %819 = vmatpush1.msra.mxu0 %v443
  %820 = vmatprep.subr.mxu0 %v436
  %821 = vmatpush1.msra.mxu0 %v435
  %822 = vmatprep.subr.mxu0 %v428
  %823 = vmatpush1.msra.mxu0 %v427
  %824 = vmatprep.subr.mxu0 %v420
  %825 = vmatpush1.msra.mxu0 %v419
  %826 = vmatprep.subr.mxu0 %v412
  %827 = vmatpush1.msra.mxu0 %v411
  %828 = vmatprep.subr.mxu0 %v660
  %829 = vmatpush2.msra.mxu0 %v659
  %830 = vmatprep.subr.mxu0 %v652
  %831 = vmatpush2.msra.mxu0 %v651
  %832 = vmatprep.subr.mxu0 %v644
  %833 = vmatpush2.msra.mxu0 %v643
  %834 = vmatprep.subr.mxu0 %v636
  %835 = vmatpush2.msra.mxu0 %v635
  %836 = vmatprep.subr.mxu0 %v628
  %837 = vmatpush2.msra.mxu0 %v627
  %838 = vmatprep.subr.mxu0 %v620
  %839 = vmatpush2.msra.mxu0 %v619
  %840 = vmatprep.subr.mxu0 %v612
  %841 = vmatpush2.msra.mxu0 %v611
  %842 = vmatprep.subr.mxu0 %v604
  %843 = vmatpush2.msra.mxu0 %v603
  %844 = vmatprep.subr.mxu0 %v596
  %845 = vmatpush2.msra.mxu0 %v595
  %846 = vmatprep.subr.mxu0 %v588
  %847 = vmatpush2.msra.mxu0 %v587
  %848 = vmatprep.subr.mxu0 %v580
  %849 = vmatpush2.msra.mxu0 %v579
  %850 = vmatprep.subr.mxu0 %v572
  %851 = vmatpush2.msra.mxu0 %v571
  %852 = vmatprep.subr.mxu0 %v564
  %853 = vmatpush2.msra.mxu0 %v563
  %854 = vmatprep.subr.mxu0 %v556
  %855 = vmatpush2.msra.mxu0 %v555
  %856 = vmatprep.subr.mxu0 %v548
  %857 = vmatpush2.msra.mxu0 %v547
  %858 = vmatprep.subr.mxu0 %v540
  %859 = vmatpush2.msra.mxu0 %v539
  %860 = vmatprep.mubr.f32.mxu0 %v402
  %861 = vmatmul.mubr.f32.gmra.mxu0 %v401
  %v862 = vpop.f32.mrf.mxu0
  %v863 = vadd.f32 %v678, %v862
  %v864 = vpop.f32.mrf.mxu0
  %v865 = vadd.f32 %v682, %v864
  %866 = vmatprep.mubr.f32.mxu0 %v404
  %867 = vmatmul.mubr.f32.gmra.mxu0 %v403
  %v868 = vpop.f32.mrf.mxu0
  %v869 = vadd.f32 %v678, %v868
  %v870 = vpop.f32.mrf.mxu0
  %v871 = vadd.f32 %v682, %v870
  %872 = vmatprep.mubr.f32.mxu0 %v406
  %873 = vmatmul.mubr.f32.gmra.mxu0 %v405
  %v874 = vpop.f32.mrf.mxu0
  %v875 = vadd.f32 %v678, %v874
  %v876 = vpop.f32.mrf.mxu0
  %v877 = vadd.f32 %v682, %v876
  %878 = vmatprep.mubr.f32.mxu0 %v408
  %879 = vmatmul.mubr.f32.gmra.mxu0 %v407
  %v880 = vpop.f32.mrf.mxu0
  %v881 = vadd.f32 %v678, %v880
  %v882 = vpop.f32.mrf.mxu0
  %v883 = vadd.f32 %v682, %v882
  %884 = vdwg.mxu0
  %885 = vmatprep.subr.mxu0 %v534
  %886 = vmatpush1.msra.mxu0 %v533
  %887 = vmatprep.subr.mxu0 %v526
  %888 = vmatpush1.msra.mxu0 %v525
  %889 = vmatprep.subr.mxu0 %v518
  %890 = vmatpush1.msra.mxu0 %v517
  %891 = vmatprep.subr.mxu0 %v510
  %892 = vmatpush1.msra.mxu0 %v509
  %893 = vmatprep.subr.mxu0 %v502
  %894 = vmatpush1.msra.mxu0 %v501
  %895 = vmatprep.subr.mxu0 %v494
  %896 = vmatpush1.msra.mxu0 %v493
  %897 = vmatprep.subr.mxu0 %v486
  %898 = vmatpush1.msra.mxu0 %v485
  %899 = vmatprep.subr.mxu0 %v478
  %900 = vmatpush1.msra.mxu0 %v477
  %901 = vmatprep.subr.mxu0 %v470
  %902 = vmatpush1.msra.mxu0 %v469
  %903 = vmatprep.subr.mxu0 %v462
  %904 = vmatpush1.msra.mxu0 %v461
  %905 = vmatprep.subr.mxu0 %v454
  %906 = vmatpush1.msra.mxu0 %v453
  %907 = vmatprep.subr.mxu0 %v446
  %908 = vmatpush1.msra.mxu0 %v445
  %909 = vmatprep.subr.mxu0 %v438
  %910 = vmatpush1.msra.mxu0 %v437
  %911 = vmatprep.subr.mxu0 %v430
  %912 = vmatpush1.msra.mxu0 %v429
  %913 = vmatprep.subr.mxu0 %v422
  %914 = vmatpush1.msra.mxu0 %v421
  %915 = vmatprep.subr.mxu0 %v414
  %916 = vmatpush1.msra.mxu0 %v413
  %917 = vmatprep.subr.mxu0 %v662
  %918 = vmatpush2.msra.mxu0 %v661
  %919 = vmatprep.subr.mxu0 %v654
  %920 = vmatpush2.msra.mxu0 %v653
  %921 = vmatprep.subr.mxu0 %v646
  %922 = vmatpush2.msra.mxu0 %v645
  %923 = vmatprep.subr.mxu0 %v638
  %924 = vmatpush2.msra.mxu0 %v637
  %925 = vmatprep.subr.mxu0 %v630
  %926 = vmatpush2.msra.mxu0 %v629
  %927 = vmatprep.subr.mxu0 %v622
  %928 = vmatpush2.msra.mxu0 %v621
  %929 = vmatprep.subr.mxu0 %v614
  %930 = vmatpush2.msra.mxu0 %v613
  %931 = vmatprep.subr.mxu0 %v606
  %932 = vmatpush2.msra.mxu0 %v605
  %933 = vmatprep.subr.mxu0 %v598
  %934 = vmatpush2.msra.mxu0 %v597
  %935 = vmatprep.subr.mxu0 %v590
  %936 = vmatpush2.msra.mxu0 %v589
  %937 = vmatprep.subr.mxu0 %v582
  %938 = vmatpush2.msra.mxu0 %v581
  %939 = vmatprep.subr.mxu0 %v574
  %940 = vmatpush2.msra.mxu0 %v573
  %941 = vmatprep.subr.mxu0 %v566
  %942 = vmatpush2.msra.mxu0 %v565
  %943 = vmatprep.subr.mxu0 %v558
  %944 = vmatpush2.msra.mxu0 %v557
  %945 = vmatprep.subr.mxu0 %v550
  %946 = vmatpush2.msra.mxu0 %v549
  %947 = vmatprep.subr.mxu0 %v542
  %948 = vmatpush2.msra.mxu0 %v541
  %949 = vmatprep.mubr.f32.mxu0 %v402
  %950 = vmatmul.mubr.f32.gmra.mxu0 %v401
  %v951 = vpop.f32.mrf.mxu0
  %v952 = vadd.f32 %v686, %v951
  %v953 = vpop.f32.mrf.mxu0
  %v954 = vadd.f32 %v690, %v953
  %955 = vmatprep.mubr.f32.mxu0 %v404
  %956 = vmatmul.mubr.f32.gmra.mxu0 %v403
  %v957 = vpop.f32.mrf.mxu0
  %v958 = vadd.f32 %v686, %v957
  %v959 = vpop.f32.mrf.mxu0
  %v960 = vadd.f32 %v690, %v959
  %961 = vmatprep.mubr.f32.mxu0 %v406
  %962 = vmatmul.mubr.f32.gmra.mxu0 %v405
  %v963 = vpop.f32.mrf.mxu0
  %v964 = vadd.f32 %v686, %v963
  %v965 = vpop.f32.mrf.mxu0
  %v966 = vadd.f32 %v690, %v965
  %967 = vmatprep.mubr.f32.mxu0 %v408
  %968 = vmatmul.mubr.f32.gmra.mxu0 %v407
  %v969 = vpop.f32.mrf.mxu0
  %v970 = vadd.f32 %v686, %v969
  %v971 = vpop.f32.mrf.mxu0
  %v972 = vadd.f32 %v690, %v971
  %973 = vdwg.mxu0
  %974 = vmatprep.subr.mxu0 %v536
  %975 = vmatpush1.msra.mxu0 %v535
  %976 = vmatprep.subr.mxu0 %v528
  %977 = vmatpush1.msra.mxu0 %v527
  %978 = vmatprep.subr.mxu0 %v520
  %979 = vmatpush1.msra.mxu0 %v519
  %980 = vmatprep.subr.mxu0 %v512
  %981 = vmatpush1.msra.mxu0 %v511
  %982 = vmatprep.subr.mxu0 %v504
  %983 = vmatpush1.msra.mxu0 %v503
  %984 = vmatprep.subr.mxu0 %v496
  %985 = vmatpush1.msra.mxu0 %v495
  %986 = vmatprep.subr.mxu0 %v488
  %987 = vmatpush1.msra.mxu0 %v487
  %988 = vmatprep.subr.mxu0 %v480
  %989 = vmatpush1.msra.mxu0 %v479
  %990 = vmatprep.subr.mxu0 %v472
  %991 = vmatpush1.msra.mxu0 %v471
  %992 = vmatprep.subr.mxu0 %v464
  %993 = vmatpush1.msra.mxu0 %v463
  %994 = vmatprep.subr.mxu0 %v456
  %995 = vmatpush1.msra.mxu0 %v455
  %996 = vmatprep.subr.mxu0 %v448
  %997 = vmatpush1.msra.mxu0 %v447
  %998 = vmatprep.subr.mxu0 %v440
  %999 = vmatpush1.msra.mxu0 %v439
  %1000 = vmatprep.subr.mxu0 %v432
  %1001 = vmatpush1.msra.mxu0 %v431
  %1002 = vmatprep.subr.mxu0 %v424
  %1003 = vmatpush1.msra.mxu0 %v423
  %1004 = vmatprep.subr.mxu0 %v416
  %1005 = vmatpush1.msra.mxu0 %v415
  %1006 = vmatprep.subr.mxu0 %v664
  %1007 = vmatpush2.msra.mxu0 %v663
  %1008 = vmatprep.subr.mxu0 %v656
  %1009 = vmatpush2.msra.mxu0 %v655
  %1010 = vmatprep.subr.mxu0 %v648
  %1011 = vmatpush2.msra.mxu0 %v647
  %1012 = vmatprep.subr.mxu0 %v640
  %1013 = vmatpush2.msra.mxu0 %v639
  %1014 = vmatprep.subr.mxu0 %v632
  %1015 = vmatpush2.msra.mxu0 %v631
  %1016 = vmatprep.subr.mxu0 %v624
  %1017 = vmatpush2.msra.mxu0 %v623
  %1018 = vmatprep.subr.mxu0 %v616
  %1019 = vmatpush2.msra.mxu0 %v615
  %1020 = vmatprep.subr.mxu0 %v608
  %1021 = vmatpush2.msra.mxu0 %v607
  %1022 = vmatprep.subr.mxu0 %v600
  %1023 = vmatpush2.msra.mxu0 %v599
  %1024 = vmatprep.subr.mxu0 %v592
  %1025 = vmatpush2.msra.mxu0 %v591
  %1026 = vmatprep.subr.mxu0 %v584
  %1027 = vmatpush2.msra.mxu0 %v583
  %1028 = vmatprep.subr.mxu0 %v576
  %1029 = vmatpush2.msra.mxu0 %v575
  %1030 = vmatprep.subr.mxu0 %v568
  %1031 = vmatpush2.msra.mxu0 %v567
  %1032 = vmatprep.subr.mxu0 %v560
  %1033 = vmatpush2.msra.mxu0 %v559
  %1034 = vmatprep.subr.mxu0 %v552
  %1035 = vmatpush2.msra.mxu0 %v551
  %1036 = vmatprep.subr.mxu0 %v544
  %1037 = vmatpush2.msra.mxu0 %v543
  %1038 = vmatprep.mubr.f32.mxu0 %v402
  %1039 = vmatmul.mubr.f32.gmra.mxu0 %v401
  %v1040 = vpop.f32.mrf.mxu0
  %v1041 = vadd.f32 %v694, %v1040
  %v1042 = vpop.f32.mrf.mxu0
  %v1043 = vadd.f32 %v698, %v1042
  %1044 = vmatprep.mubr.f32.mxu0 %v404
  %1045 = vmatmul.mubr.f32.gmra.mxu0 %v403
  %v1046 = vpop.f32.mrf.mxu0
  %v1047 = vadd.f32 %v694, %v1046
  %v1048 = vpop.f32.mrf.mxu0
  %v1049 = vadd.f32 %v698, %v1048
  %1050 = vmatprep.mubr.f32.mxu0 %v406
  %1051 = vmatmul.mubr.f32.gmra.mxu0 %v405
  %v1052 = vpop.f32.mrf.mxu0
  %v1053 = vadd.f32 %v694, %v1052
  %v1054 = vpop.f32.mrf.mxu0
  %v1055 = vadd.f32 %v698, %v1054
  %1056 = vmatprep.mubr.f32.mxu0 %v408
  %1057 = vmatmul.mubr.f32.gmra.mxu0 %v407
  %v1058 = vpop.f32.mrf.mxu0
  %v1059 = vadd.f32 %v694, %v1058
  %v1060 = vpop.f32.mrf.mxu0
  %v1061 = vadd.f32 %v698, %v1060
  %1062 = vdwg.mxu0
  %v1063 = vmax.f32 %v774, 0.0
  %v1064 = vmax.f32 %v776, 0.0
  %v1065 = vmax.f32 %v863, 0.0
  %v1066 = vmax.f32 %v865, 0.0
  %v1067 = vmax.f32 %v952, 0.0
  %v1068 = vmax.f32 %v954, 0.0
  %v1069 = vmax.f32 %v1041, 0.0
  %v1070 = vmax.f32 %v1043, 0.0
  %v1071 = vmax.f32 %v780, 0.0
  %v1072 = vmax.f32 %v782, 0.0
  %v1073 = vmax.f32 %v869, 0.0
  %v1074 = vmax.f32 %v871, 0.0
  %v1075 = vmax.f32 %v958, 0.0
  %v1076 = vmax.f32 %v960, 0.0
  %v1077 = vmax.f32 %v1047, 0.0
  %v1078 = vmax.f32 %v1049, 0.0
  %v1079 = vmax.f32 %v786, 0.0
  %v1080 = vmax.f32 %v788, 0.0
  %v1081 = vmax.f32 %v875, 0.0
  %v1082 = vmax.f32 %v877, 0.0
  %v1083 = vmax.f32 %v964, 0.0
  %v1084 = vmax.f32 %v966, 0.0
  %v1085 = vmax.f32 %v1053, 0.0
  %v1086 = vmax.f32 %v1055, 0.0
  %v1087 = vmax.f32 %v792, 0.0
  %v1088 = vmax.f32 %v794, 0.0
  %v1089 = vmax.f32 %v881, 0.0
  %v1090 = vmax.f32 %v883, 0.0
  %v1091 = vmax.f32 %v970, 0.0
  %v1092 = vmax.f32 %v972, 0.0
  %v1093 = vmax.f32 %v1059, 0.0
  %v1094 = vmax.f32 %v1061, 0.0
  %v1095 = vld [vmem:[%s6] sm:$0xff]
  %v1096 = vld [vmem:[%s6 + $0x8] sm:$0xff]
  %v1097 = vld [vmem:[%s6 + $0x10] sm:$0xff]
  %v1098 = vld [vmem:[%s6 + $0x18] sm:$0xff]
  %v1099 = vld [vmem:[%s6 + $0x20] sm:$0xff]
  %v1100 = vld [vmem:[%s6 + $0x28] sm:$0xff]
  %v1101 = vld [vmem:[%s6 + $0x30] sm:$0xff]
  %v1102 = vld [vmem:[%s6 + $0x38] sm:$0xff]
  %v1103 = vld [vmem:[%s6 + $0x40] sm:$0xff]
  %v1104 = vld [vmem:[%s6 + $0x48] sm:$0xff]
  %v1105 = vld [vmem:[%s6 + $0x50] sm:$0xff]
  %v1106 = vld [vmem:[%s6 + $0x58] sm:$0xff]
  %v1107 = vld [vmem:[%s6 + $0x60] sm:$0xff]
  %v1108 = vld [vmem:[%s6 + $0x68] sm:$0xff]
  %v1109 = vld [vmem:[%s6 + $0x70] sm:$0xff]
  %v1110 = vld [vmem:[%s6 + $0x78] sm:$0xff]
  %v1111 = vld [vmem:[%s6 + $0x80] sm:$0xff]
  %v1112 = vld [vmem:[%s6 + $0x88] sm:$0xff]
  %v1113 = vld [vmem:[%s6 + $0x90] sm:$0xff]
  %v1114 = vld [vmem:[%s6 + $0x98] sm:$0xff]
  %v1115 = vld [vmem:[%s6 + $0xa0] sm:$0xff]
  %v1116 = vld [vmem:[%s6 + $0xa8] sm:$0xff]
  %v1117 = vld [vmem:[%s6 + $0xb0] sm:$0xff]
  %v1118 = vld [vmem:[%s6 + $0xb8] sm:$0xff]
  %v1119 = vld [vmem:[%s6 + $0xc0] sm:$0xff]
  %v1120 = vld [vmem:[%s6 + $0xc8] sm:$0xff]
  %v1121 = vld [vmem:[%s6 + $0xd0] sm:$0xff]
  %v1122 = vld [vmem:[%s6 + $0xd8] sm:$0xff]
  %v1123 = vld [vmem:[%s6 + $0xe0] sm:$0xff]
  %v1124 = vld [vmem:[%s6 + $0xe8] sm:$0xff]
  %v1125 = vld [vmem:[%s6 + $0xf0] sm:$0xff]
  %v1126 = vld [vmem:[%s6 + $0xf8] sm:$0xff]
  %v1127 = vld [vmem:[%s6 + $0x100] sm:$0xff]
  %v1128 = vld [vmem:[%s6 + $0x108] sm:$0xff]
  %v1129 = vld [vmem:[%s6 + $0x110] sm:$0xff]
  %v1130 = vld [vmem:[%s6 + $0x118] sm:$0xff]
  %v1131 = vld [vmem:[%s6 + $0x120] sm:$0xff]
  %v1132 = vld [vmem:[%s6 + $0x128] sm:$0xff]
  %v1133 = vld [vmem:[%s6 + $0x130] sm:$0xff]
  %v1134 = vld [vmem:[%s6 + $0x138] sm:$0xff]
  %v1135 = vld [vmem:[%s6 + $0x140] sm:$0xff]
  %v1136 = vld [vmem:[%s6 + $0x148] sm:$0xff]
  %v1137 = vld [vmem:[%s6 + $0x150] sm:$0xff]
  %v1138 = vld [vmem:[%s6 + $0x158] sm:$0xff]
  %v1139 = vld [vmem:[%s6 + $0x160] sm:$0xff]
  %v1140 = vld [vmem:[%s6 + $0x168] sm:$0xff]
  %v1141 = vld [vmem:[%s6 + $0x170] sm:$0xff]
  %v1142 = vld [vmem:[%s6 + $0x178] sm:$0xff]
  %v1143 = vld [vmem:[%s6 + $0x180] sm:$0xff]
  %v1144 = vld [vmem:[%s6 + $0x188] sm:$0xff]
  %v1145 = vld [vmem:[%s6 + $0x190] sm:$0xff]
  %v1146 = vld [vmem:[%s6 + $0x198] sm:$0xff]
  %v1147 = vld [vmem:[%s6 + $0x1a0] sm:$0xff]
  %v1148 = vld [vmem:[%s6 + $0x1a8] sm:$0xff]
  %v1149 = vld [vmem:[%s6 + $0x1b0] sm:$0xff]
  %v1150 = vld [vmem:[%s6 + $0x1b8] sm:$0xff]
  %v1151 = vld [vmem:[%s6 + $0x1c0] sm:$0xff]
  %v1152 = vld [vmem:[%s6 + $0x1c8] sm:$0xff]
  %v1153 = vld [vmem:[%s6 + $0x1d0] sm:$0xff]
  %v1154 = vld [vmem:[%s6 + $0x1d8] sm:$0xff]
  %v1155 = vld [vmem:[%s6 + $0x1e0] sm:$0xff]
  %v1156 = vld [vmem:[%s6 + $0x1e8] sm:$0xff]
  %v1157 = vld [vmem:[%s6 + $0x1f0] sm:$0xff]
  %v1158 = vld [vmem:[%s6 + $0x1f8] sm:$0xff]
  %v1159 = vld [vmem:[%s6 + $0x200] sm:$0xff]
  %v1160 = vld [vmem:[%s6 + $0x208] sm:$0xff]
  %v1161 = vld [vmem:[%s6 + $0x210] sm:$0xff]
  %v1162 = vld [vmem:[%s6 + $0x218] sm:$0xff]
  %v1163 = vld [vmem:[%s6 + $0x220] sm:$0xff]
  %v1164 = vld [vmem:[%s6 + $0x228] sm:$0xff]
  %v1165 = vld [vmem:[%s6 + $0x230] sm:$0xff]
  %v1166 = vld [vmem:[%s6 + $0x238] sm:$0xff]
  %v1167 = vld [vmem:[%s6 + $0x240] sm:$0xff]
  %v1168 = vld [vmem:[%s6 + $0x248] sm:$0xff]
  %v1169 = vld [vmem:[%s6 + $0x250] sm:$0xff]
  %v1170 = vld [vmem:[%s6 + $0x258] sm:$0xff]
  %v1171 = vld [vmem:[%s6 + $0x260] sm:$0xff]
  %v1172 = vld [vmem:[%s6 + $0x268] sm:$0xff]
  %v1173 = vld [vmem:[%s6 + $0x270] sm:$0xff]
  %v1174 = vld [vmem:[%s6 + $0x278] sm:$0xff]
  %v1175 = vld [vmem:[%s6 + $0x280] sm:$0xff]
  %v1176 = vld [vmem:[%s6 + $0x288] sm:$0xff]
  %v1177 = vld [vmem:[%s6 + $0x290] sm:$0xff]
  %v1178 = vld [vmem:[%s6 + $0x298] sm:$0xff]
  %v1179 = vld [vmem:[%s6 + $0x2a0] sm:$0xff]
  %v1180 = vld [vmem:[%s6 + $0x2a8] sm:$0xff]
  %v1181 = vld [vmem:[%s6 + $0x2b0] sm:$0xff]
  %v1182 = vld [vmem:[%s6 + $0x2b8] sm:$0xff]
  %v1183 = vld [vmem:[%s6 + $0x2c0] sm:$0xff]
  %v1184 = vld [vmem:[%s6 + $0x2c8] sm:$0xff]
  %v1185 = vld [vmem:[%s6 + $0x2d0] sm:$0xff]
  %v1186 = vld [vmem:[%s6 + $0x2d8] sm:$0xff]
  %v1187 = vld [vmem:[%s6 + $0x2e0] sm:$0xff]
  %v1188 = vld [vmem:[%s6 + $0x2e8] sm:$0xff]
  %v1189 = vld [vmem:[%s6 + $0x2f0] sm:$0xff]
  %v1190 = vld [vmem:[%s6 + $0x2f8] sm:$0xff]
  %v1191 = vld [vmem:[%s6 + $0x300] sm:$0xff]
  %v1192 = vld [vmem:[%s6 + $0x308] sm:$0xff]
  %v1193 = vld [vmem:[%s6 + $0x310] sm:$0xff]
  %v1194 = vld [vmem:[%s6 + $0x318] sm:$0xff]
  %v1195 = vld [vmem:[%s6 + $0x320] sm:$0xff]
  %v1196 = vld [vmem:[%s6 + $0x328] sm:$0xff]
  %v1197 = vld [vmem:[%s6 + $0x330] sm:$0xff]
  %v1198 = vld [vmem:[%s6 + $0x338] sm:$0xff]
  %v1199 = vld [vmem:[%s6 + $0x340] sm:$0xff]
  %v1200 = vld [vmem:[%s6 + $0x348] sm:$0xff]
  %v1201 = vld [vmem:[%s6 + $0x350] sm:$0xff]
  %v1202 = vld [vmem:[%s6 + $0x358] sm:$0xff]
  %v1203 = vld [vmem:[%s6 + $0x360] sm:$0xff]
  %v1204 = vld [vmem:[%s6 + $0x368] sm:$0xff]
  %v1205 = vld [vmem:[%s6 + $0x370] sm:$0xff]
  %v1206 = vld [vmem:[%s6 + $0x378] sm:$0xff]
  %v1207 = vld [vmem:[%s6 + $0x380] sm:$0xff]
  %v1208 = vld [vmem:[%s6 + $0x388] sm:$0xff]
  %v1209 = vld [vmem:[%s6 + $0x390] sm:$0xff]
  %v1210 = vld [vmem:[%s6 + $0x398] sm:$0xff]
  %v1211 = vld [vmem:[%s6 + $0x3a0] sm:$0xff]
  %v1212 = vld [vmem:[%s6 + $0x3a8] sm:$0xff]
  %v1213 = vld [vmem:[%s6 + $0x3b0] sm:$0xff]
  %v1214 = vld [vmem:[%s6 + $0x3b8] sm:$0xff]
  %v1215 = vld [vmem:[%s6 + $0x3c0] sm:$0xff]
  %v1216 = vld [vmem:[%s6 + $0x3c8] sm:$0xff]
  %v1217 = vld [vmem:[%s6 + $0x3d0] sm:$0xff]
  %v1218 = vld [vmem:[%s6 + $0x3d8] sm:$0xff]
  %v1219 = vld [vmem:[%s6 + $0x3e0] sm:$0xff]
  %v1220 = vld [vmem:[%s6 + $0x3e8] sm:$0xff]
  %v1221 = vld [vmem:[%s6 + $0x3f0] sm:$0xff]
  %v1222 = vld [vmem:[%s6 + $0x3f8] sm:$0xff]
  %v1223 = vld [vmem:[%s6 + $0x400] sm:$0xff]
  %v1224 = vld [vmem:[%s6 + $0x408] sm:$0xff]
  %v1225 = vld [vmem:[%s6 + $0x410] sm:$0xff]
  %v1226 = vld [vmem:[%s6 + $0x418] sm:$0xff]
  %v1227 = vld [vmem:[%s6 + $0x420] sm:$0xff]
  %v1228 = vld [vmem:[%s6 + $0x428] sm:$0xff]
  %v1229 = vld [vmem:[%s6 + $0x430] sm:$0xff]
  %v1230 = vld [vmem:[%s6 + $0x438] sm:$0xff]
  %v1231 = vld [vmem:[%s6 + $0x440] sm:$0xff]
  %v1232 = vld [vmem:[%s6 + $0x448] sm:$0xff]
  %v1233 = vld [vmem:[%s6 + $0x450] sm:$0xff]
  %v1234 = vld [vmem:[%s6 + $0x458] sm:$0xff]
  %v1235 = vld [vmem:[%s6 + $0x460] sm:$0xff]
  %v1236 = vld [vmem:[%s6 + $0x468] sm:$0xff]
  %v1237 = vld [vmem:[%s6 + $0x470] sm:$0xff]
  %v1238 = vld [vmem:[%s6 + $0x478] sm:$0xff]
  %v1239 = vld [vmem:[%s6 + $0x480] sm:$0xff]
  %v1240 = vld [vmem:[%s6 + $0x488] sm:$0xff]
  %v1241 = vld [vmem:[%s6 + $0x490] sm:$0xff]
  %v1242 = vld [vmem:[%s6 + $0x498] sm:$0xff]
  %v1243 = vld [vmem:[%s6 + $0x4a0] sm:$0xff]
  %v1244 = vld [vmem:[%s6 + $0x4a8] sm:$0xff]
  %v1245 = vld [vmem:[%s6 + $0x4b0] sm:$0xff]
  %v1246 = vld [vmem:[%s6 + $0x4b8] sm:$0xff]
  %v1247 = vld [vmem:[%s6 + $0x4c0] sm:$0xff]
  %v1248 = vld [vmem:[%s6 + $0x4c8] sm:$0xff]
  %v1249 = vld [vmem:[%s6 + $0x4d0] sm:$0xff]
  %v1250 = vld [vmem:[%s6 + $0x4d8] sm:$0xff]
  %v1251 = vld [vmem:[%s6 + $0x4e0] sm:$0xff]
  %v1252 = vld [vmem:[%s6 + $0x4e8] sm:$0xff]
  %v1253 = vld [vmem:[%s6 + $0x4f0] sm:$0xff]
  %v1254 = vld [vmem:[%s6 + $0x4f8] sm:$0xff]
  %v1255 = vld [vmem:[%s6 + $0x500] sm:$0xff]
  %v1256 = vld [vmem:[%s6 + $0x508] sm:$0xff]
  %v1257 = vld [vmem:[%s6 + $0x510] sm:$0xff]
  %v1258 = vld [vmem:[%s6 + $0x518] sm:$0xff]
  %v1259 = vld [vmem:[%s6 + $0x520] sm:$0xff]
  %v1260 = vld [vmem:[%s6 + $0x528] sm:$0xff]
  %v1261 = vld [vmem:[%s6 + $0x530] sm:$0xff]
  %v1262 = vld [vmem:[%s6 + $0x538] sm:$0xff]
  %v1263 = vld [vmem:[%s6 + $0x540] sm:$0xff]
  %v1264 = vld [vmem:[%s6 + $0x548] sm:$0xff]
  %v1265 = vld [vmem:[%s6 + $0x550] sm:$0xff]
  %v1266 = vld [vmem:[%s6 + $0x558] sm:$0xff]
  %v1267 = vld [vmem:[%s6 + $0x560] sm:$0xff]
  %v1268 = vld [vmem:[%s6 + $0x568] sm:$0xff]
  %v1269 = vld [vmem:[%s6 + $0x570] sm:$0xff]
  %v1270 = vld [vmem:[%s6 + $0x578] sm:$0xff]
  %v1271 = vld [vmem:[%s6 + $0x580] sm:$0xff]
  %v1272 = vld [vmem:[%s6 + $0x588] sm:$0xff]
  %v1273 = vld [vmem:[%s6 + $0x590] sm:$0xff]
  %v1274 = vld [vmem:[%s6 + $0x598] sm:$0xff]
  %v1275 = vld [vmem:[%s6 + $0x5a0] sm:$0xff]
  %v1276 = vld [vmem:[%s6 + $0x5a8] sm:$0xff]
  %v1277 = vld [vmem:[%s6 + $0x5b0] sm:$0xff]
  %v1278 = vld [vmem:[%s6 + $0x5b8] sm:$0xff]
  %v1279 = vld [vmem:[%s6 + $0x5c0] sm:$0xff]
  %v1280 = vld [vmem:[%s6 + $0x5c8] sm:$0xff]
  %v1281 = vld [vmem:[%s6 + $0x5d0] sm:$0xff]
  %v1282 = vld [vmem:[%s6 + $0x5d8] sm:$0xff]
  %v1283 = vld [vmem:[%s6 + $0x5e0] sm:$0xff]
  %v1284 = vld [vmem:[%s6 + $0x5e8] sm:$0xff]
  %v1285 = vld [vmem:[%s6 + $0x5f0] sm:$0xff]
  %v1286 = vld [vmem:[%s6 + $0x5f8] sm:$0xff]
  %v1287 = vld [vmem:[%s6 + $0x600] sm:$0xff]
  %v1288 = vld [vmem:[%s6 + $0x608] sm:$0xff]
  %v1289 = vld [vmem:[%s6 + $0x610] sm:$0xff]
  %v1290 = vld [vmem:[%s6 + $0x618] sm:$0xff]
  %v1291 = vld [vmem:[%s6 + $0x620] sm:$0xff]
  %v1292 = vld [vmem:[%s6 + $0x628] sm:$0xff]
  %v1293 = vld [vmem:[%s6 + $0x630] sm:$0xff]
  %v1294 = vld [vmem:[%s6 + $0x638] sm:$0xff]
  %v1295 = vld [vmem:[%s6 + $0x640] sm:$0xff]
  %v1296 = vld [vmem:[%s6 + $0x648] sm:$0xff]
  %v1297 = vld [vmem:[%s6 + $0x650] sm:$0xff]
  %v1298 = vld [vmem:[%s6 + $0x658] sm:$0xff]
  %v1299 = vld [vmem:[%s6 + $0x660] sm:$0xff]
  %v1300 = vld [vmem:[%s6 + $0x668] sm:$0xff]
  %v1301 = vld [vmem:[%s6 + $0x670] sm:$0xff]
  %v1302 = vld [vmem:[%s6 + $0x678] sm:$0xff]
  %v1303 = vld [vmem:[%s6 + $0x680] sm:$0xff]
  %v1304 = vld [vmem:[%s6 + $0x688] sm:$0xff]
  %v1305 = vld [vmem:[%s6 + $0x690] sm:$0xff]
  %v1306 = vld [vmem:[%s6 + $0x698] sm:$0xff]
  %v1307 = vld [vmem:[%s6 + $0x6a0] sm:$0xff]
  %v1308 = vld [vmem:[%s6 + $0x6a8] sm:$0xff]
  %v1309 = vld [vmem:[%s6 + $0x6b0] sm:$0xff]
  %v1310 = vld [vmem:[%s6 + $0x6b8] sm:$0xff]
  %v1311 = vld [vmem:[%s6 + $0x6c0] sm:$0xff]
  %v1312 = vld [vmem:[%s6 + $0x6c8] sm:$0xff]
  %v1313 = vld [vmem:[%s6 + $0x6d0] sm:$0xff]
  %v1314 = vld [vmem:[%s6 + $0x6d8] sm:$0xff]
  %v1315 = vld [vmem:[%s6 + $0x6e0] sm:$0xff]
  %v1316 = vld [vmem:[%s6 + $0x6e8] sm:$0xff]
  %v1317 = vld [vmem:[%s6 + $0x6f0] sm:$0xff]
  %v1318 = vld [vmem:[%s6 + $0x6f8] sm:$0xff]
  %v1319 = vld [vmem:[%s6 + $0x700] sm:$0xff]
  %v1320 = vld [vmem:[%s6 + $0x708] sm:$0xff]
  %v1321 = vld [vmem:[%s6 + $0x710] sm:$0xff]
  %v1322 = vld [vmem:[%s6 + $0x718] sm:$0xff]
  %v1323 = vld [vmem:[%s6 + $0x720] sm:$0xff]
  %v1324 = vld [vmem:[%s6 + $0x728] sm:$0xff]
  %v1325 = vld [vmem:[%s6 + $0x730] sm:$0xff]
  %v1326 = vld [vmem:[%s6 + $0x738] sm:$0xff]
  %v1327 = vld [vmem:[%s6 + $0x740] sm:$0xff]
  %v1328 = vld [vmem:[%s6 + $0x748] sm:$0xff]
  %v1329 = vld [vmem:[%s6 + $0x750] sm:$0xff]
  %v1330 = vld [vmem:[%s6 + $0x758] sm:$0xff]
  %v1331 = vld [vmem:[%s6 + $0x760] sm:$0xff]
  %v1332 = vld [vmem:[%s6 + $0x768] sm:$0xff]
  %v1333 = vld [vmem:[%s6 + $0x770] sm:$0xff]
  %v1334 = vld [vmem:[%s6 + $0x778] sm:$0xff]
  %v1335 = vld [vmem:[%s6 + $0x780] sm:$0xff]
  %v1336 = vld [vmem:[%s6 + $0x788] sm:$0xff]
  %v1337 = vld [vmem:[%s6 + $0x790] sm:$0xff]
  %v1338 = vld [vmem:[%s6 + $0x798] sm:$0xff]
  %v1339 = vld [vmem:[%s6 + $0x7a0] sm:$0xff]
  %v1340 = vld [vmem:[%s6 + $0x7a8] sm:$0xff]
  %v1341 = vld [vmem:[%s6 + $0x7b0] sm:$0xff]
  %v1342 = vld [vmem:[%s6 + $0x7b8] sm:$0xff]
  %v1343 = vld [vmem:[%s6 + $0x7c0] sm:$0xff]
  %v1344 = vld [vmem:[%s6 + $0x7c8] sm:$0xff]
  %v1345 = vld [vmem:[%s6 + $0x7d0] sm:$0xff]
  %v1346 = vld [vmem:[%s6 + $0x7d8] sm:$0xff]
  %v1347 = vld [vmem:[%s6 + $0x7e0] sm:$0xff]
  %v1348 = vld [vmem:[%s6 + $0x7e8] sm:$0xff]
  %v1349 = vld [vmem:[%s6 + $0x7f0] sm:$0xff]
  %v1350 = vld [vmem:[%s6 + $0x7f8] sm:$0xff]
  %v1351 = vld [vmem:[%s11] sm:$0x3]
  %v1353 = vlaneseq
  %v1354 = vshrl.u32 %v1353, 7
  %v1355 = vsub.s32 0, %v1354
  %v1356 = vrot.slane %v1351, %v1355
  %v1357 = vlaneseq
  %v1358 = vshrl.u32 %v1357, 7
  %v1359 = vsub.s32 1, %v1358
  %v1360 = vrot.slane %v1351, %v1359
  %1363 = vmatprep.subr.mxu0 %v1126
  %1364 = vmatpush1.msra.mxu0 %v1125
  %1365 = vmatprep.subr.mxu0 %v1124
  %1366 = vmatpush1.msra.mxu0 %v1123
  %1367 = vmatprep.subr.mxu0 %v1122
  %1368 = vmatpush1.msra.mxu0 %v1121
  %1369 = vmatprep.subr.mxu0 %v1120
  %1370 = vmatpush1.msra.mxu0 %v1119
  %1371 = vmatprep.subr.mxu0 %v1118
  %1372 = vmatpush1.msra.mxu0 %v1117
  %1373 = vmatprep.subr.mxu0 %v1116
  %1374 = vmatpush1.msra.mxu0 %v1115
  %1375 = vmatprep.subr.mxu0 %v1114
  %1376 = vmatpush1.msra.mxu0 %v1113
  %1377 = vmatprep.subr.mxu0 %v1112
  %1378 = vmatpush1.msra.mxu0 %v1111
  %1379 = vmatprep.subr.mxu0 %v1110
  %1380 = vmatpush1.msra.mxu0 %v1109
  %1381 = vmatprep.subr.mxu0 %v1108
  %1382 = vmatpush1.msra.mxu0 %v1107
  %1383 = vmatprep.subr.mxu0 %v1106
  %1384 = vmatpush1.msra.mxu0 %v1105
  %1385 = vmatprep.subr.mxu0 %v1104
  %1386 = vmatpush1.msra.mxu0 %v1103
  %1387 = vmatprep.subr.mxu0 %v1102
  %1388 = vmatpush1.msra.mxu0 %v1101
  %1389 = vmatprep.subr.mxu0 %v1100
  %1390 = vmatpush1.msra.mxu0 %v1099
  %1391 = vmatprep.subr.mxu0 %v1098
  %1392 = vmatpush1.msra.mxu0 %v1097
  %1393 = vmatprep.subr.mxu0 %v1096
  %1394 = vmatpush1.msra.mxu0 %v1095
  %1395 = vmatprep.subr.mxu0 %v1158
  %1396 = vmatpush2.msra.mxu0 %v1157
  %1397 = vmatprep.subr.mxu0 %v1156
  %1398 = vmatpush2.msra.mxu0 %v1155
  %1399 = vmatprep.subr.mxu0 %v1154
  %1400 = vmatpush2.msra.mxu0 %v1153
  %1401 = vmatprep.subr.mxu0 %v1152
  %1402 = vmatpush2.msra.mxu0 %v1151
  %1403 = vmatprep.subr.mxu0 %v1150
  %1404 = vmatpush2.msra.mxu0 %v1149
  %1405 = vmatprep.subr.mxu0 %v1148
  %1406 = vmatpush2.msra.mxu0 %v1147
  %1407 = vmatprep.subr.mxu0 %v1146
  %1408 = vmatpush2.msra.mxu0 %v1145
  %1409 = vmatprep.subr.mxu0 %v1144
  %1410 = vmatpush2.msra.mxu0 %v1143
  %1411 = vmatprep.subr.mxu0 %v1142
  %1412 = vmatpush2.msra.mxu0 %v1141
  %1413 = vmatprep.subr.mxu0 %v1140
  %1414 = vmatpush2.msra.mxu0 %v1139
  %1415 = vmatprep.subr.mxu0 %v1138
  %1416 = vmatpush2.msra.mxu0 %v1137
  %1417 = vmatprep.subr.mxu0 %v1136
  %1418 = vmatpush2.msra.mxu0 %v1135
  %1419 = vmatprep.subr.mxu0 %v1134
  %1420 = vmatpush2.msra.mxu0 %v1133
  %1421 = vmatprep.subr.mxu0 %v1132
  %1422 = vmatpush2.msra.mxu0 %v1131
  %1423 = vmatprep.subr.mxu0 %v1130
  %1424 = vmatpush2.msra.mxu0 %v1129
  %1425 = vmatprep.subr.mxu0 %v1128
  %1426 = vmatpush2.msra.mxu0 %v1127
  %1427 = vmatprep.mubr.f32.mxu0 %v1064
  %1428 = vmatmul.mubr.f32.gmra.mxu0 %v1063
  %v1429 = vpop.f32.mrf.mxu0
  %v1430 = vadd.f32 %v1356, %v1429
  %v1431 = vpop.f32.mrf.mxu0
  %v1432 = vadd.f32 %v1360, %v1431
  %1433 = vmatprep.mubr.f32.mxu0 %v1072
  %1434 = vmatmul.mubr.f32.gmra.mxu0 %v1071
  %v1435 = vpop.f32.mrf.mxu0
  %v1436 = vadd.f32 %v1356, %v1435
  %v1437 = vpop.f32.mrf.mxu0
  %v1438 = vadd.f32 %v1360, %v1437
  %1439 = vmatprep.mubr.f32.mxu0 %v1080
  %1440 = vmatmul.mubr.f32.gmra.mxu0 %v1079
  %v1441 = vpop.f32.mrf.mxu0
  %v1442 = vadd.f32 %v1356, %v1441
  %v1443 = vpop.f32.mrf.mxu0
  %v1444 = vadd.f32 %v1360, %v1443
  %1445 = vmatprep.mubr.f32.mxu0 %v1088
  %1446 = vmatmul.mubr.f32.gmra.mxu0 %v1087
  %v1447 = vpop.f32.mrf.mxu0
  %v1448 = vadd.f32 %v1356, %v1447
  %v1449 = vpop.f32.mrf.mxu0
  %v1450 = vadd.f32 %v1360, %v1449
  %1451 = vdwg.mxu0
  %1452 = vmatprep.subr.mxu0 %v1190
  %1453 = vmatpush1.msra.mxu0 %v1189
  %1454 = vmatprep.subr.mxu0 %v1188
  %1455 = vmatpush1.msra.mxu0 %v1187
  %1456 = vmatprep.subr.mxu0 %v1186
  %1457 = vmatpush1.msra.mxu0 %v1185
  %1458 = vmatprep.subr.mxu0 %v1184
  %1459 = vmatpush1.msra.mxu0 %v1183
  %1460 = vmatprep.subr.mxu0 %v1182
  %1461 = vmatpush1.msra.mxu0 %v1181
  %1462 = vmatprep.subr.mxu0 %v1180
  %1463 = vmatpush1.msra.mxu0 %v1179
  %1464 = vmatprep.subr.mxu0 %v1178
  %1465 = vmatpush1.msra.mxu0 %v1177
  %1466 = vmatprep.subr.mxu0 %v1176
  %1467 = vmatpush1.msra.mxu0 %v1175
  %1468 = vmatprep.subr.mxu0 %v1174
  %1469 = vmatpush1.msra.mxu0 %v1173
  %1470 = vmatprep.subr.mxu0 %v1172
  %1471 = vmatpush1.msra.mxu0 %v1171
  %1472 = vmatprep.subr.mxu0 %v1170
  %1473 = vmatpush1.msra.mxu0 %v1169
  %1474 = vmatprep.subr.mxu0 %v1168
  %1475 = vmatpush1.msra.mxu0 %v1167
  %1476 = vmatprep.subr.mxu0 %v1166
  %1477 = vmatpush1.msra.mxu0 %v1165
  %1478 = vmatprep.subr.mxu0 %v1164
  %1479 = vmatpush1.msra.mxu0 %v1163
  %1480 = vmatprep.subr.mxu0 %v1162
  %1481 = vmatpush1.msra.mxu0 %v1161
  %1482 = vmatprep.subr.mxu0 %v1160
  %1483 = vmatpush1.msra.mxu0 %v1159
  %1484 = vmatprep.subr.mxu0 %v1222
  %1485 = vmatpush2.msra.mxu0 %v1221
  %1486 = vmatprep.subr.mxu0 %v1220
  %1487 = vmatpush2.msra.mxu0 %v1219
  %1488 = vmatprep.subr.mxu0 %v1218
  %1489 = vmatpush2.msra.mxu0 %v1217
  %1490 = vmatprep.subr.mxu0 %v1216
  %1491 = vmatpush2.msra.mxu0 %v1215
  %1492 = vmatprep.subr.mxu0 %v1214
  %1493 = vmatpush2.msra.mxu0 %v1213
  %1494 = vmatprep.subr.mxu0 %v1212
  %1495 = vmatpush2.msra.mxu0 %v1211
  %1496 = vmatprep.subr.mxu0 %v1210
  %1497 = vmatpush2.msra.mxu0 %v1209
  %1498 = vmatprep.subr.mxu0 %v1208
  %1499 = vmatpush2.msra.mxu0 %v1207
  %1500 = vmatprep.subr.mxu0 %v1206
  %1501 = vmatpush2.msra.mxu0 %v1205
  %1502 = vmatprep.subr.mxu0 %v1204
  %1503 = vmatpush2.msra.mxu0 %v1203
  %1504 = vmatprep.subr.mxu0 %v1202
  %1505 = vmatpush2.msra.mxu0 %v1201
  %1506 = vmatprep.subr.mxu0 %v1200
  %1507 = vmatpush2.msra.mxu0 %v1199
  %1508 = vmatprep.subr.mxu0 %v1198
  %1509 = vmatpush2.msra.mxu0 %v1197
  %1510 = vmatprep.subr.mxu0 %v1196
  %1511 = vmatpush2.msra.mxu0 %v1195
  %1512 = vmatprep.subr.mxu0 %v1194
  %1513 = vmatpush2.msra.mxu0 %v1193
  %1514 = vmatprep.subr.mxu0 %v1192
  %1515 = vmatpush2.msra.mxu0 %v1191
  %1516 = vmatprep.mubr.f32.mxu0 %v1066
  %1517 = vmatmul.mubr.f32.gmra.mxu0 %v1065
  %v1518 = vpop.f32.mrf.mxu0
  %v1519 = vadd.f32 %v1430, %v1518
  %v1520 = vpop.f32.mrf.mxu0
  %v1521 = vadd.f32 %v1432, %v1520
  %1522 = vmatprep.mubr.f32.mxu0 %v1074
  %1523 = vmatmul.mubr.f32.gmra.mxu0 %v1073
  %v1524 = vpop.f32.mrf.mxu0
  %v1525 = vadd.f32 %v1436, %v1524
  %v1526 = vpop.f32.mrf.mxu0
  %v1527 = vadd.f32 %v1438, %v1526
  %1528 = vmatprep.mubr.f32.mxu0 %v1082
  %1529 = vmatmul.mubr.f32.gmra.mxu0 %v1081
  %v1530 = vpop.f32.mrf.mxu0
  %v1531 = vadd.f32 %v1442, %v1530
  %v1532 = vpop.f32.mrf.mxu0
  %v1533 = vadd.f32 %v1444, %v1532
  %1534 = vmatprep.mubr.f32.mxu0 %v1090
  %1535 = vmatmul.mubr.f32.gmra.mxu0 %v1089
  %v1536 = vpop.f32.mrf.mxu0
  %v1537 = vadd.f32 %v1448, %v1536
  %v1538 = vpop.f32.mrf.mxu0
  %v1539 = vadd.f32 %v1450, %v1538
  %1540 = vdwg.mxu0
  %1541 = vmatprep.subr.mxu0 %v1254
  %1542 = vmatpush1.msra.mxu0 %v1253
  %1543 = vmatprep.subr.mxu0 %v1252
  %1544 = vmatpush1.msra.mxu0 %v1251
  %1545 = vmatprep.subr.mxu0 %v1250
  %1546 = vmatpush1.msra.mxu0 %v1249
  %1547 = vmatprep.subr.mxu0 %v1248
  %1548 = vmatpush1.msra.mxu0 %v1247
  %1549 = vmatprep.subr.mxu0 %v1246
  %1550 = vmatpush1.msra.mxu0 %v1245
  %1551 = vmatprep.subr.mxu0 %v1244
  %1552 = vmatpush1.msra.mxu0 %v1243
  %1553 = vmatprep.subr.mxu0 %v1242
  %1554 = vmatpush1.msra.mxu0 %v1241
  %1555 = vmatprep.subr.mxu0 %v1240
  %1556 = vmatpush1.msra.mxu0 %v1239
  %1557 = vmatprep.subr.mxu0 %v1238
  %1558 = vmatpush1.msra.mxu0 %v1237
  %1559 = vmatprep.subr.mxu0 %v1236
  %1560 = vmatpush1.msra.mxu0 %v1235
  %1561 = vmatprep.subr.mxu0 %v1234
  %1562 = vmatpush1.msra.mxu0 %v1233
  %1563 = vmatprep.subr.mxu0 %v1232
  %1564 = vmatpush1.msra.mxu0 %v1231
  %1565 = vmatprep.subr.mxu0 %v1230
  %1566 = vmatpush1.msra.mxu0 %v1229
  %1567 = vmatprep.subr.mxu0 %v1228
  %1568 = vmatpush1.msra.mxu0 %v1227
  %1569 = vmatprep.subr.mxu0 %v1226
  %1570 = vmatpush1.msra.mxu0 %v1225
  %1571 = vmatprep.subr.mxu0 %v1224
  %1572 = vmatpush1.msra.mxu0 %v1223
  %1573 = vmatprep.subr.mxu0 %v1286
  %1574 = vmatpush2.msra.mxu0 %v1285
  %1575 = vmatprep.subr.mxu0 %v1284
  %1576 = vmatpush2.msra.mxu0 %v1283
  %1577 = vmatprep.subr.mxu0 %v1282
  %1578 = vmatpush2.msra.mxu0 %v1281
  %1579 = vmatprep.subr.mxu0 %v1280
  %1580 = vmatpush2.msra.mxu0 %v1279
  %1581 = vmatprep.subr.mxu0 %v1278
  %1582 = vmatpush2.msra.mxu0 %v1277
  %1583 = vmatprep.subr.mxu0 %v1276
  %1584 = vmatpush2.msra.mxu0 %v1275
  %1585 = vmatprep.subr.mxu0 %v1274
  %1586 = vmatpush2.msra.mxu0 %v1273
  %1587 = vmatprep.subr.mxu0 %v1272
  %1588 = vmatpush2.msra.mxu0 %v1271
  %1589 = vmatprep.subr.mxu0 %v1270
  %1590 = vmatpush2.msra.mxu0 %v1269
  %1591 = vmatprep.subr.mxu0 %v1268
  %1592 = vmatpush2.msra.mxu0 %v1267
  %1593 = vmatprep.subr.mxu0 %v1266
  %1594 = vmatpush2.msra.mxu0 %v1265
  %1595 = vmatprep.subr.mxu0 %v1264
  %1596 = vmatpush2.msra.mxu0 %v1263
  %1597 = vmatprep.subr.mxu0 %v1262
  %1598 = vmatpush2.msra.mxu0 %v1261
  %1599 = vmatprep.subr.mxu0 %v1260
  %1600 = vmatpush2.msra.mxu0 %v1259
  %1601 = vmatprep.subr.mxu0 %v1258
  %1602 = vmatpush2.msra.mxu0 %v1257
  %1603 = vmatprep.subr.mxu0 %v1256
  %1604 = vmatpush2.msra.mxu0 %v1255
  %1605 = vmatprep.mubr.f32.mxu0 %v1068
  %1606 = vmatmul.mubr.f32.gmra.mxu0 %v1067
  %v1607 = vpop.f32.mrf.mxu0
  %v1608 = vadd.f32 %v1519, %v1607
  %v1609 = vpop.f32.mrf.mxu0
  %v1610 = vadd.f32 %v1521, %v1609
  %1611 = vmatprep.mubr.f32.mxu0 %v1076
  %1612 = vmatmul.mubr.f32.gmra.mxu0 %v1075
  %v1613 = vpop.f32.mrf.mxu0
  %v1614 = vadd.f32 %v1525, %v1613
  %v1615 = vpop.f32.mrf.mxu0
  %v1616 = vadd.f32 %v1527, %v1615
  %1617 = vmatprep.mubr.f32.mxu0 %v1084
  %1618 = vmatmul.mubr.f32.gmra.mxu0 %v1083
  %v1619 = vpop.f32.mrf.mxu0
  %v1620 = vadd.f32 %v1531, %v1619
  %v1621 = vpop.f32.mrf.mxu0
  %v1622 = vadd.f32 %v1533, %v1621
  %1623 = vmatprep.mubr.f32.mxu0 %v1092
  %1624 = vmatmul.mubr.f32.gmra.mxu0 %v1091
  %v1625 = vpop.f32.mrf.mxu0
  %v1626 = vadd.f32 %v1537, %v1625
  %v1627 = vpop.f32.mrf.mxu0
  %v1628 = vadd.f32 %v1539, %v1627
  %1629 = vdwg.mxu0
  %1630 = vmatprep.subr.mxu0 %v1318
  %1631 = vmatpush1.msra.mxu0 %v1317
  %1632 = vmatprep.subr.mxu0 %v1316
  %1633 = vmatpush1.msra.mxu0 %v1315
  %1634 = vmatprep.subr.mxu0 %v1314
  %1635 = vmatpush1.msra.mxu0 %v1313
  %1636 = vmatprep.subr.mxu0 %v1312
  %1637 = vmatpush1.msra.mxu0 %v1311
  %1638 = vmatprep.subr.mxu0 %v1310
  %1639 = vmatpush1.msra.mxu0 %v1309
  %1640 = vmatprep.subr.mxu0 %v1308
  %1641 = vmatpush1.msra.mxu0 %v1307
  %1642 = vmatprep.subr.mxu0 %v1306
  %1643 = vmatpush1.msra.mxu0 %v1305
  %1644 = vmatprep.subr.mxu0 %v1304
  %1645 = vmatpush1.msra.mxu0 %v1303
  %1646 = vmatprep.subr.mxu0 %v1302
  %1647 = vmatpush1.msra.mxu0 %v1301
  %1648 = vmatprep.subr.mxu0 %v1300
  %1649 = vmatpush1.msra.mxu0 %v1299
  %1650 = vmatprep.subr.mxu0 %v1298
  %1651 = vmatpush1.msra.mxu0 %v1297
  %1652 = vmatprep.subr.mxu0 %v1296
  %1653 = vmatpush1.msra.mxu0 %v1295
  %1654 = vmatprep.subr.mxu0 %v1294
  %1655 = vmatpush1.msra.mxu0 %v1293
  %1656 = vmatprep.subr.mxu0 %v1292
  %1657 = vmatpush1.msra.mxu0 %v1291
  %1658 = vmatprep.subr.mxu0 %v1290
  %1659 = vmatpush1.msra.mxu0 %v1289
  %1660 = vmatprep.subr.mxu0 %v1288
  %1661 = vmatpush1.msra.mxu0 %v1287
  %1662 = vmatprep.subr.mxu0 %v1350
  %1663 = vmatpush2.msra.mxu0 %v1349
  %1664 = vmatprep.subr.mxu0 %v1348
  %1665 = vmatpush2.msra.mxu0 %v1347
  %1666 = vmatprep.subr.mxu0 %v1346
  %1667 = vmatpush2.msra.mxu0 %v1345
  %1668 = vmatprep.subr.mxu0 %v1344
  %1669 = vmatpush2.msra.mxu0 %v1343
  %1670 = vmatprep.subr.mxu0 %v1342
  %1671 = vmatpush2.msra.mxu0 %v1341
  %1672 = vmatprep.subr.mxu0 %v1340
  %1673 = vmatpush2.msra.mxu0 %v1339
  %1674 = vmatprep.subr.mxu0 %v1338
  %1675 = vmatpush2.msra.mxu0 %v1337
  %1676 = vmatprep.subr.mxu0 %v1336
  %1677 = vmatpush2.msra.mxu0 %v1335
  %1678 = vmatprep.subr.mxu0 %v1334
  %1679 = vmatpush2.msra.mxu0 %v1333
  %1680 = vmatprep.subr.mxu0 %v1332
  %1681 = vmatpush2.msra.mxu0 %v1331
  %1682 = vmatprep.subr.mxu0 %v1330
  %1683 = vmatpush2.msra.mxu0 %v1329
  %1684 = vmatprep.subr.mxu0 %v1328
  %1685 = vmatpush2.msra.mxu0 %v1327
  %1686 = vmatprep.subr.mxu0 %v1326
  %1687 = vmatpush2.msra.mxu0 %v1325
  %1688 = vmatprep.subr.mxu0 %v1324
  %1689 = vmatpush2.msra.mxu0 %v1323
  %1690 = vmatprep.subr.mxu0 %v1322
  %1691 = vmatpush2.msra.mxu0 %v1321
  %1692 = vmatprep.subr.mxu0 %v1320
  %1693 = vmatpush2.msra.mxu0 %v1319
  %1694 = vmatprep.mubr.f32.mxu0 %v1070
  %1695 = vmatmul.mubr.f32.gmra.mxu0 %v1069
  %v1696 = vpop.f32.mrf.mxu0
  %v1697 = vadd.f32 %v1608, %v1696
  %v1698 = vpop.f32.mrf.mxu0
  %v1699 = vadd.f32 %v1610, %v1698
  %1700 = vmatprep.mubr.f32.mxu0 %v1078
  %1701 = vmatmul.mubr.f32.gmra.mxu0 %v1077
  %v1702 = vpop.f32.mrf.mxu0
  %v1703 = vadd.f32 %v1614, %v1702
  %v1704 = vpop.f32.mrf.mxu0
  %v1705 = vadd.f32 %v1616, %v1704
  %1706 = vmatprep.mubr.f32.mxu0 %v1086
  %1707 = vmatmul.mubr.f32.gmra.mxu0 %v1085
  %v1708 = vpop.f32.mrf.mxu0
  %v1709 = vadd.f32 %v1620, %v1708
  %v1710 = vpop.f32.mrf.mxu0
  %v1711 = vadd.f32 %v1622, %v1710
  %1712 = vmatprep.mubr.f32.mxu0 %v1094
  %1713 = vmatmul.mubr.f32.gmra.mxu0 %v1093
  %v1714 = vpop.f32.mrf.mxu0
  %v1715 = vadd.f32 %v1626, %v1714
  %v1716 = vpop.f32.mrf.mxu0
  %v1717 = vadd.f32 %v1628, %v1716
  %1718 = vdwg.mxu0
  %v1719 = vmax.f32 %v1697, 0.0
  %v1720 = vmax.f32 %v1699, 0.0
  %v1721 = vmax.f32 %v1703, 0.0
  %v1722 = vmax.f32 %v1705, 0.0
  %v1723 = vmax.f32 %v1709, 0.0
  %v1724 = vmax.f32 %v1711, 0.0
  %v1725 = vmax.f32 %v1715, 0.0
  %v1726 = vmax.f32 %v1717, 0.0
  %v1727 = vand.u32 2147483647, %v1697
  %v1728 = vand.u32 2147483647, %v1699
  %v1729 = vand.u32 2147483647, %v1703
  %v1730 = vand.u32 2147483647, %v1705
  %v1731 = vand.u32 2147483647, %v1709
  %v1732 = vand.u32 2147483647, %v1711
  %v1733 = vand.u32 2147483647, %v1715
  %v1734 = vand.u32 2147483647, %v1717
  %v1735 = vsub.f32 0.0, %v1727
  %v1736 = vsub.f32 0.0, %v1728
  %v1737 = vsub.f32 0.0, %v1729
  %v1738 = vsub.f32 0.0, %v1730
  %v1739 = vsub.f32 0.0, %v1731
  %v1740 = vsub.f32 0.0, %v1732
  %v1741 = vsub.f32 0.0, %v1733
  %v1742 = vsub.f32 0.0, %v1734
  %v1743 = vmul.f32 %v1735, 1.442695
  %v1744 = vpow.pop %v1743
  %v1745 = vmul.f32 %v1736, 1.442695
  %v1746 = vpow.pop %v1745
  %v1747 = vmul.f32 %v1737, 1.442695
  %v1748 = vpow.pop %v1747
  %v1749 = vmul.f32 %v1738, 1.442695
  %v1750 = vpow.pop %v1749
  %v1751 = vmul.f32 %v1739, 1.442695
  %v1752 = vpow.pop %v1751
  %v1753 = vmul.f32 %v1740, 1.442695
  %v1754 = vpow.pop %v1753
  %v1755 = vmul.f32 %v1741, 1.442695
  %v1756 = vpow.pop %v1755
  %v1757 = vmul.f32 %v1742, 1.442695
  %v1758 = vpow.pop %v1757
  %v1759 = vadd.f32 %v1744, 1.0
  %v1760 = vlog2.pop %v1759
  %v1761 = vmul.f32 %v1760, 0.6931472
  %v1762 = vmul.f32 -0.5, %v1744
  %v1763 = vadd.f32 %v1762, 1.0
  %v1764 = vmul.f32 %v1763, %v1744
  %v1765 = vand.u32 2147483647, %v1744
  %vm1766 = vcmp.lt.f32.partialorder %v1765, 0.0004427343
  %v1767 = vsel %vm1766, %v1764, %v1761
  %v1768 = vadd.f32 %v1746, 1.0
  %v1769 = vlog2.pop %v1768
  %v1770 = vmul.f32 %v1769, 0.6931472
  %v1771 = vmul.f32 -0.5, %v1746
  %v1772 = vadd.f32 %v1771, 1.0
  %v1773 = vmul.f32 %v1772, %v1746
  %v1774 = vand.u32 2147483647, %v1746
  %vm1775 = vcmp.lt.f32.partialorder %v1774, 0.0004427343
  %v1776 = vsel %vm1775, %v1773, %v1770
  %v1777 = vadd.f32 %v1748, 1.0
  %v1778 = vlog2.pop %v1777
  %v1779 = vmul.f32 %v1778, 0.6931472
  %v1780 = vmul.f32 -0.5, %v1748
  %v1781 = vadd.f32 %v1780, 1.0
  %v1782 = vmul.f32 %v1781, %v1748
  %v1783 = vand.u32 2147483647, %v1748
  %vm1784 = vcmp.lt.f32.partialorder %v1783, 0.0004427343
  %v1785 = vsel %vm1784, %v1782, %v1779
  %v1786 = vadd.f32 %v1750, 1.0
  %v1787 = vlog2.pop %v1786
  %v1788 = vmul.f32 %v1787, 0.6931472
  %v1789 = vmul.f32 -0.5, %v1750
  %v1790 = vadd.f32 %v1789, 1.0
  %v1791 = vmul.f32 %v1790, %v1750
  %v1792 = vand.u32 2147483647, %v1750
  %vm1793 = vcmp.lt.f32.partialorder %v1792, 0.0004427343
  %v1794 = vsel %vm1793, %v1791, %v1788
  %v1795 = vadd.f32 %v1752, 1.0
  %v1796 = vlog2.pop %v1795
  %v1797 = vmul.f32 %v1796, 0.6931472
  %v1798 = vmul.f32 -0.5, %v1752
  %v1799 = vadd.f32 %v1798, 1.0
  %v1800 = vmul.f32 %v1799, %v1752
  %v1801 = vand.u32 2147483647, %v1752
  %vm1802 = vcmp.lt.f32.partialorder %v1801, 0.0004427343
  %v1803 = vsel %vm1802, %v1800, %v1797
  %v1804 = vadd.f32 %v1754, 1.0
  %v1805 = vlog2.pop %v1804
  %v1806 = vmul.f32 %v1805, 0.6931472
  %v1807 = vmul.f32 -0.5, %v1754
  %v1808 = vadd.f32 %v1807, 1.0
  %v1809 = vmul.f32 %v1808, %v1754
  %v1810 = vand.u32 2147483647, %v1754
  %vm1811 = vcmp.lt.f32.partialorder %v1810, 0.0004427343
  %v1812 = vsel %vm1811, %v1809, %v1806
  %v1813 = vadd.f32 %v1756, 1.0
  %v1814 = vlog2.pop %v1813
  %v1815 = vmul.f32 %v1814, 0.6931472
  %v1816 = vmul.f32 -0.5, %v1756
  %v1817 = vadd.f32 %v1816, 1.0
  %v1818 = vmul.f32 %v1817, %v1756
  %v1819 = vand.u32 2147483647, %v1756
  %vm1820 = vcmp.lt.f32.partialorder %v1819, 0.0004427343
  %v1821 = vsel %vm1820, %v1818, %v1815
  %v1822 = vadd.f32 %v1758, 1.0
  %v1823 = vlog2.pop %v1822
  %v1824 = vmul.f32 %v1823, 0.6931472
  %v1825 = vmul.f32 -0.5, %v1758
  %v1826 = vadd.f32 %v1825, 1.0
  %v1827 = vmul.f32 %v1826, %v1758
  %v1828 = vand.u32 2147483647, %v1758
  %vm1829 = vcmp.lt.f32.partialorder %v1828, 0.0004427343
  %v1830 = vsel %vm1829, %v1827, %v1824
  %v1831 = vadd.f32 %v1719, %v1767
  %v1832 = vadd.f32 %v1720, %v1776
  %v1833 = vadd.f32 %v1721, %v1785
  %v1834 = vadd.f32 %v1722, %v1794
  %v1835 = vadd.f32 %v1723, %v1803
  %v1836 = vadd.f32 %v1724, %v1812
  %v1837 = vadd.f32 %v1725, %v1821
  %v1838 = vadd.f32 %v1726, %v1830
  %v1839 = vadd.f32 %v1831, %v1832
  %1840 = vadd.xlane.f32.xlu0 %v1839
  %v1841 = vpop.xlane.xlu0 %1840
  %v1842 = vadd.f32 %v1833, %v1834
  %1843 = vadd.xlane.f32.xlu0 %v1842
  %v1844 = vpop.xlane.xlu0 %1843
  %v1845 = vadd.f32 %v1835, %v1836
  %1846 = vadd.xlane.f32.xlu0 %v1845
  %v1847 = vpop.xlane.xlu0 %1846
  %v1848 = vadd.f32 %v1837, %v1838
  %1849 = vadd.xlane.f32.xlu0 %v1848
  %v1850 = vpop.xlane.xlu0 %1849
  %v1851 = vld [vmem:[%s1] sm:$0xff]
  %v1852 = vld [vmem:[%s1 + $0x8] sm:$0xff]
  %v1853 = vld [vmem:[%s1 + $0x10] sm:$0xff]
  %v1854 = vld [vmem:[%s1 + $0x18] sm:$0xff]
  %v1855 = vld [vmem:[%s1 + $0x20] sm:$0xff]
  %v1856 = vld [vmem:[%s1 + $0x28] sm:$0xff]
  %v1857 = vld [vmem:[%s1 + $0x30] sm:$0xff]
  %v1858 = vld [vmem:[%s1 + $0x38] sm:$0xff]
  %v1859 = vld [vmem:[%s1 + $0x40] sm:$0xff]
  %v1860 = vld [vmem:[%s1 + $0x48] sm:$0xff]
  %v1861 = vld [vmem:[%s1 + $0x50] sm:$0xff]
  %v1862 = vld [vmem:[%s1 + $0x58] sm:$0xff]
  %v1863 = vld [vmem:[%s1 + $0x60] sm:$0xff]
  %v1864 = vld [vmem:[%s1 + $0x68] sm:$0xff]
  %v1865 = vld [vmem:[%s1 + $0x70] sm:$0xff]
  %v1866 = vld [vmem:[%s1 + $0x78] sm:$0xff]
  %v1867 = vld [vmem:[%s1 + $0x80] sm:$0xff]
  %v1868 = vld [vmem:[%s1 + $0x88] sm:$0xff]
  %v1869 = vld [vmem:[%s1 + $0x90] sm:$0xff]
  %v1870 = vld [vmem:[%s1 + $0x98] sm:$0xff]
  %v1871 = vld [vmem:[%s1 + $0xa0] sm:$0xff]
  %v1872 = vld [vmem:[%s1 + $0xa8] sm:$0xff]
  %v1873 = vld [vmem:[%s1 + $0xb0] sm:$0xff]
  %v1874 = vld [vmem:[%s1 + $0xb8] sm:$0xff]
  %v1875 = vld [vmem:[%s1 + $0xc0] sm:$0xff]
  %v1876 = vld [vmem:[%s1 + $0xc8] sm:$0xff]
  %v1877 = vld [vmem:[%s1 + $0xd0] sm:$0xff]
  %v1878 = vld [vmem:[%s1 + $0xd8] sm:$0xff]
  %v1879 = vld [vmem:[%s1 + $0xe0] sm:$0xff]
  %v1880 = vld [vmem:[%s1 + $0xe8] sm:$0xff]
  %v1881 = vld [vmem:[%s1 + $0xf0] sm:$0xff]
  %v1882 = vld [vmem:[%s1 + $0xf8] sm:$0xff]
  %1883 = vmatprep.subr.mxu0 0.0
  %1884 = vmatpush1.msra.mxu0 %v1866
  %1885 = vmatprep.subr.mxu0 0.0
  %1886 = vmatpush1.msra.mxu0 %v1865
  %1887 = vmatprep.subr.mxu0 0.0
  %1888 = vmatpush1.msra.mxu0 %v1864
  %1889 = vmatprep.subr.mxu0 0.0
  %1890 = vmatpush1.msra.mxu0 %v1863
  %1891 = vmatprep.subr.mxu0 0.0
  %1892 = vmatpush1.msra.mxu0 %v1862
  %1893 = vmatprep.subr.mxu0 0.0
  %1894 = vmatpush1.msra.mxu0 %v1861
  %1895 = vmatprep.subr.mxu0 0.0
  %1896 = vmatpush1.msra.mxu0 %v1860
  %1897 = vmatprep.subr.mxu0 0.0
  %1898 = vmatpush1.msra.mxu0 %v1859
  %1899 = vmatprep.subr.mxu0 0.0
  %1900 = vmatpush1.msra.mxu0 %v1858
  %1901 = vmatprep.subr.mxu0 0.0
  %1902 = vmatpush1.msra.mxu0 %v1857
  %1903 = vmatprep.subr.mxu0 0.0
  %1904 = vmatpush1.msra.mxu0 %v1856
  %1905 = vmatprep.subr.mxu0 0.0
  %1906 = vmatpush1.msra.mxu0 %v1855
  %1907 = vmatprep.subr.mxu0 0.0
  %1908 = vmatpush1.msra.mxu0 %v1854
  %1909 = vmatprep.subr.mxu0 0.0
  %1910 = vmatpush1.msra.mxu0 %v1853
  %1911 = vmatprep.subr.mxu0 0.0
  %1912 = vmatpush1.msra.mxu0 %v1852
  %1913 = vmatprep.subr.mxu0 0.0
  %1914 = vmatpush1.msra.mxu0 %v1851
  %1915 = vmatprep.subr.mxu0 0.0
  %1916 = vmatpush2.msra.mxu0 %v1882
  %1917 = vmatprep.subr.mxu0 0.0
  %1918 = vmatpush2.msra.mxu0 %v1881
  %1919 = vmatprep.subr.mxu0 0.0
  %1920 = vmatpush2.msra.mxu0 %v1880
  %1921 = vmatprep.subr.mxu0 0.0
  %1922 = vmatpush2.msra.mxu0 %v1879
  %1923 = vmatprep.subr.mxu0 0.0
  %1924 = vmatpush2.msra.mxu0 %v1878
  %1925 = vmatprep.subr.mxu0 0.0
  %1926 = vmatpush2.msra.mxu0 %v1877
  %1927 = vmatprep.subr.mxu0 0.0
  %1928 = vmatpush2.msra.mxu0 %v1876
  %1929 = vmatprep.subr.mxu0 0.0
  %1930 = vmatpush2.msra.mxu0 %v1875
  %1931 = vmatprep.subr.mxu0 0.0
  %1932 = vmatpush2.msra.mxu0 %v1874
  %1933 = vmatprep.subr.mxu0 0.0
  %1934 = vmatpush2.msra.mxu0 %v1873
  %1935 = vmatprep.subr.mxu0 0.0
  %1936 = vmatpush2.msra.mxu0 %v1872
  %1937 = vmatprep.subr.mxu0 0.0
  %1938 = vmatpush2.msra.mxu0 %v1871
  %1939 = vmatprep.subr.mxu0 0.0
  %1940 = vmatpush2.msra.mxu0 %v1870
  %1941 = vmatprep.subr.mxu0 0.0
  %1942 = vmatpush2.msra.mxu0 %v1869
  %1943 = vmatprep.subr.mxu0 0.0
  %1944 = vmatpush2.msra.mxu0 %v1868
  %1945 = vmatprep.subr.mxu0 0.0
  %1946 = vmatpush2.msra.mxu0 %v1867
  %1947 = vmatprep.mubr.f32.mxu0 %v1699
  %1948 = vmatmul.mubr.f32.gmra.mxu0 %v1697
  %v1949 = vpop.f32.mrf.mxu0
  %v1950 = vadd.f32 0.0, %v1949
  %v1951 = vpop.f32.mrf.mxu0
  %1952 = vmatprep.mubr.f32.mxu0 %v1705
  %1953 = vmatmul.mubr.f32.gmra.mxu0 %v1703
  %v1954 = vpop.f32.mrf.mxu0
  %v1955 = vadd.f32 0.0, %v1954
  %v1956 = vpop.f32.mrf.mxu0
  %1957 = vmatprep.mubr.f32.mxu0 %v1711
  %1958 = vmatmul.mubr.f32.gmra.mxu0 %v1709
  %v1959 = vpop.f32.mrf.mxu0
  %v1960 = vadd.f32 0.0, %v1959
  %v1961 = vpop.f32.mrf.mxu0
  %1962 = vmatprep.mubr.f32.mxu0 %v1717
  %1963 = vmatmul.mubr.f32.gmra.mxu0 %v1715
  %v1964 = vpop.f32.mrf.mxu0
  %v1965 = vadd.f32 0.0, %v1964
  %v1966 = vpop.f32.mrf.mxu0
  %1967 = vdwg.mxu0
  %v1968 = vsub.f32 %v1841, %v1950
  %v1969 = vsub.f32 %v1844, %v1955
  %v1970 = vsub.f32 %v1847, %v1960
  %v1971 = vsub.f32 %v1850, %v1965
  %1972 = vst.msk [vmem:[%s12] sm:$0xff] %vm166, %v1968
  %1973 = vst.msk [vmem:[%s12 + $0x8] sm:$0xff] %vm166, %v1969
  %1974 = vst.msk [vmem:[%s12 + $0x10] sm:$0xff] %vm166, %v1970
  %1975 = vst.msk [vmem:[%s12 + $0x18] sm:$0xff] %vm166, %v1971
  // Predicated region
  $region50: #{coop_comm_forward.2} parent=0 // pred_check
    _
  $region51: #{coop_comm_forward.2} parent=0 // pred_check_branch
    %1977 = sbr.rel (0) target = $region53
  $region52: #{coop_comm_forward.2} parent=0 // pred_region
    _
  $region53: #{coop_comm_forward.2} parent=0 // pred_fallthru
    _
  // Predicated region
  $region54: #{coop_comm_forward.2} parent=0 // pred_check
    _
  $region55: #{coop_comm_forward.2} parent=0 // pred_check_branch
    %1979 = sbr.rel (0) target = $region57
  $region56: #{coop_comm_forward.2} parent=0 // pred_region
    _
  $region57: #{coop_comm_forward.2} parent=0 // pred_fallthru
    _

// kernel: custom-call
$region0: #{custom-call}
  %s0 = inlined_call_operand.vmem [shape: f32[32], index: 0, kind: output, shape index: {}]

// kernel: coop_comm_forward.3
$region0: #{coop_comm_forward.3}
  #allocation0 [shape = 'u32[]', space=smem, size = 0x4, offset = 0x4, fixed_abs, tag = 'smem constant byte address 0x4 - core index']
  #allocation1 [shape = 'u32[144,128]{1,0:T(1,128)}', space=vmem, size = 0x12000, scoped, tag = 'internal scratch']
  %s0 = inlined_call_operand.vmem [shape: f32[4,8], index: 0, kind: input, shape index: {}]
  %s1 = inlined_call_operand.vmem [shape: f32[4,256], index: 1, kind: input, shape index: {}]
  %s2 = inlined_call_operand.vmem [shape: f32[8,32], index: 2, kind: input, shape index: {}]
  %s3 = inlined_call_operand.vmem [shape: f32[32,128], index: 3, kind: input, shape index: {}]
  %s4 = inlined_call_operand.vmem [shape: f32[128,256], index: 4, kind: input, shape index: {}]
  %s5 = inlined_call_operand.vmem [shape: f32[256,1024], index: 5, kind: input, shape index: {}]
  %s6 = inlined_call_operand.vmem [shape: f32[1024,256], index: 6, kind: input, shape index: {}]
  %s7 = inlined_call_operand.vmem [shape: f32[1,32], index: 7, kind: input, shape index: {}]
  %s8 = inlined_call_operand.vmem [shape: f32[1,128], index: 8, kind: input, shape index: {}]
  %s9 = inlined_call_operand.vmem [shape: f32[1,256], index: 9, kind: input, shape index: {}]
  %s10 = inlined_call_operand.vmem [shape: f32[1,1024], index: 10, kind: input, shape index: {}]
  %s11 = inlined_call_operand.vmem [shape: f32[1,256], index: 11, kind: input, shape index: {}]
  %s12 = inlined_call_operand.vmem [shape: f32[4,1], index: 12, kind: output, shape index: {}]
  %s13 = sld [smem:[#allocation0]]
  $region58: #{coop_comm_forward.3} parent=0
    _
  %s15 = ssub.s32 1, %s13
  %s16 = scalar_select 0, %s15, %s13
  // Predicated region
  $region2: #{coop_comm_forward.3} parent=0 // pred_check
    _
  $region3: #{coop_comm_forward.3} parent=0 // pred_check_branch
    %18 = sbr.rel (0) target = $region5
  $region4: #{coop_comm_forward.3} parent=0 // pred_region
    _
  $region5: #{coop_comm_forward.3} parent=0 // pred_fallthru
    _
  // Predicated region
  $region6: #{coop_comm_forward.3} parent=0 // pred_check
    _
  $region7: #{coop_comm_forward.3} parent=0 // pred_check_branch
    %20 = sbr.rel (0) target = $region9
  $region8: #{coop_comm_forward.3} parent=0 // pred_region
    _
  $region9: #{coop_comm_forward.3} parent=0 // pred_fallthru
    _
  // Predicated region
  $region10: #{coop_comm_forward.3} parent=0 // pred_check
    _
  $region11: #{coop_comm_forward.3} parent=0 // pred_check_branch
    %22 = sbr.rel (0) target = $region13
  $region12: #{coop_comm_forward.3} parent=0 // pred_region
    _
  $region13: #{coop_comm_forward.3} parent=0 // pred_fallthru
    _
  // Predicated region
  $region14: #{coop_comm_forward.3} parent=0 // pred_check
    _
  $region15: #{coop_comm_forward.3} parent=0 // pred_check_branch
    %24 = sbr.rel (0) target = $region17
  $region16: #{coop_comm_forward.3} parent=0 // pred_region
    _
  $region17: #{coop_comm_forward.3} parent=0 // pred_fallthru
    _
  // Predicated region
  $region18: #{coop_comm_forward.3} parent=0 // pred_check
    _
  $region19: #{coop_comm_forward.3} parent=0 // pred_check_branch
    %26 = sbr.rel (0) target = $region21
  $region20: #{coop_comm_forward.3} parent=0 // pred_region
    _
  $region21: #{coop_comm_forward.3} parent=0 // pred_fallthru
    _
  // Predicated region
  $region22: #{coop_comm_forward.3} parent=0 // pred_check
    _
  $region23: #{coop_comm_forward.3} parent=0 // pred_check_branch
    %28 = sbr.rel (0) target = $region25
  $region24: #{coop_comm_forward.3} parent=0 // pred_region
    _
  $region25: #{coop_comm_forward.3} parent=0 // pred_fallthru
    _
  // Predicated region
  $region26: #{coop_comm_forward.3} parent=0 // pred_check
    _
  $region27: #{coop_comm_forward.3} parent=0 // pred_check_branch
    %30 = sbr.rel (0) target = $region29
  $region28: #{coop_comm_forward.3} parent=0 // pred_region
    _
  $region29: #{coop_comm_forward.3} parent=0 // pred_fallthru
    _
  // Predicated region
  $region30: #{coop_comm_forward.3} parent=0 // pred_check
    _
  $region31: #{coop_comm_forward.3} parent=0 // pred_check_branch
    %32 = sbr.rel (0) target = $region33
  $region32: #{coop_comm_forward.3} parent=0 // pred_region
    _
  $region33: #{coop_comm_forward.3} parent=0 // pred_fallthru
    _
  // Predicated region
  $region34: #{coop_comm_forward.3} parent=0 // pred_check
    _
  $region35: #{coop_comm_forward.3} parent=0 // pred_check_branch
    %34 = sbr.rel (0) target = $region37
  $region36: #{coop_comm_forward.3} parent=0 // pred_region
    _
  $region37: #{coop_comm_forward.3} parent=0 // pred_fallthru
    _
  // Predicated region
  $region38: #{coop_comm_forward.3} parent=0 // pred_check
    _
  $region39: #{coop_comm_forward.3} parent=0 // pred_check_branch
    %36 = sbr.rel (0) target = $region41
  $region40: #{coop_comm_forward.3} parent=0 // pred_region
    _
  $region41: #{coop_comm_forward.3} parent=0 // pred_fallthru
    _
  // Predicated region
  $region42: #{coop_comm_forward.3} parent=0 // pred_check
    _
  $region43: #{coop_comm_forward.3} parent=0 // pred_check_branch
    %38 = sbr.rel (0) target = $region45
  $region44: #{coop_comm_forward.3} parent=0 // pred_region
    _
  $region45: #{coop_comm_forward.3} parent=0 // pred_fallthru
    _
  // Predicated region
  $region46: #{coop_comm_forward.3} parent=0 // pred_check
    _
  $region47: #{coop_comm_forward.3} parent=0 // pred_check_branch
    %40 = sbr.rel (0) target = $region49
  $region48: #{coop_comm_forward.3} parent=0 // pred_region
    _
  $region49: #{coop_comm_forward.3} parent=0 // pred_fallthru
    _
  %v41 = vld [vmem:[%s0] sm:$0xf]
  %v42 = vld [vmem:[%s2] sm:$0xff]
  %v43 = vld [vmem:[%s7] sm:$0x1]
  %v45 = vlaneseq
  %v46 = vshrl.u32 %v45, 7
  %v47 = vsub.s32 0, %v46
  %v48 = vrot.slane %v43, %v47
  %vm50 = vcmask 64512
  %v52 = vsel %vm50, %v41, 0
  %54 = vmatprep.subr.mxu0 0.0
  %55 = vmatpush1.msra.mxu0 0.0
  %56 = vmatprep.subr.mxu0 0.0
  %57 = vmatpush1.msra.mxu0 0.0
  %58 = vmatprep.subr.mxu0 0.0
  %59 = vmatpush1.msra.mxu0 0.0
  %60 = vmatprep.subr.mxu0 0.0
  %61 = vmatpush1.msra.mxu0 0.0
  %62 = vmatprep.subr.mxu0 0.0
  %63 = vmatpush1.msra.mxu0 0.0
  %64 = vmatprep.subr.mxu0 0.0
  %65 = vmatpush1.msra.mxu0 0.0
  %66 = vmatprep.subr.mxu0 0.0
  %67 = vmatpush1.msra.mxu0 0.0
  %68 = vmatprep.subr.mxu0 0.0
  %69 = vmatpush1.msra.mxu0 0.0
  %70 = vmatprep.subr.mxu0 0.0
  %71 = vmatpush1.msra.mxu0 0.0
  %72 = vmatprep.subr.mxu0 0.0
  %73 = vmatpush1.msra.mxu0 0.0
  %74 = vmatprep.subr.mxu0 0.0
  %75 = vmatpush1.msra.mxu0 0.0
  %76 = vmatprep.subr.mxu0 0.0
  %77 = vmatpush1.msra.mxu0 0.0
  %78 = vmatprep.subr.mxu0 0.0
  %79 = vmatpush1.msra.mxu0 0.0
  %80 = vmatprep.subr.mxu0 0.0
  %81 = vmatpush1.msra.mxu0 0.0
  %82 = vmatprep.subr.mxu0 0.0
  %83 = vmatpush1.msra.mxu0 0.0
  %84 = vmatprep.subr.mxu0 0.0
  %85 = vmatpush1.msra.mxu0 %v42
  %86 = vmatprep.subr.mxu0 0.0
  %87 = vmatpush2.msra.mxu0 0.0
  %88 = vmatprep.subr.mxu0 0.0
  %89 = vmatpush2.msra.mxu0 0.0
  %90 = vmatprep.subr.mxu0 0.0
  %91 = vmatpush2.msra.mxu0 0.0
  %92 = vmatprep.subr.mxu0 0.0
  %93 = vmatpush2.msra.mxu0 0.0
  %94 = vmatprep.subr.mxu0 0.0
  %95 = vmatpush2.msra.mxu0 0.0
  %96 = vmatprep.subr.mxu0 0.0
  %97 = vmatpush2.msra.mxu0 0.0
  %98 = vmatprep.subr.mxu0 0.0
  %99 = vmatpush2.msra.mxu0 0.0
  %100 = vmatprep.subr.mxu0 0.0
  %101 = vmatpush2.msra.mxu0 0.0
  %102 = vmatprep.subr.mxu0 0.0
  %103 = vmatpush2.msra.mxu0 0.0
  %104 = vmatprep.subr.mxu0 0.0
  %105 = vmatpush2.msra.mxu0 0.0
  %106 = vmatprep.subr.mxu0 0.0
  %107 = vmatpush2.msra.mxu0 0.0
  %108 = vmatprep.subr.mxu0 0.0
  %109 = vmatpush2.msra.mxu0 0.0
  %110 = vmatprep.subr.mxu0 0.0
  %111 = vmatpush2.msra.mxu0 0.0
  %112 = vmatprep.subr.mxu0 0.0
  %113 = vmatpush2.msra.mxu0 0.0
  %114 = vmatprep.subr.mxu0 0.0
  %115 = vmatpush2.msra.mxu0 0.0
  %116 = vmatprep.subr.mxu0 0.0
  %117 = vmatpush2.msra.mxu0 0.0
  %118 = vmatprep.mubr.f32.mxu0 0.0
  %119 = vmatmul.mubr.f32.gmra.mxu0 %v52
  %v120 = vpop.f32.mrf.mxu0
  %v121 = vadd.f32 %v48, %v120
  %v122 = vpop.f32.mrf.mxu0
  %123 = vdwg.mxu0
  %v124 = vmax.f32 %v121, 0.0
  %v125 = vld [vmem:[%s3] sm:$0xff]
  %v126 = vld [vmem:[%s3 + $0x8] sm:$0xff]
  %v127 = vld [vmem:[%s3 + $0x10] sm:$0xff]
  %v128 = vld [vmem:[%s3 + $0x18] sm:$0xff]
  %v129 = vld [vmem:[%s8] sm:$0x1]
  %v131 = vlaneseq
  %v132 = vshrl.u32 %v131, 7
  %v133 = vsub.s32 0, %v132
  %v134 = vrot.slane %v129, %v133
  %vm136 = vcmask 261120
  %v138 = vsel %vm136, %v124, 0
  %140 = vmatprep.subr.mxu0 0.0
  %141 = vmatpush1.msra.mxu0 0.0
  %142 = vmatprep.subr.mxu0 0.0
  %143 = vmatpush1.msra.mxu0 0.0
  %144 = vmatprep.subr.mxu0 0.0
  %145 = vmatpush1.msra.mxu0 0.0
  %146 = vmatprep.subr.mxu0 0.0
  %147 = vmatpush1.msra.mxu0 0.0
  %148 = vmatprep.subr.mxu0 0.0
  %149 = vmatpush1.msra.mxu0 0.0
  %150 = vmatprep.subr.mxu0 0.0
  %151 = vmatpush1.msra.mxu0 0.0
  %152 = vmatprep.subr.mxu0 0.0
  %153 = vmatpush1.msra.mxu0 0.0
  %154 = vmatprep.subr.mxu0 0.0
  %155 = vmatpush1.msra.mxu0 0.0
  %156 = vmatprep.subr.mxu0 0.0
  %157 = vmatpush1.msra.mxu0 0.0
  %158 = vmatprep.subr.mxu0 0.0
  %159 = vmatpush1.msra.mxu0 0.0
  %160 = vmatprep.subr.mxu0 0.0
  %161 = vmatpush1.msra.mxu0 0.0
  %162 = vmatprep.subr.mxu0 0.0
  %163 = vmatpush1.msra.mxu0 0.0
  %164 = vmatprep.subr.mxu0 0.0
  %165 = vmatpush1.msra.mxu0 %v128
  %166 = vmatprep.subr.mxu0 0.0
  %167 = vmatpush1.msra.mxu0 %v127
  %168 = vmatprep.subr.mxu0 0.0
  %169 = vmatpush1.msra.mxu0 %v126
  %170 = vmatprep.subr.mxu0 0.0
  %171 = vmatpush1.msra.mxu0 %v125
  %172 = vmatprep.subr.mxu0 0.0
  %173 = vmatpush2.msra.mxu0 0.0
  %174 = vmatprep.subr.mxu0 0.0
  %175 = vmatpush2.msra.mxu0 0.0
  %176 = vmatprep.subr.mxu0 0.0
  %177 = vmatpush2.msra.mxu0 0.0
  %178 = vmatprep.subr.mxu0 0.0
  %179 = vmatpush2.msra.mxu0 0.0
  %180 = vmatprep.subr.mxu0 0.0
  %181 = vmatpush2.msra.mxu0 0.0
  %182 = vmatprep.subr.mxu0 0.0
  %183 = vmatpush2.msra.mxu0 0.0
  %184 = vmatprep.subr.mxu0 0.0
  %185 = vmatpush2.msra.mxu0 0.0
  %186 = vmatprep.subr.mxu0 0.0
  %187 = vmatpush2.msra.mxu0 0.0
  %188 = vmatprep.subr.mxu0 0.0
  %189 = vmatpush2.msra.mxu0 0.0
  %190 = vmatprep.subr.mxu0 0.0
  %191 = vmatpush2.msra.mxu0 0.0
  %192 = vmatprep.subr.mxu0 0.0
  %193 = vmatpush2.msra.mxu0 0.0
  %194 = vmatprep.subr.mxu0 0.0
  %195 = vmatpush2.msra.mxu0 0.0
  %196 = vmatprep.subr.mxu0 0.0
  %197 = vmatpush2.msra.mxu0 0.0
  %198 = vmatprep.subr.mxu0 0.0
  %199 = vmatpush2.msra.mxu0 0.0
  %200 = vmatprep.subr.mxu0 0.0
  %201 = vmatpush2.msra.mxu0 0.0
  %202 = vmatprep.subr.mxu0 0.0
  %203 = vmatpush2.msra.mxu0 0.0
  %204 = vmatprep.mubr.f32.mxu0 0.0
  %205 = vmatmul.mubr.f32.gmra.mxu0 %v138
  %v206 = vpop.f32.mrf.mxu0
  %v207 = vadd.f32 %v134, %v206
  %v208 = vpop.f32.mrf.mxu0
  %209 = vdwg.mxu0
  %v210 = vmax.f32 %v207, 0.0
  %v211 = vld [vmem:[%s4] sm:$0xff]
  %v212 = vld [vmem:[%s4 + $0x8] sm:$0xff]
  %v213 = vld [vmem:[%s4 + $0x10] sm:$0xff]
  %v214 = vld [vmem:[%s4 + $0x18] sm:$0xff]
  %v215 = vld [vmem:[%s4 + $0x20] sm:$0xff]
  %v216 = vld [vmem:[%s4 + $0x28] sm:$0xff]
  %v217 = vld [vmem:[%s4 + $0x30] sm:$0xff]
  %v218 = vld [vmem:[%s4 + $0x38] sm:$0xff]
  %v219 = vld [vmem:[%s4 + $0x40] sm:$0xff]
  %v220 = vld [vmem:[%s4 + $0x48] sm:$0xff]
  %v221 = vld [vmem:[%s4 + $0x50] sm:$0xff]
  %v222 = vld [vmem:[%s4 + $0x58] sm:$0xff]
  %v223 = vld [vmem:[%s4 + $0x60] sm:$0xff]
  %v224 = vld [vmem:[%s4 + $0x68] sm:$0xff]
  %v225 = vld [vmem:[%s4 + $0x70] sm:$0xff]
  %v226 = vld [vmem:[%s4 + $0x78] sm:$0xff]
  %v227 = vld [vmem:[%s4 + $0x80] sm:$0xff]
  %v228 = vld [vmem:[%s4 + $0x88] sm:$0xff]
  %v229 = vld [vmem:[%s4 + $0x90] sm:$0xff]
  %v230 = vld [vmem:[%s4 + $0x98] sm:$0xff]
  %v231 = vld [vmem:[%s4 + $0xa0] sm:$0xff]
  %v232 = vld [vmem:[%s4 + $0xa8] sm:$0xff]
  %v233 = vld [vmem:[%s4 + $0xb0] sm:$0xff]
  %v234 = vld [vmem:[%s4 + $0xb8] sm:$0xff]
  %v235 = vld [vmem:[%s4 + $0xc0] sm:$0xff]
  %v236 = vld [vmem:[%s4 + $0xc8] sm:$0xff]
  %v237 = vld [vmem:[%s4 + $0xd0] sm:$0xff]
  %v238 = vld [vmem:[%s4 + $0xd8] sm:$0xff]
  %v239 = vld [vmem:[%s4 + $0xe0] sm:$0xff]
  %v240 = vld [vmem:[%s4 + $0xe8] sm:$0xff]
  %v241 = vld [vmem:[%s4 + $0xf0] sm:$0xff]
  %v242 = vld [vmem:[%s4 + $0xf8] sm:$0xff]
  %v243 = vld [vmem:[%s9] sm:$0x3]
  %v245 = vlaneseq
  %v246 = vshrl.u32 %v245, 7
  %v247 = vsub.s32 0, %v246
  %v248 = vrot.slane %v243, %v247
  %v249 = vlaneseq
  %v250 = vshrl.u32 %v249, 7
  %v251 = vsub.s32 1, %v250
  %v252 = vrot.slane %v243, %v251
  %255 = vmatprep.subr.mxu0 %v242
  %256 = vmatpush1.msra.mxu0 %v241
  %257 = vmatprep.subr.mxu0 %v240
  %258 = vmatpush1.msra.mxu0 %v239
  %259 = vmatprep.subr.mxu0 %v238
  %260 = vmatpush1.msra.mxu0 %v237
  %261 = vmatprep.subr.mxu0 %v236
  %262 = vmatpush1.msra.mxu0 %v235
  %263 = vmatprep.subr.mxu0 %v234
  %264 = vmatpush1.msra.mxu0 %v233
  %265 = vmatprep.subr.mxu0 %v232
  %266 = vmatpush1.msra.mxu0 %v231
  %267 = vmatprep.subr.mxu0 %v230
  %268 = vmatpush1.msra.mxu0 %v229
  %269 = vmatprep.subr.mxu0 %v228
  %270 = vmatpush1.msra.mxu0 %v227
  %271 = vmatprep.subr.mxu0 %v226
  %272 = vmatpush1.msra.mxu0 %v225
  %273 = vmatprep.subr.mxu0 %v224
  %274 = vmatpush1.msra.mxu0 %v223
  %275 = vmatprep.subr.mxu0 %v222
  %276 = vmatpush1.msra.mxu0 %v221
  %277 = vmatprep.subr.mxu0 %v220
  %278 = vmatpush1.msra.mxu0 %v219
  %279 = vmatprep.subr.mxu0 %v218
  %280 = vmatpush1.msra.mxu0 %v217
  %281 = vmatprep.subr.mxu0 %v216
  %282 = vmatpush1.msra.mxu0 %v215
  %283 = vmatprep.subr.mxu0 %v214
  %284 = vmatpush1.msra.mxu0 %v213
  %285 = vmatprep.subr.mxu0 %v212
  %286 = vmatpush1.msra.mxu0 %v211
  %287 = vmatprep.subr.mxu0 0.0
  %288 = vmatpush2.msra.mxu0 0.0
  %289 = vmatprep.subr.mxu0 0.0
  %290 = vmatpush2.msra.mxu0 0.0
  %291 = vmatprep.subr.mxu0 0.0
  %292 = vmatpush2.msra.mxu0 0.0
  %293 = vmatprep.subr.mxu0 0.0
  %294 = vmatpush2.msra.mxu0 0.0
  %295 = vmatprep.subr.mxu0 0.0
  %296 = vmatpush2.msra.mxu0 0.0
  %297 = vmatprep.subr.mxu0 0.0
  %298 = vmatpush2.msra.mxu0 0.0
  %299 = vmatprep.subr.mxu0 0.0
  %300 = vmatpush2.msra.mxu0 0.0
  %301 = vmatprep.subr.mxu0 0.0
  %302 = vmatpush2.msra.mxu0 0.0
  %303 = vmatprep.subr.mxu0 0.0
  %304 = vmatpush2.msra.mxu0 0.0
  %305 = vmatprep.subr.mxu0 0.0
  %306 = vmatpush2.msra.mxu0 0.0
  %307 = vmatprep.subr.mxu0 0.0
  %308 = vmatpush2.msra.mxu0 0.0
  %309 = vmatprep.subr.mxu0 0.0
  %310 = vmatpush2.msra.mxu0 0.0
  %311 = vmatprep.subr.mxu0 0.0
  %312 = vmatpush2.msra.mxu0 0.0
  %313 = vmatprep.subr.mxu0 0.0
  %314 = vmatpush2.msra.mxu0 0.0
  %315 = vmatprep.subr.mxu0 0.0
  %316 = vmatpush2.msra.mxu0 0.0
  %317 = vmatprep.subr.mxu0 0.0
  %318 = vmatpush2.msra.mxu0 0.0
  %319 = vmatprep.mubr.f32.mxu0 0.0
  %320 = vmatmul.mubr.f32.gmra.mxu0 %v210
  %v321 = vpop.f32.mrf.mxu0
  %v322 = vadd.f32 %v248, %v321
  %v323 = vpop.f32.mrf.mxu0
  %v324 = vadd.f32 %v252, %v323
  %325 = vdwg.mxu0
  %v326 = vmax.f32 %v322, 0.0
  %v327 = vmax.f32 %v324, 0.0
  %v328 = vld [vmem:[%s5] sm:$0xff]
  %v329 = vld [vmem:[%s5 + $0x8] sm:$0xff]
  %v330 = vld [vmem:[%s5 + $0x10] sm:$0xff]
  %v331 = vld [vmem:[%s5 + $0x18] sm:$0xff]
  %v332 = vld [vmem:[%s5 + $0x20] sm:$0xff]
  %v333 = vld [vmem:[%s5 + $0x28] sm:$0xff]
  %v334 = vld [vmem:[%s5 + $0x30] sm:$0xff]
  %v335 = vld [vmem:[%s5 + $0x38] sm:$0xff]
  %v336 = vld [vmem:[%s5 + $0x40] sm:$0xff]
  %v337 = vld [vmem:[%s5 + $0x48] sm:$0xff]
  %v338 = vld [vmem:[%s5 + $0x50] sm:$0xff]
  %v339 = vld [vmem:[%s5 + $0x58] sm:$0xff]
  %v340 = vld [vmem:[%s5 + $0x60] sm:$0xff]
  %v341 = vld [vmem:[%s5 + $0x68] sm:$0xff]
  %v342 = vld [vmem:[%s5 + $0x70] sm:$0xff]
  %v343 = vld [vmem:[%s5 + $0x78] sm:$0xff]
  %v344 = vld [vmem:[%s5 + $0x80] sm:$0xff]
  %v345 = vld [vmem:[%s5 + $0x88] sm:$0xff]
  %v346 = vld [vmem:[%s5 + $0x90] sm:$0xff]
  %v347 = vld [vmem:[%s5 + $0x98] sm:$0xff]
  %v348 = vld [vmem:[%s5 + $0xa0] sm:$0xff]
  %v349 = vld [vmem:[%s5 + $0xa8] sm:$0xff]
  %v350 = vld [vmem:[%s5 + $0xb0] sm:$0xff]
  %v351 = vld [vmem:[%s5 + $0xb8] sm:$0xff]
  %v352 = vld [vmem:[%s5 + $0xc0] sm:$0xff]
  %v353 = vld [vmem:[%s5 + $0xc8] sm:$0xff]
  %v354 = vld [vmem:[%s5 + $0xd0] sm:$0xff]
  %v355 = vld [vmem:[%s5 + $0xd8] sm:$0xff]
  %v356 = vld [vmem:[%s5 + $0xe0] sm:$0xff]
  %v357 = vld [vmem:[%s5 + $0xe8] sm:$0xff]
  %v358 = vld [vmem:[%s5 + $0xf0] sm:$0xff]
  %v359 = vld [vmem:[%s5 + $0xf8] sm:$0xff]
  %v360 = vld [vmem:[%s5 + $0x100] sm:$0xff]
  %v361 = vld [vmem:[%s5 + $0x108] sm:$0xff]
  %v362 = vld [vmem:[%s5 + $0x110] sm:$0xff]
  %v363 = vld [vmem:[%s5 + $0x118] sm:$0xff]
  %v364 = vld [vmem:[%s5 + $0x120] sm:$0xff]
  %v365 = vld [vmem:[%s5 + $0x128] sm:$0xff]
  %v366 = vld [vmem:[%s5 + $0x130] sm:$0xff]
  %v367 = vld [vmem:[%s5 + $0x138] sm:$0xff]
  %v368 = vld [vmem:[%s5 + $0x140] sm:$0xff]
  %v369 = vld [vmem:[%s5 + $0x148] sm:$0xff]
  %v370 = vld [vmem:[%s5 + $0x150] sm:$0xff]
  %v371 = vld [vmem:[%s5 + $0x158] sm:$0xff]
  %v372 = vld [vmem:[%s5 + $0x160] sm:$0xff]
  %v373 = vld [vmem:[%s5 + $0x168] sm:$0xff]
  %v374 = vld [vmem:[%s5 + $0x170] sm:$0xff]
  %v375 = vld [vmem:[%s5 + $0x178] sm:$0xff]
  %v376 = vld [vmem:[%s5 + $0x180] sm:$0xff]
  %v377 = vld [vmem:[%s5 + $0x188] sm:$0xff]
  %v378 = vld [vmem:[%s5 + $0x190] sm:$0xff]
  %v379 = vld [vmem:[%s5 + $0x198] sm:$0xff]
  %v380 = vld [vmem:[%s5 + $0x1a0] sm:$0xff]
  %v381 = vld [vmem:[%s5 + $0x1a8] sm:$0xff]
  %v382 = vld [vmem:[%s5 + $0x1b0] sm:$0xff]
  %v383 = vld [vmem:[%s5 + $0x1b8] sm:$0xff]
  %v384 = vld [vmem:[%s5 + $0x1c0] sm:$0xff]
  %v385 = vld [vmem:[%s5 + $0x1c8] sm:$0xff]
  %v386 = vld [vmem:[%s5 + $0x1d0] sm:$0xff]
  %v387 = vld [vmem:[%s5 + $0x1d8] sm:$0xff]
  %v388 = vld [vmem:[%s5 + $0x1e0] sm:$0xff]
  %v389 = vld [vmem:[%s5 + $0x1e8] sm:$0xff]
  %v390 = vld [vmem:[%s5 + $0x1f0] sm:$0xff]
  %v391 = vld [vmem:[%s5 + $0x1f8] sm:$0xff]
  %v392 = vld [vmem:[%s5 + $0x200] sm:$0xff]
  %v393 = vld [vmem:[%s5 + $0x208] sm:$0xff]
  %v394 = vld [vmem:[%s5 + $0x210] sm:$0xff]
  %v395 = vld [vmem:[%s5 + $0x218] sm:$0xff]
  %v396 = vld [vmem:[%s5 + $0x220] sm:$0xff]
  %v397 = vld [vmem:[%s5 + $0x228] sm:$0xff]
  %v398 = vld [vmem:[%s5 + $0x230] sm:$0xff]
  %v399 = vld [vmem:[%s5 + $0x238] sm:$0xff]
  %v400 = vld [vmem:[%s5 + $0x240] sm:$0xff]
  %v401 = vld [vmem:[%s5 + $0x248] sm:$0xff]
  %v402 = vld [vmem:[%s5 + $0x250] sm:$0xff]
  %v403 = vld [vmem:[%s5 + $0x258] sm:$0xff]
  %v404 = vld [vmem:[%s5 + $0x260] sm:$0xff]
  %v405 = vld [vmem:[%s5 + $0x268] sm:$0xff]
  %v406 = vld [vmem:[%s5 + $0x270] sm:$0xff]
  %v407 = vld [vmem:[%s5 + $0x278] sm:$0xff]
  %v408 = vld [vmem:[%s5 + $0x280] sm:$0xff]
  %v409 = vld [vmem:[%s5 + $0x288] sm:$0xff]
  %v410 = vld [vmem:[%s5 + $0x290] sm:$0xff]
  %v411 = vld [vmem:[%s5 + $0x298] sm:$0xff]
  %v412 = vld [vmem:[%s5 + $0x2a0] sm:$0xff]
  %v413 = vld [vmem:[%s5 + $0x2a8] sm:$0xff]
  %v414 = vld [vmem:[%s5 + $0x2b0] sm:$0xff]
  %v415 = vld [vmem:[%s5 + $0x2b8] sm:$0xff]
  %v416 = vld [vmem:[%s5 + $0x2c0] sm:$0xff]
  %v417 = vld [vmem:[%s5 + $0x2c8] sm:$0xff]
  %v418 = vld [vmem:[%s5 + $0x2d0] sm:$0xff]
  %v419 = vld [vmem:[%s5 + $0x2d8] sm:$0xff]
  %v420 = vld [vmem:[%s5 + $0x2e0] sm:$0xff]
  %v421 = vld [vmem:[%s5 + $0x2e8] sm:$0xff]
  %v422 = vld [vmem:[%s5 + $0x2f0] sm:$0xff]
  %v423 = vld [vmem:[%s5 + $0x2f8] sm:$0xff]
  %v424 = vld [vmem:[%s5 + $0x300] sm:$0xff]
  %v425 = vld [vmem:[%s5 + $0x308] sm:$0xff]
  %v426 = vld [vmem:[%s5 + $0x310] sm:$0xff]
  %v427 = vld [vmem:[%s5 + $0x318] sm:$0xff]
  %v428 = vld [vmem:[%s5 + $0x320] sm:$0xff]
  %v429 = vld [vmem:[%s5 + $0x328] sm:$0xff]
  %v430 = vld [vmem:[%s5 + $0x330] sm:$0xff]
  %v431 = vld [vmem:[%s5 + $0x338] sm:$0xff]
  %v432 = vld [vmem:[%s5 + $0x340] sm:$0xff]
  %v433 = vld [vmem:[%s5 + $0x348] sm:$0xff]
  %v434 = vld [vmem:[%s5 + $0x350] sm:$0xff]
  %v435 = vld [vmem:[%s5 + $0x358] sm:$0xff]
  %v436 = vld [vmem:[%s5 + $0x360] sm:$0xff]
  %v437 = vld [vmem:[%s5 + $0x368] sm:$0xff]
  %v438 = vld [vmem:[%s5 + $0x370] sm:$0xff]
  %v439 = vld [vmem:[%s5 + $0x378] sm:$0xff]
  %v440 = vld [vmem:[%s5 + $0x380] sm:$0xff]
  %v441 = vld [vmem:[%s5 + $0x388] sm:$0xff]
  %v442 = vld [vmem:[%s5 + $0x390] sm:$0xff]
  %v443 = vld [vmem:[%s5 + $0x398] sm:$0xff]
  %v444 = vld [vmem:[%s5 + $0x3a0] sm:$0xff]
  %v445 = vld [vmem:[%s5 + $0x3a8] sm:$0xff]
  %v446 = vld [vmem:[%s5 + $0x3b0] sm:$0xff]
  %v447 = vld [vmem:[%s5 + $0x3b8] sm:$0xff]
  %v448 = vld [vmem:[%s5 + $0x3c0] sm:$0xff]
  %v449 = vld [vmem:[%s5 + $0x3c8] sm:$0xff]
  %v450 = vld [vmem:[%s5 + $0x3d0] sm:$0xff]
  %v451 = vld [vmem:[%s5 + $0x3d8] sm:$0xff]
  %v452 = vld [vmem:[%s5 + $0x3e0] sm:$0xff]
  %v453 = vld [vmem:[%s5 + $0x3e8] sm:$0xff]
  %v454 = vld [vmem:[%s5 + $0x3f0] sm:$0xff]
  %v455 = vld [vmem:[%s5 + $0x3f8] sm:$0xff]
  %v456 = vld [vmem:[%s5 + $0x400] sm:$0xff]
  %v457 = vld [vmem:[%s5 + $0x408] sm:$0xff]
  %v458 = vld [vmem:[%s5 + $0x410] sm:$0xff]
  %v459 = vld [vmem:[%s5 + $0x418] sm:$0xff]
  %v460 = vld [vmem:[%s5 + $0x420] sm:$0xff]
  %v461 = vld [vmem:[%s5 + $0x428] sm:$0xff]
  %v462 = vld [vmem:[%s5 + $0x430] sm:$0xff]
  %v463 = vld [vmem:[%s5 + $0x438] sm:$0xff]
  %v464 = vld [vmem:[%s5 + $0x440] sm:$0xff]
  %v465 = vld [vmem:[%s5 + $0x448] sm:$0xff]
  %v466 = vld [vmem:[%s5 + $0x450] sm:$0xff]
  %v467 = vld [vmem:[%s5 + $0x458] sm:$0xff]
  %v468 = vld [vmem:[%s5 + $0x460] sm:$0xff]
  %v469 = vld [vmem:[%s5 + $0x468] sm:$0xff]
  %v470 = vld [vmem:[%s5 + $0x470] sm:$0xff]
  %v471 = vld [vmem:[%s5 + $0x478] sm:$0xff]
  %v472 = vld [vmem:[%s5 + $0x480] sm:$0xff]
  %v473 = vld [vmem:[%s5 + $0x488] sm:$0xff]
  %v474 = vld [vmem:[%s5 + $0x490] sm:$0xff]
  %v475 = vld [vmem:[%s5 + $0x498] sm:$0xff]
  %v476 = vld [vmem:[%s5 + $0x4a0] sm:$0xff]
  %v477 = vld [vmem:[%s5 + $0x4a8] sm:$0xff]
  %v478 = vld [vmem:[%s5 + $0x4b0] sm:$0xff]
  %v479 = vld [vmem:[%s5 + $0x4b8] sm:$0xff]
  %v480 = vld [vmem:[%s5 + $0x4c0] sm:$0xff]
  %v481 = vld [vmem:[%s5 + $0x4c8] sm:$0xff]
  %v482 = vld [vmem:[%s5 + $0x4d0] sm:$0xff]
  %v483 = vld [vmem:[%s5 + $0x4d8] sm:$0xff]
  %v484 = vld [vmem:[%s5 + $0x4e0] sm:$0xff]
  %v485 = vld [vmem:[%s5 + $0x4e8] sm:$0xff]
  %v486 = vld [vmem:[%s5 + $0x4f0] sm:$0xff]
  %v487 = vld [vmem:[%s5 + $0x4f8] sm:$0xff]
  %v488 = vld [vmem:[%s5 + $0x500] sm:$0xff]
  %v489 = vld [vmem:[%s5 + $0x508] sm:$0xff]
  %v490 = vld [vmem:[%s5 + $0x510] sm:$0xff]
  %v491 = vld [vmem:[%s5 + $0x518] sm:$0xff]
  %v492 = vld [vmem:[%s5 + $0x520] sm:$0xff]
  %v493 = vld [vmem:[%s5 + $0x528] sm:$0xff]
  %v494 = vld [vmem:[%s5 + $0x530] sm:$0xff]
  %v495 = vld [vmem:[%s5 + $0x538] sm:$0xff]
  %v496 = vld [vmem:[%s5 + $0x540] sm:$0xff]
  %v497 = vld [vmem:[%s5 + $0x548] sm:$0xff]
  %v498 = vld [vmem:[%s5 + $0x550] sm:$0xff]
  %v499 = vld [vmem:[%s5 + $0x558] sm:$0xff]
  %v500 = vld [vmem:[%s5 + $0x560] sm:$0xff]
  %v501 = vld [vmem:[%s5 + $0x568] sm:$0xff]
  %v502 = vld [vmem:[%s5 + $0x570] sm:$0xff]
  %v503 = vld [vmem:[%s5 + $0x578] sm:$0xff]
  %v504 = vld [vmem:[%s5 + $0x580] sm:$0xff]
  %v505 = vld [vmem:[%s5 + $0x588] sm:$0xff]
  %v506 = vld [vmem:[%s5 + $0x590] sm:$0xff]
  %v507 = vld [vmem:[%s5 + $0x598] sm:$0xff]
  %v508 = vld [vmem:[%s5 + $0x5a0] sm:$0xff]
  %v509 = vld [vmem:[%s5 + $0x5a8] sm:$0xff]
  %v510 = vld [vmem:[%s5 + $0x5b0] sm:$0xff]
  %v511 = vld [vmem:[%s5 + $0x5b8] sm:$0xff]
  %v512 = vld [vmem:[%s5 + $0x5c0] sm:$0xff]
  %v513 = vld [vmem:[%s5 + $0x5c8] sm:$0xff]
  %v514 = vld [vmem:[%s5 + $0x5d0] sm:$0xff]
  %v515 = vld [vmem:[%s5 + $0x5d8] sm:$0xff]
  %v516 = vld [vmem:[%s5 + $0x5e0] sm:$0xff]
  %v517 = vld [vmem:[%s5 + $0x5e8] sm:$0xff]
  %v518 = vld [vmem:[%s5 + $0x5f0] sm:$0xff]
  %v519 = vld [vmem:[%s5 + $0x5f8] sm:$0xff]
  %v520 = vld [vmem:[%s5 + $0x600] sm:$0xff]
  %v521 = vld [vmem:[%s5 + $0x608] sm:$0xff]
  %v522 = vld [vmem:[%s5 + $0x610] sm:$0xff]
  %v523 = vld [vmem:[%s5 + $0x618] sm:$0xff]
  %v524 = vld [vmem:[%s5 + $0x620] sm:$0xff]
  %v525 = vld [vmem:[%s5 + $0x628] sm:$0xff]
  %v526 = vld [vmem:[%s5 + $0x630] sm:$0xff]
  %v527 = vld [vmem:[%s5 + $0x638] sm:$0xff]
  %v528 = vld [vmem:[%s5 + $0x640] sm:$0xff]
  %v529 = vld [vmem:[%s5 + $0x648] sm:$0xff]
  %v530 = vld [vmem:[%s5 + $0x650] sm:$0xff]
  %v531 = vld [vmem:[%s5 + $0x658] sm:$0xff]
  %v532 = vld [vmem:[%s5 + $0x660] sm:$0xff]
  %v533 = vld [vmem:[%s5 + $0x668] sm:$0xff]
  %v534 = vld [vmem:[%s5 + $0x670] sm:$0xff]
  %v535 = vld [vmem:[%s5 + $0x678] sm:$0xff]
  %v536 = vld [vmem:[%s5 + $0x680] sm:$0xff]
  %v537 = vld [vmem:[%s5 + $0x688] sm:$0xff]
  %v538 = vld [vmem:[%s5 + $0x690] sm:$0xff]
  %v539 = vld [vmem:[%s5 + $0x698] sm:$0xff]
  %v540 = vld [vmem:[%s5 + $0x6a0] sm:$0xff]
  %v541 = vld [vmem:[%s5 + $0x6a8] sm:$0xff]
  %v542 = vld [vmem:[%s5 + $0x6b0] sm:$0xff]
  %v543 = vld [vmem:[%s5 + $0x6b8] sm:$0xff]
  %v544 = vld [vmem:[%s5 + $0x6c0] sm:$0xff]
  %v545 = vld [vmem:[%s5 + $0x6c8] sm:$0xff]
  %v546 = vld [vmem:[%s5 + $0x6d0] sm:$0xff]
  %v547 = vld [vmem:[%s5 + $0x6d8] sm:$0xff]
  %v548 = vld [vmem:[%s5 + $0x6e0] sm:$0xff]
  %v549 = vld [vmem:[%s5 + $0x6e8] sm:$0xff]
  %v550 = vld [vmem:[%s5 + $0x6f0] sm:$0xff]
  %v551 = vld [vmem:[%s5 + $0x6f8] sm:$0xff]
  %v552 = vld [vmem:[%s5 + $0x700] sm:$0xff]
  %v553 = vld [vmem:[%s5 + $0x708] sm:$0xff]
  %v554 = vld [vmem:[%s5 + $0x710] sm:$0xff]
  %v555 = vld [vmem:[%s5 + $0x718] sm:$0xff]
  %v556 = vld [vmem:[%s5 + $0x720] sm:$0xff]
  %v557 = vld [vmem:[%s5 + $0x728] sm:$0xff]
  %v558 = vld [vmem:[%s5 + $0x730] sm:$0xff]
  %v559 = vld [vmem:[%s5 + $0x738] sm:$0xff]
  %v560 = vld [vmem:[%s5 + $0x740] sm:$0xff]
  %v561 = vld [vmem:[%s5 + $0x748] sm:$0xff]
  %v562 = vld [vmem:[%s5 + $0x750] sm:$0xff]
  %v563 = vld [vmem:[%s5 + $0x758] sm:$0xff]
  %v564 = vld [vmem:[%s5 + $0x760] sm:$0xff]
  %v565 = vld [vmem:[%s5 + $0x768] sm:$0xff]
  %v566 = vld [vmem:[%s5 + $0x770] sm:$0xff]
  %v567 = vld [vmem:[%s5 + $0x778] sm:$0xff]
  %v568 = vld [vmem:[%s5 + $0x780] sm:$0xff]
  %v569 = vld [vmem:[%s5 + $0x788] sm:$0xff]
  %v570 = vld [vmem:[%s5 + $0x790] sm:$0xff]
  %v571 = vld [vmem:[%s5 + $0x798] sm:$0xff]
  %v572 = vld [vmem:[%s5 + $0x7a0] sm:$0xff]
  %v573 = vld [vmem:[%s5 + $0x7a8] sm:$0xff]
  %v574 = vld [vmem:[%s5 + $0x7b0] sm:$0xff]
  %v575 = vld [vmem:[%s5 + $0x7b8] sm:$0xff]
  %v576 = vld [vmem:[%s5 + $0x7c0] sm:$0xff]
  %v577 = vld [vmem:[%s5 + $0x7c8] sm:$0xff]
  %v578 = vld [vmem:[%s5 + $0x7d0] sm:$0xff]
  %v579 = vld [vmem:[%s5 + $0x7d8] sm:$0xff]
  %v580 = vld [vmem:[%s5 + $0x7e0] sm:$0xff]
  %v581 = vld [vmem:[%s5 + $0x7e8] sm:$0xff]
  %v582 = vld [vmem:[%s5 + $0x7f0] sm:$0xff]
  %v583 = vld [vmem:[%s5 + $0x7f8] sm:$0xff]
  %v584 = vld [vmem:[%s10] sm:$0xff]
  %v586 = vlaneseq
  %v587 = vshrl.u32 %v586, 7
  %v588 = vsub.s32 0, %v587
  %v589 = vrot.slane %v584, %v588
  %v590 = vlaneseq
  %v591 = vshrl.u32 %v590, 7
  %v592 = vsub.s32 1, %v591
  %v593 = vrot.slane %v584, %v592
  %v594 = vlaneseq
  %v595 = vshrl.u32 %v594, 7
  %v596 = vsub.s32 2, %v595
  %v597 = vrot.slane %v584, %v596
  %v598 = vlaneseq
  %v599 = vshrl.u32 %v598, 7
  %v600 = vsub.s32 3, %v599
  %v601 = vrot.slane %v584, %v600
  %v602 = vlaneseq
  %v603 = vshrl.u32 %v602, 7
  %v604 = vsub.s32 4, %v603
  %v605 = vrot.slane %v584, %v604
  %v606 = vlaneseq
  %v607 = vshrl.u32 %v606, 7
  %v608 = vsub.s32 5, %v607
  %v609 = vrot.slane %v584, %v608
  %v610 = vlaneseq
  %v611 = vshrl.u32 %v610, 7
  %v612 = vsub.s32 6, %v611
  %v613 = vrot.slane %v584, %v612
  %v614 = vlaneseq
  %v615 = vshrl.u32 %v614, 7
  %v616 = vsub.s32 7, %v615
  %v617 = vrot.slane %v584, %v616
  %626 = vmatprep.subr.mxu0 %v449
  %627 = vmatpush1.msra.mxu0 %v448
  %628 = vmatprep.subr.mxu0 %v441
  %629 = vmatpush1.msra.mxu0 %v440
  %630 = vmatprep.subr.mxu0 %v433
  %631 = vmatpush1.msra.mxu0 %v432
  %632 = vmatprep.subr.mxu0 %v425
  %633 = vmatpush1.msra.mxu0 %v424
  %634 = vmatprep.subr.mxu0 %v417
  %635 = vmatpush1.msra.mxu0 %v416
  %636 = vmatprep.subr.mxu0 %v409
  %637 = vmatpush1.msra.mxu0 %v408
  %638 = vmatprep.subr.mxu0 %v401
  %639 = vmatpush1.msra.mxu0 %v400
  %640 = vmatprep.subr.mxu0 %v393
  %641 = vmatpush1.msra.mxu0 %v392
  %642 = vmatprep.subr.mxu0 %v385
  %643 = vmatpush1.msra.mxu0 %v384
  %644 = vmatprep.subr.mxu0 %v377
  %645 = vmatpush1.msra.mxu0 %v376
  %646 = vmatprep.subr.mxu0 %v369
  %647 = vmatpush1.msra.mxu0 %v368
  %648 = vmatprep.subr.mxu0 %v361
  %649 = vmatpush1.msra.mxu0 %v360
  %650 = vmatprep.subr.mxu0 %v353
  %651 = vmatpush1.msra.mxu0 %v352
  %652 = vmatprep.subr.mxu0 %v345
  %653 = vmatpush1.msra.mxu0 %v344
  %654 = vmatprep.subr.mxu0 %v337
  %655 = vmatpush1.msra.mxu0 %v336
  %656 = vmatprep.subr.mxu0 %v329
  %657 = vmatpush1.msra.mxu0 %v328
  %658 = vmatprep.subr.mxu0 %v577
  %659 = vmatpush2.msra.mxu0 %v576
  %660 = vmatprep.subr.mxu0 %v569
  %661 = vmatpush2.msra.mxu0 %v568
  %662 = vmatprep.subr.mxu0 %v561
  %663 = vmatpush2.msra.mxu0 %v560
  %664 = vmatprep.subr.mxu0 %v553
  %665 = vmatpush2.msra.mxu0 %v552
  %666 = vmatprep.subr.mxu0 %v545
  %667 = vmatpush2.msra.mxu0 %v544
  %668 = vmatprep.subr.mxu0 %v537
  %669 = vmatpush2.msra.mxu0 %v536
  %670 = vmatprep.subr.mxu0 %v529
  %671 = vmatpush2.msra.mxu0 %v528
  %672 = vmatprep.subr.mxu0 %v521
  %673 = vmatpush2.msra.mxu0 %v520
  %674 = vmatprep.subr.mxu0 %v513
  %675 = vmatpush2.msra.mxu0 %v512
  %676 = vmatprep.subr.mxu0 %v505
  %677 = vmatpush2.msra.mxu0 %v504
  %678 = vmatprep.subr.mxu0 %v497
  %679 = vmatpush2.msra.mxu0 %v496
  %680 = vmatprep.subr.mxu0 %v489
  %681 = vmatpush2.msra.mxu0 %v488
  %682 = vmatprep.subr.mxu0 %v481
  %683 = vmatpush2.msra.mxu0 %v480
  %684 = vmatprep.subr.mxu0 %v473
  %685 = vmatpush2.msra.mxu0 %v472
  %686 = vmatprep.subr.mxu0 %v465
  %687 = vmatpush2.msra.mxu0 %v464
  %688 = vmatprep.subr.mxu0 %v457
  %689 = vmatpush2.msra.mxu0 %v456
  %690 = vmatprep.mubr.f32.mxu0 %v327
  %691 = vmatmul.mubr.f32.gmra.mxu0 %v326
  %v692 = vpop.f32.mrf.mxu0
  %v693 = vadd.f32 %v589, %v692
  %v694 = vpop.f32.mrf.mxu0
  %v695 = vadd.f32 %v593, %v694
  %696 = vdwg.mxu0
  %697 = vmatprep.subr.mxu0 %v451
  %698 = vmatpush1.msra.mxu0 %v450
  %699 = vmatprep.subr.mxu0 %v443
  %700 = vmatpush1.msra.mxu0 %v442
  %701 = vmatprep.subr.mxu0 %v435
  %702 = vmatpush1.msra.mxu0 %v434
  %703 = vmatprep.subr.mxu0 %v427
  %704 = vmatpush1.msra.mxu0 %v426
  %705 = vmatprep.subr.mxu0 %v419
  %706 = vmatpush1.msra.mxu0 %v418
  %707 = vmatprep.subr.mxu0 %v411
  %708 = vmatpush1.msra.mxu0 %v410
  %709 = vmatprep.subr.mxu0 %v403
  %710 = vmatpush1.msra.mxu0 %v402
  %711 = vmatprep.subr.mxu0 %v395
  %712 = vmatpush1.msra.mxu0 %v394
  %713 = vmatprep.subr.mxu0 %v387
  %714 = vmatpush1.msra.mxu0 %v386
  %715 = vmatprep.subr.mxu0 %v379
  %716 = vmatpush1.msra.mxu0 %v378
  %717 = vmatprep.subr.mxu0 %v371
  %718 = vmatpush1.msra.mxu0 %v370
  %719 = vmatprep.subr.mxu0 %v363
  %720 = vmatpush1.msra.mxu0 %v362
  %721 = vmatprep.subr.mxu0 %v355
  %722 = vmatpush1.msra.mxu0 %v354
  %723 = vmatprep.subr.mxu0 %v347
  %724 = vmatpush1.msra.mxu0 %v346
  %725 = vmatprep.subr.mxu0 %v339
  %726 = vmatpush1.msra.mxu0 %v338
  %727 = vmatprep.subr.mxu0 %v331
  %728 = vmatpush1.msra.mxu0 %v330
  %729 = vmatprep.subr.mxu0 %v579
  %730 = vmatpush2.msra.mxu0 %v578
  %731 = vmatprep.subr.mxu0 %v571
  %732 = vmatpush2.msra.mxu0 %v570
  %733 = vmatprep.subr.mxu0 %v563
  %734 = vmatpush2.msra.mxu0 %v562
  %735 = vmatprep.subr.mxu0 %v555
  %736 = vmatpush2.msra.mxu0 %v554
  %737 = vmatprep.subr.mxu0 %v547
  %738 = vmatpush2.msra.mxu0 %v546
  %739 = vmatprep.subr.mxu0 %v539
  %740 = vmatpush2.msra.mxu0 %v538
  %741 = vmatprep.subr.mxu0 %v531
  %742 = vmatpush2.msra.mxu0 %v530
  %743 = vmatprep.subr.mxu0 %v523
  %744 = vmatpush2.msra.mxu0 %v522
  %745 = vmatprep.subr.mxu0 %v515
  %746 = vmatpush2.msra.mxu0 %v514
  %747 = vmatprep.subr.mxu0 %v507
  %748 = vmatpush2.msra.mxu0 %v506
  %749 = vmatprep.subr.mxu0 %v499
  %750 = vmatpush2.msra.mxu0 %v498
  %751 = vmatprep.subr.mxu0 %v491
  %752 = vmatpush2.msra.mxu0 %v490
  %753 = vmatprep.subr.mxu0 %v483
  %754 = vmatpush2.msra.mxu0 %v482
  %755 = vmatprep.subr.mxu0 %v475
  %756 = vmatpush2.msra.mxu0 %v474
  %757 = vmatprep.subr.mxu0 %v467
  %758 = vmatpush2.msra.mxu0 %v466
  %759 = vmatprep.subr.mxu0 %v459
  %760 = vmatpush2.msra.mxu0 %v458
  %761 = vmatprep.mubr.f32.mxu0 %v327
  %762 = vmatmul.mubr.f32.gmra.mxu0 %v326
  %v763 = vpop.f32.mrf.mxu0
  %v764 = vadd.f32 %v597, %v763
  %v765 = vpop.f32.mrf.mxu0
  %v766 = vadd.f32 %v601, %v765
  %767 = vdwg.mxu0
  %768 = vmatprep.subr.mxu0 %v453
  %769 = vmatpush1.msra.mxu0 %v452
  %770 = vmatprep.subr.mxu0 %v445
  %771 = vmatpush1.msra.mxu0 %v444
  %772 = vmatprep.subr.mxu0 %v437
  %773 = vmatpush1.msra.mxu0 %v436
  %774 = vmatprep.subr.mxu0 %v429
  %775 = vmatpush1.msra.mxu0 %v428
  %776 = vmatprep.subr.mxu0 %v421
  %777 = vmatpush1.msra.mxu0 %v420
  %778 = vmatprep.subr.mxu0 %v413
  %779 = vmatpush1.msra.mxu0 %v412
  %780 = vmatprep.subr.mxu0 %v405
  %781 = vmatpush1.msra.mxu0 %v404
  %782 = vmatprep.subr.mxu0 %v397
  %783 = vmatpush1.msra.mxu0 %v396
  %784 = vmatprep.subr.mxu0 %v389
  %785 = vmatpush1.msra.mxu0 %v388
  %786 = vmatprep.subr.mxu0 %v381
  %787 = vmatpush1.msra.mxu0 %v380
  %788 = vmatprep.subr.mxu0 %v373
  %789 = vmatpush1.msra.mxu0 %v372
  %790 = vmatprep.subr.mxu0 %v365
  %791 = vmatpush1.msra.mxu0 %v364
  %792 = vmatprep.subr.mxu0 %v357
  %793 = vmatpush1.msra.mxu0 %v356
  %794 = vmatprep.subr.mxu0 %v349
  %795 = vmatpush1.msra.mxu0 %v348
  %796 = vmatprep.subr.mxu0 %v341
  %797 = vmatpush1.msra.mxu0 %v340
  %798 = vmatprep.subr.mxu0 %v333
  %799 = vmatpush1.msra.mxu0 %v332
  %800 = vmatprep.subr.mxu0 %v581
  %801 = vmatpush2.msra.mxu0 %v580
  %802 = vmatprep.subr.mxu0 %v573
  %803 = vmatpush2.msra.mxu0 %v572
  %804 = vmatprep.subr.mxu0 %v565
  %805 = vmatpush2.msra.mxu0 %v564
  %806 = vmatprep.subr.mxu0 %v557
  %807 = vmatpush2.msra.mxu0 %v556
  %808 = vmatprep.subr.mxu0 %v549
  %809 = vmatpush2.msra.mxu0 %v548
  %810 = vmatprep.subr.mxu0 %v541
  %811 = vmatpush2.msra.mxu0 %v540
  %812 = vmatprep.subr.mxu0 %v533
  %813 = vmatpush2.msra.mxu0 %v532
  %814 = vmatprep.subr.mxu0 %v525
  %815 = vmatpush2.msra.mxu0 %v524
  %816 = vmatprep.subr.mxu0 %v517
  %817 = vmatpush2.msra.mxu0 %v516
  %818 = vmatprep.subr.mxu0 %v509
  %819 = vmatpush2.msra.mxu0 %v508
  %820 = vmatprep.subr.mxu0 %v501
  %821 = vmatpush2.msra.mxu0 %v500
  %822 = vmatprep.subr.mxu0 %v493
  %823 = vmatpush2.msra.mxu0 %v492
  %824 = vmatprep.subr.mxu0 %v485
  %825 = vmatpush2.msra.mxu0 %v484
  %826 = vmatprep.subr.mxu0 %v477
  %827 = vmatpush2.msra.mxu0 %v476
  %828 = vmatprep.subr.mxu0 %v469
  %829 = vmatpush2.msra.mxu0 %v468
  %830 = vmatprep.subr.mxu0 %v461
  %831 = vmatpush2.msra.mxu0 %v460
  %832 = vmatprep.mubr.f32.mxu0 %v327
  %833 = vmatmul.mubr.f32.gmra.mxu0 %v326
  %v834 = vpop.f32.mrf.mxu0
  %v835 = vadd.f32 %v605, %v834
  %v836 = vpop.f32.mrf.mxu0
  %v837 = vadd.f32 %v609, %v836
  %838 = vdwg.mxu0
  %839 = vmatprep.subr.mxu0 %v455
  %840 = vmatpush1.msra.mxu0 %v454
  %841 = vmatprep.subr.mxu0 %v447
  %842 = vmatpush1.msra.mxu0 %v446
  %843 = vmatprep.subr.mxu0 %v439
  %844 = vmatpush1.msra.mxu0 %v438
  %845 = vmatprep.subr.mxu0 %v431
  %846 = vmatpush1.msra.mxu0 %v430
  %847 = vmatprep.subr.mxu0 %v423
  %848 = vmatpush1.msra.mxu0 %v422
  %849 = vmatprep.subr.mxu0 %v415
  %850 = vmatpush1.msra.mxu0 %v414
  %851 = vmatprep.subr.mxu0 %v407
  %852 = vmatpush1.msra.mxu0 %v406
  %853 = vmatprep.subr.mxu0 %v399
  %854 = vmatpush1.msra.mxu0 %v398
  %855 = vmatprep.subr.mxu0 %v391
  %856 = vmatpush1.msra.mxu0 %v390
  %857 = vmatprep.subr.mxu0 %v383
  %858 = vmatpush1.msra.mxu0 %v382
  %859 = vmatprep.subr.mxu0 %v375
  %860 = vmatpush1.msra.mxu0 %v374
  %861 = vmatprep.subr.mxu0 %v367
  %862 = vmatpush1.msra.mxu0 %v366
  %863 = vmatprep.subr.mxu0 %v359
  %864 = vmatpush1.msra.mxu0 %v358
  %865 = vmatprep.subr.mxu0 %v351
  %866 = vmatpush1.msra.mxu0 %v350
  %867 = vmatprep.subr.mxu0 %v343
  %868 = vmatpush1.msra.mxu0 %v342
  %869 = vmatprep.subr.mxu0 %v335
  %870 = vmatpush1.msra.mxu0 %v334
  %871 = vmatprep.subr.mxu0 %v583
  %872 = vmatpush2.msra.mxu0 %v582
  %873 = vmatprep.subr.mxu0 %v575
  %874 = vmatpush2.msra.mxu0 %v574
  %875 = vmatprep.subr.mxu0 %v567
  %876 = vmatpush2.msra.mxu0 %v566
  %877 = vmatprep.subr.mxu0 %v559
  %878 = vmatpush2.msra.mxu0 %v558
  %879 = vmatprep.subr.mxu0 %v551
  %880 = vmatpush2.msra.mxu0 %v550
  %881 = vmatprep.subr.mxu0 %v543
  %882 = vmatpush2.msra.mxu0 %v542
  %883 = vmatprep.subr.mxu0 %v535
  %884 = vmatpush2.msra.mxu0 %v534
  %885 = vmatprep.subr.mxu0 %v527
  %886 = vmatpush2.msra.mxu0 %v526
  %887 = vmatprep.subr.mxu0 %v519
  %888 = vmatpush2.msra.mxu0 %v518
  %889 = vmatprep.subr.mxu0 %v511
  %890 = vmatpush2.msra.mxu0 %v510
  %891 = vmatprep.subr.mxu0 %v503
  %892 = vmatpush2.msra.mxu0 %v502
  %893 = vmatprep.subr.mxu0 %v495
  %894 = vmatpush2.msra.mxu0 %v494
  %895 = vmatprep.subr.mxu0 %v487
  %896 = vmatpush2.msra.mxu0 %v486
  %897 = vmatprep.subr.mxu0 %v479
  %898 = vmatpush2.msra.mxu0 %v478
  %899 = vmatprep.subr.mxu0 %v471
  %900 = vmatpush2.msra.mxu0 %v470
  %901 = vmatprep.subr.mxu0 %v463
  %902 = vmatpush2.msra.mxu0 %v462
  %903 = vmatprep.mubr.f32.mxu0 %v327
  %904 = vmatmul.mubr.f32.gmra.mxu0 %v326
  %v905 = vpop.f32.mrf.mxu0
  %v906 = vadd.f32 %v613, %v905
  %v907 = vpop.f32.mrf.mxu0
  %v908 = vadd.f32 %v617, %v907
  %909 = vdwg.mxu0
  %v910 = vmax.f32 %v693, 0.0
  %v911 = vmax.f32 %v695, 0.0
  %v912 = vmax.f32 %v764, 0.0
  %v913 = vmax.f32 %v766, 0.0
  %v914 = vmax.f32 %v835, 0.0
  %v915 = vmax.f32 %v837, 0.0
  %v916 = vmax.f32 %v906, 0.0
  %v917 = vmax.f32 %v908, 0.0
  %v918 = vld [vmem:[%s6] sm:$0xff]
  %v919 = vld [vmem:[%s6 + $0x8] sm:$0xff]
  %v920 = vld [vmem:[%s6 + $0x10] sm:$0xff]
  %v921 = vld [vmem:[%s6 + $0x18] sm:$0xff]
  %v922 = vld [vmem:[%s6 + $0x20] sm:$0xff]
  %v923 = vld [vmem:[%s6 + $0x28] sm:$0xff]
  %v924 = vld [vmem:[%s6 + $0x30] sm:$0xff]
  %v925 = vld [vmem:[%s6 + $0x38] sm:$0xff]
  %v926 = vld [vmem:[%s6 + $0x40] sm:$0xff]
  %v927 = vld [vmem:[%s6 + $0x48] sm:$0xff]
  %v928 = vld [vmem:[%s6 + $0x50] sm:$0xff]
  %v929 = vld [vmem:[%s6 + $0x58] sm:$0xff]
  %v930 = vld [vmem:[%s6 + $0x60] sm:$0xff]
  %v931 = vld [vmem:[%s6 + $0x68] sm:$0xff]
  %v932 = vld [vmem:[%s6 + $0x70] sm:$0xff]
  %v933 = vld [vmem:[%s6 + $0x78] sm:$0xff]
  %v934 = vld [vmem:[%s6 + $0x80] sm:$0xff]
  %v935 = vld [vmem:[%s6 + $0x88] sm:$0xff]
  %v936 = vld [vmem:[%s6 + $0x90] sm:$0xff]
  %v937 = vld [vmem:[%s6 + $0x98] sm:$0xff]
  %v938 = vld [vmem:[%s6 + $0xa0] sm:$0xff]
  %v939 = vld [vmem:[%s6 + $0xa8] sm:$0xff]
  %v940 = vld [vmem:[%s6 + $0xb0] sm:$0xff]
  %v941 = vld [vmem:[%s6 + $0xb8] sm:$0xff]
  %v942 = vld [vmem:[%s6 + $0xc0] sm:$0xff]
  %v943 = vld [vmem:[%s6 + $0xc8] sm:$0xff]
  %v944 = vld [vmem:[%s6 + $0xd0] sm:$0xff]
  %v945 = vld [vmem:[%s6 + $0xd8] sm:$0xff]
  %v946 = vld [vmem:[%s6 + $0xe0] sm:$0xff]
  %v947 = vld [vmem:[%s6 + $0xe8] sm:$0xff]
  %v948 = vld [vmem:[%s6 + $0xf0] sm:$0xff]
  %v949 = vld [vmem:[%s6 + $0xf8] sm:$0xff]
  %v950 = vld [vmem:[%s6 + $0x100] sm:$0xff]
  %v951 = vld [vmem:[%s6 + $0x108] sm:$0xff]
  %v952 = vld [vmem:[%s6 + $0x110] sm:$0xff]
  %v953 = vld [vmem:[%s6 + $0x118] sm:$0xff]
  %v954 = vld [vmem:[%s6 + $0x120] sm:$0xff]
  %v955 = vld [vmem:[%s6 + $0x128] sm:$0xff]
  %v956 = vld [vmem:[%s6 + $0x130] sm:$0xff]
  %v957 = vld [vmem:[%s6 + $0x138] sm:$0xff]
  %v958 = vld [vmem:[%s6 + $0x140] sm:$0xff]
  %v959 = vld [vmem:[%s6 + $0x148] sm:$0xff]
  %v960 = vld [vmem:[%s6 + $0x150] sm:$0xff]
  %v961 = vld [vmem:[%s6 + $0x158] sm:$0xff]
  %v962 = vld [vmem:[%s6 + $0x160] sm:$0xff]
  %v963 = vld [vmem:[%s6 + $0x168] sm:$0xff]
  %v964 = vld [vmem:[%s6 + $0x170] sm:$0xff]
  %v965 = vld [vmem:[%s6 + $0x178] sm:$0xff]
  %v966 = vld [vmem:[%s6 + $0x180] sm:$0xff]
  %v967 = vld [vmem:[%s6 + $0x188] sm:$0xff]
  %v968 = vld [vmem:[%s6 + $0x190] sm:$0xff]
  %v969 = vld [vmem:[%s6 + $0x198] sm:$0xff]
  %v970 = vld [vmem:[%s6 + $0x1a0] sm:$0xff]
  %v971 = vld [vmem:[%s6 + $0x1a8] sm:$0xff]
  %v972 = vld [vmem:[%s6 + $0x1b0] sm:$0xff]
  %v973 = vld [vmem:[%s6 + $0x1b8] sm:$0xff]
  %v974 = vld [vmem:[%s6 + $0x1c0] sm:$0xff]
  %v975 = vld [vmem:[%s6 + $0x1c8] sm:$0xff]
  %v976 = vld [vmem:[%s6 + $0x1d0] sm:$0xff]
  %v977 = vld [vmem:[%s6 + $0x1d8] sm:$0xff]
  %v978 = vld [vmem:[%s6 + $0x1e0] sm:$0xff]
  %v979 = vld [vmem:[%s6 + $0x1e8] sm:$0xff]
  %v980 = vld [vmem:[%s6 + $0x1f0] sm:$0xff]
  %v981 = vld [vmem:[%s6 + $0x1f8] sm:$0xff]
  %v982 = vld [vmem:[%s6 + $0x200] sm:$0xff]
  %v983 = vld [vmem:[%s6 + $0x208] sm:$0xff]
  %v984 = vld [vmem:[%s6 + $0x210] sm:$0xff]
  %v985 = vld [vmem:[%s6 + $0x218] sm:$0xff]
  %v986 = vld [vmem:[%s6 + $0x220] sm:$0xff]
  %v987 = vld [vmem:[%s6 + $0x228] sm:$0xff]
  %v988 = vld [vmem:[%s6 + $0x230] sm:$0xff]
  %v989 = vld [vmem:[%s6 + $0x238] sm:$0xff]
  %v990 = vld [vmem:[%s6 + $0x240] sm:$0xff]
  %v991 = vld [vmem:[%s6 + $0x248] sm:$0xff]
  %v992 = vld [vmem:[%s6 + $0x250] sm:$0xff]
  %v993 = vld [vmem:[%s6 + $0x258] sm:$0xff]
  %v994 = vld [vmem:[%s6 + $0x260] sm:$0xff]
  %v995 = vld [vmem:[%s6 + $0x268] sm:$0xff]
  %v996 = vld [vmem:[%s6 + $0x270] sm:$0xff]
  %v997 = vld [vmem:[%s6 + $0x278] sm:$0xff]
  %v998 = vld [vmem:[%s6 + $0x280] sm:$0xff]
  %v999 = vld [vmem:[%s6 + $0x288] sm:$0xff]
  %v1000 = vld [vmem:[%s6 + $0x290] sm:$0xff]
  %v1001 = vld [vmem:[%s6 + $0x298] sm:$0xff]
  %v1002 = vld [vmem:[%s6 + $0x2a0] sm:$0xff]
  %v1003 = vld [vmem:[%s6 + $0x2a8] sm:$0xff]
  %v1004 = vld [vmem:[%s6 + $0x2b0] sm:$0xff]
  %v1005 = vld [vmem:[%s6 + $0x2b8] sm:$0xff]
  %v1006 = vld [vmem:[%s6 + $0x2c0] sm:$0xff]
  %v1007 = vld [vmem:[%s6 + $0x2c8] sm:$0xff]
  %v1008 = vld [vmem:[%s6 + $0x2d0] sm:$0xff]
  %v1009 = vld [vmem:[%s6 + $0x2d8] sm:$0xff]
  %v1010 = vld [vmem:[%s6 + $0x2e0] sm:$0xff]
  %v1011 = vld [vmem:[%s6 + $0x2e8] sm:$0xff]
  %v1012 = vld [vmem:[%s6 + $0x2f0] sm:$0xff]
  %v1013 = vld [vmem:[%s6 + $0x2f8] sm:$0xff]
  %v1014 = vld [vmem:[%s6 + $0x300] sm:$0xff]
  %v1015 = vld [vmem:[%s6 + $0x308] sm:$0xff]
  %v1016 = vld [vmem:[%s6 + $0x310] sm:$0xff]
  %v1017 = vld [vmem:[%s6 + $0x318] sm:$0xff]
  %v1018 = vld [vmem:[%s6 + $0x320] sm:$0xff]
  %v1019 = vld [vmem:[%s6 + $0x328] sm:$0xff]
  %v1020 = vld [vmem:[%s6 + $0x330] sm:$0xff]
  %v1021 = vld [vmem:[%s6 + $0x338] sm:$0xff]
  %v1022 = vld [vmem:[%s6 + $0x340] sm:$0xff]
  %v1023 = vld [vmem:[%s6 + $0x348] sm:$0xff]
  %v1024 = vld [vmem:[%s6 + $0x350] sm:$0xff]
  %v1025 = vld [vmem:[%s6 + $0x358] sm:$0xff]
  %v1026 = vld [vmem:[%s6 + $0x360] sm:$0xff]
  %v1027 = vld [vmem:[%s6 + $0x368] sm:$0xff]
  %v1028 = vld [vmem:[%s6 + $0x370] sm:$0xff]
  %v1029 = vld [vmem:[%s6 + $0x378] sm:$0xff]
  %v1030 = vld [vmem:[%s6 + $0x380] sm:$0xff]
  %v1031 = vld [vmem:[%s6 + $0x388] sm:$0xff]
  %v1032 = vld [vmem:[%s6 + $0x390] sm:$0xff]
  %v1033 = vld [vmem:[%s6 + $0x398] sm:$0xff]
  %v1034 = vld [vmem:[%s6 + $0x3a0] sm:$0xff]
  %v1035 = vld [vmem:[%s6 + $0x3a8] sm:$0xff]
  %v1036 = vld [vmem:[%s6 + $0x3b0] sm:$0xff]
  %v1037 = vld [vmem:[%s6 + $0x3b8] sm:$0xff]
  %v1038 = vld [vmem:[%s6 + $0x3c0] sm:$0xff]
  %v1039 = vld [vmem:[%s6 + $0x3c8] sm:$0xff]
  %v1040 = vld [vmem:[%s6 + $0x3d0] sm:$0xff]
  %v1041 = vld [vmem:[%s6 + $0x3d8] sm:$0xff]
  %v1042 = vld [vmem:[%s6 + $0x3e0] sm:$0xff]
  %v1043 = vld [vmem:[%s6 + $0x3e8] sm:$0xff]
  %v1044 = vld [vmem:[%s6 + $0x3f0] sm:$0xff]
  %v1045 = vld [vmem:[%s6 + $0x3f8] sm:$0xff]
  %v1046 = vld [vmem:[%s6 + $0x400] sm:$0xff]
  %v1047 = vld [vmem:[%s6 + $0x408] sm:$0xff]
  %v1048 = vld [vmem:[%s6 + $0x410] sm:$0xff]
  %v1049 = vld [vmem:[%s6 + $0x418] sm:$0xff]
  %v1050 = vld [vmem:[%s6 + $0x420] sm:$0xff]
  %v1051 = vld [vmem:[%s6 + $0x428] sm:$0xff]
  %v1052 = vld [vmem:[%s6 + $0x430] sm:$0xff]
  %v1053 = vld [vmem:[%s6 + $0x438] sm:$0xff]
  %v1054 = vld [vmem:[%s6 + $0x440] sm:$0xff]
  %v1055 = vld [vmem:[%s6 + $0x448] sm:$0xff]
  %v1056 = vld [vmem:[%s6 + $0x450] sm:$0xff]
  %v1057 = vld [vmem:[%s6 + $0x458] sm:$0xff]
  %v1058 = vld [vmem:[%s6 + $0x460] sm:$0xff]
  %v1059 = vld [vmem:[%s6 + $0x468] sm:$0xff]
  %v1060 = vld [vmem:[%s6 + $0x470] sm:$0xff]
  %v1061 = vld [vmem:[%s6 + $0x478] sm:$0xff]
  %v1062 = vld [vmem:[%s6 + $0x480] sm:$0xff]
  %v1063 = vld [vmem:[%s6 + $0x488] sm:$0xff]
  %v1064 = vld [vmem:[%s6 + $0x490] sm:$0xff]
  %v1065 = vld [vmem:[%s6 + $0x498] sm:$0xff]
  %v1066 = vld [vmem:[%s6 + $0x4a0] sm:$0xff]
  %v1067 = vld [vmem:[%s6 + $0x4a8] sm:$0xff]
  %v1068 = vld [vmem:[%s6 + $0x4b0] sm:$0xff]
  %v1069 = vld [vmem:[%s6 + $0x4b8] sm:$0xff]
  %v1070 = vld [vmem:[%s6 + $0x4c0] sm:$0xff]
  %v1071 = vld [vmem:[%s6 + $0x4c8] sm:$0xff]
  %v1072 = vld [vmem:[%s6 + $0x4d0] sm:$0xff]
  %v1073 = vld [vmem:[%s6 + $0x4d8] sm:$0xff]
  %v1074 = vld [vmem:[%s6 + $0x4e0] sm:$0xff]
  %v1075 = vld [vmem:[%s6 + $0x4e8] sm:$0xff]
  %v1076 = vld [vmem:[%s6 + $0x4f0] sm:$0xff]
  %v1077 = vld [vmem:[%s6 + $0x4f8] sm:$0xff]
  %v1078 = vld [vmem:[%s6 + $0x500] sm:$0xff]
  %v1079 = vld [vmem:[%s6 + $0x508] sm:$0xff]
  %v1080 = vld [vmem:[%s6 + $0x510] sm:$0xff]
  %v1081 = vld [vmem:[%s6 + $0x518] sm:$0xff]
  %v1082 = vld [vmem:[%s6 + $0x520] sm:$0xff]
  %v1083 = vld [vmem:[%s6 + $0x528] sm:$0xff]
  %v1084 = vld [vmem:[%s6 + $0x530] sm:$0xff]
  %v1085 = vld [vmem:[%s6 + $0x538] sm:$0xff]
  %v1086 = vld [vmem:[%s6 + $0x540] sm:$0xff]
  %v1087 = vld [vmem:[%s6 + $0x548] sm:$0xff]
  %v1088 = vld [vmem:[%s6 + $0x550] sm:$0xff]
  %v1089 = vld [vmem:[%s6 + $0x558] sm:$0xff]
  %v1090 = vld [vmem:[%s6 + $0x560] sm:$0xff]
  %v1091 = vld [vmem:[%s6 + $0x568] sm:$0xff]
  %v1092 = vld [vmem:[%s6 + $0x570] sm:$0xff]
  %v1093 = vld [vmem:[%s6 + $0x578] sm:$0xff]
  %v1094 = vld [vmem:[%s6 + $0x580] sm:$0xff]
  %v1095 = vld [vmem:[%s6 + $0x588] sm:$0xff]
  %v1096 = vld [vmem:[%s6 + $0x590] sm:$0xff]
  %v1097 = vld [vmem:[%s6 + $0x598] sm:$0xff]
  %v1098 = vld [vmem:[%s6 + $0x5a0] sm:$0xff]
  %v1099 = vld [vmem:[%s6 + $0x5a8] sm:$0xff]
  %v1100 = vld [vmem:[%s6 + $0x5b0] sm:$0xff]
  %v1101 = vld [vmem:[%s6 + $0x5b8] sm:$0xff]
  %v1102 = vld [vmem:[%s6 + $0x5c0] sm:$0xff]
  %v1103 = vld [vmem:[%s6 + $0x5c8] sm:$0xff]
  %v1104 = vld [vmem:[%s6 + $0x5d0] sm:$0xff]
  %v1105 = vld [vmem:[%s6 + $0x5d8] sm:$0xff]
  %v1106 = vld [vmem:[%s6 + $0x5e0] sm:$0xff]
  %v1107 = vld [vmem:[%s6 + $0x5e8] sm:$0xff]
  %v1108 = vld [vmem:[%s6 + $0x5f0] sm:$0xff]
  %v1109 = vld [vmem:[%s6 + $0x5f8] sm:$0xff]
  %v1110 = vld [vmem:[%s6 + $0x600] sm:$0xff]
  %v1111 = vld [vmem:[%s6 + $0x608] sm:$0xff]
  %v1112 = vld [vmem:[%s6 + $0x610] sm:$0xff]
  %v1113 = vld [vmem:[%s6 + $0x618] sm:$0xff]
  %v1114 = vld [vmem:[%s6 + $0x620] sm:$0xff]
  %v1115 = vld [vmem:[%s6 + $0x628] sm:$0xff]
  %v1116 = vld [vmem:[%s6 + $0x630] sm:$0xff]
  %v1117 = vld [vmem:[%s6 + $0x638] sm:$0xff]
  %v1118 = vld [vmem:[%s6 + $0x640] sm:$0xff]
  %v1119 = vld [vmem:[%s6 + $0x648] sm:$0xff]
  %v1120 = vld [vmem:[%s6 + $0x650] sm:$0xff]
  %v1121 = vld [vmem:[%s6 + $0x658] sm:$0xff]
  %v1122 = vld [vmem:[%s6 + $0x660] sm:$0xff]
  %v1123 = vld [vmem:[%s6 + $0x668] sm:$0xff]
  %v1124 = vld [vmem:[%s6 + $0x670] sm:$0xff]
  %v1125 = vld [vmem:[%s6 + $0x678] sm:$0xff]
  %v1126 = vld [vmem:[%s6 + $0x680] sm:$0xff]
  %v1127 = vld [vmem:[%s6 + $0x688] sm:$0xff]
  %v1128 = vld [vmem:[%s6 + $0x690] sm:$0xff]
  %v1129 = vld [vmem:[%s6 + $0x698] sm:$0xff]
  %v1130 = vld [vmem:[%s6 + $0x6a0] sm:$0xff]
  %v1131 = vld [vmem:[%s6 + $0x6a8] sm:$0xff]
  %v1132 = vld [vmem:[%s6 + $0x6b0] sm:$0xff]
  %v1133 = vld [vmem:[%s6 + $0x6b8] sm:$0xff]
  %v1134 = vld [vmem:[%s6 + $0x6c0] sm:$0xff]
  %v1135 = vld [vmem:[%s6 + $0x6c8] sm:$0xff]
  %v1136 = vld [vmem:[%s6 + $0x6d0] sm:$0xff]
  %v1137 = vld [vmem:[%s6 + $0x6d8] sm:$0xff]
  %v1138 = vld [vmem:[%s6 + $0x6e0] sm:$0xff]
  %v1139 = vld [vmem:[%s6 + $0x6e8] sm:$0xff]
  %v1140 = vld [vmem:[%s6 + $0x6f0] sm:$0xff]
  %v1141 = vld [vmem:[%s6 + $0x6f8] sm:$0xff]
  %v1142 = vld [vmem:[%s6 + $0x700] sm:$0xff]
  %v1143 = vld [vmem:[%s6 + $0x708] sm:$0xff]
  %v1144 = vld [vmem:[%s6 + $0x710] sm:$0xff]
  %v1145 = vld [vmem:[%s6 + $0x718] sm:$0xff]
  %v1146 = vld [vmem:[%s6 + $0x720] sm:$0xff]
  %v1147 = vld [vmem:[%s6 + $0x728] sm:$0xff]
  %v1148 = vld [vmem:[%s6 + $0x730] sm:$0xff]
  %v1149 = vld [vmem:[%s6 + $0x738] sm:$0xff]
  %v1150 = vld [vmem:[%s6 + $0x740] sm:$0xff]
  %v1151 = vld [vmem:[%s6 + $0x748] sm:$0xff]
  %v1152 = vld [vmem:[%s6 + $0x750] sm:$0xff]
  %v1153 = vld [vmem:[%s6 + $0x758] sm:$0xff]
  %v1154 = vld [vmem:[%s6 + $0x760] sm:$0xff]
  %v1155 = vld [vmem:[%s6 + $0x768] sm:$0xff]
  %v1156 = vld [vmem:[%s6 + $0x770] sm:$0xff]
  %v1157 = vld [vmem:[%s6 + $0x778] sm:$0xff]
  %v1158 = vld [vmem:[%s6 + $0x780] sm:$0xff]
  %v1159 = vld [vmem:[%s6 + $0x788] sm:$0xff]
  %v1160 = vld [vmem:[%s6 + $0x790] sm:$0xff]
  %v1161 = vld [vmem:[%s6 + $0x798] sm:$0xff]
  %v1162 = vld [vmem:[%s6 + $0x7a0] sm:$0xff]
  %v1163 = vld [vmem:[%s6 + $0x7a8] sm:$0xff]
  %v1164 = vld [vmem:[%s6 + $0x7b0] sm:$0xff]
  %v1165 = vld [vmem:[%s6 + $0x7b8] sm:$0xff]
  %v1166 = vld [vmem:[%s6 + $0x7c0] sm:$0xff]
  %v1167 = vld [vmem:[%s6 + $0x7c8] sm:$0xff]
  %v1168 = vld [vmem:[%s6 + $0x7d0] sm:$0xff]
  %v1169 = vld [vmem:[%s6 + $0x7d8] sm:$0xff]
  %v1170 = vld [vmem:[%s6 + $0x7e0] sm:$0xff]
  %v1171 = vld [vmem:[%s6 + $0x7e8] sm:$0xff]
  %v1172 = vld [vmem:[%s6 + $0x7f0] sm:$0xff]
  %v1173 = vld [vmem:[%s6 + $0x7f8] sm:$0xff]
  %v1174 = vld [vmem:[%s11] sm:$0x3]
  %v1176 = vlaneseq
  %v1177 = vshrl.u32 %v1176, 7
  %v1178 = vsub.s32 0, %v1177
  %v1179 = vrot.slane %v1174, %v1178
  %v1180 = vlaneseq
  %v1181 = vshrl.u32 %v1180, 7
  %v1182 = vsub.s32 1, %v1181
  %v1183 = vrot.slane %v1174, %v1182
  %1186 = vmatprep.subr.mxu0 %v949
  %1187 = vmatpush1.msra.mxu0 %v948
  %1188 = vmatprep.subr.mxu0 %v947
  %1189 = vmatpush1.msra.mxu0 %v946
  %1190 = vmatprep.subr.mxu0 %v945
  %1191 = vmatpush1.msra.mxu0 %v944
  %1192 = vmatprep.subr.mxu0 %v943
  %1193 = vmatpush1.msra.mxu0 %v942
  %1194 = vmatprep.subr.mxu0 %v941
  %1195 = vmatpush1.msra.mxu0 %v940
  %1196 = vmatprep.subr.mxu0 %v939
  %1197 = vmatpush1.msra.mxu0 %v938
  %1198 = vmatprep.subr.mxu0 %v937
  %1199 = vmatpush1.msra.mxu0 %v936
  %1200 = vmatprep.subr.mxu0 %v935
  %1201 = vmatpush1.msra.mxu0 %v934
  %1202 = vmatprep.subr.mxu0 %v933
  %1203 = vmatpush1.msra.mxu0 %v932
  %1204 = vmatprep.subr.mxu0 %v931
  %1205 = vmatpush1.msra.mxu0 %v930
  %1206 = vmatprep.subr.mxu0 %v929
  %1207 = vmatpush1.msra.mxu0 %v928
  %1208 = vmatprep.subr.mxu0 %v927
  %1209 = vmatpush1.msra.mxu0 %v926
  %1210 = vmatprep.subr.mxu0 %v925
  %1211 = vmatpush1.msra.mxu0 %v924
  %1212 = vmatprep.subr.mxu0 %v923
  %1213 = vmatpush1.msra.mxu0 %v922
  %1214 = vmatprep.subr.mxu0 %v921
  %1215 = vmatpush1.msra.mxu0 %v920
  %1216 = vmatprep.subr.mxu0 %v919
  %1217 = vmatpush1.msra.mxu0 %v918
  %1218 = vmatprep.subr.mxu0 %v981
  %1219 = vmatpush2.msra.mxu0 %v980
  %1220 = vmatprep.subr.mxu0 %v979
  %1221 = vmatpush2.msra.mxu0 %v978
  %1222 = vmatprep.subr.mxu0 %v977
  %1223 = vmatpush2.msra.mxu0 %v976
  %1224 = vmatprep.subr.mxu0 %v975
  %1225 = vmatpush2.msra.mxu0 %v974
  %1226 = vmatprep.subr.mxu0 %v973
  %1227 = vmatpush2.msra.mxu0 %v972
  %1228 = vmatprep.subr.mxu0 %v971
  %1229 = vmatpush2.msra.mxu0 %v970
  %1230 = vmatprep.subr.mxu0 %v969
  %1231 = vmatpush2.msra.mxu0 %v968
  %1232 = vmatprep.subr.mxu0 %v967
  %1233 = vmatpush2.msra.mxu0 %v966
  %1234 = vmatprep.subr.mxu0 %v965
  %1235 = vmatpush2.msra.mxu0 %v964
  %1236 = vmatprep.subr.mxu0 %v963
  %1237 = vmatpush2.msra.mxu0 %v962
  %1238 = vmatprep.subr.mxu0 %v961
  %1239 = vmatpush2.msra.mxu0 %v960
  %1240 = vmatprep.subr.mxu0 %v959
  %1241 = vmatpush2.msra.mxu0 %v958
  %1242 = vmatprep.subr.mxu0 %v957
  %1243 = vmatpush2.msra.mxu0 %v956
  %1244 = vmatprep.subr.mxu0 %v955
  %1245 = vmatpush2.msra.mxu0 %v954
  %1246 = vmatprep.subr.mxu0 %v953
  %1247 = vmatpush2.msra.mxu0 %v952
  %1248 = vmatprep.subr.mxu0 %v951
  %1249 = vmatpush2.msra.mxu0 %v950
  %1250 = vmatprep.mubr.f32.mxu0 %v911
  %1251 = vmatmul.mubr.f32.gmra.mxu0 %v910
  %v1252 = vpop.f32.mrf.mxu0
  %v1253 = vadd.f32 %v1179, %v1252
  %v1254 = vpop.f32.mrf.mxu0
  %v1255 = vadd.f32 %v1183, %v1254
  %1256 = vdwg.mxu0
  %1257 = vmatprep.subr.mxu0 %v1013
  %1258 = vmatpush1.msra.mxu0 %v1012
  %1259 = vmatprep.subr.mxu0 %v1011
  %1260 = vmatpush1.msra.mxu0 %v1010
  %1261 = vmatprep.subr.mxu0 %v1009
  %1262 = vmatpush1.msra.mxu0 %v1008
  %1263 = vmatprep.subr.mxu0 %v1007
  %1264 = vmatpush1.msra.mxu0 %v1006
  %1265 = vmatprep.subr.mxu0 %v1005
  %1266 = vmatpush1.msra.mxu0 %v1004
  %1267 = vmatprep.subr.mxu0 %v1003
  %1268 = vmatpush1.msra.mxu0 %v1002
  %1269 = vmatprep.subr.mxu0 %v1001
  %1270 = vmatpush1.msra.mxu0 %v1000
  %1271 = vmatprep.subr.mxu0 %v999
  %1272 = vmatpush1.msra.mxu0 %v998
  %1273 = vmatprep.subr.mxu0 %v997
  %1274 = vmatpush1.msra.mxu0 %v996
  %1275 = vmatprep.subr.mxu0 %v995
  %1276 = vmatpush1.msra.mxu0 %v994
  %1277 = vmatprep.subr.mxu0 %v993
  %1278 = vmatpush1.msra.mxu0 %v992
  %1279 = vmatprep.subr.mxu0 %v991
  %1280 = vmatpush1.msra.mxu0 %v990
  %1281 = vmatprep.subr.mxu0 %v989
  %1282 = vmatpush1.msra.mxu0 %v988
  %1283 = vmatprep.subr.mxu0 %v987
  %1284 = vmatpush1.msra.mxu0 %v986
  %1285 = vmatprep.subr.mxu0 %v985
  %1286 = vmatpush1.msra.mxu0 %v984
  %1287 = vmatprep.subr.mxu0 %v983
  %1288 = vmatpush1.msra.mxu0 %v982
  %1289 = vmatprep.subr.mxu0 %v1045
  %1290 = vmatpush2.msra.mxu0 %v1044
  %1291 = vmatprep.subr.mxu0 %v1043
  %1292 = vmatpush2.msra.mxu0 %v1042
  %1293 = vmatprep.subr.mxu0 %v1041
  %1294 = vmatpush2.msra.mxu0 %v1040
  %1295 = vmatprep.subr.mxu0 %v1039
  %1296 = vmatpush2.msra.mxu0 %v1038
  %1297 = vmatprep.subr.mxu0 %v1037
  %1298 = vmatpush2.msra.mxu0 %v1036
  %1299 = vmatprep.subr.mxu0 %v1035
  %1300 = vmatpush2.msra.mxu0 %v1034
  %1301 = vmatprep.subr.mxu0 %v1033
  %1302 = vmatpush2.msra.mxu0 %v1032
  %1303 = vmatprep.subr.mxu0 %v1031
  %1304 = vmatpush2.msra.mxu0 %v1030
  %1305 = vmatprep.subr.mxu0 %v1029
  %1306 = vmatpush2.msra.mxu0 %v1028
  %1307 = vmatprep.subr.mxu0 %v1027
  %1308 = vmatpush2.msra.mxu0 %v1026
  %1309 = vmatprep.subr.mxu0 %v1025
  %1310 = vmatpush2.msra.mxu0 %v1024
  %1311 = vmatprep.subr.mxu0 %v1023
  %1312 = vmatpush2.msra.mxu0 %v1022
  %1313 = vmatprep.subr.mxu0 %v1021
  %1314 = vmatpush2.msra.mxu0 %v1020
  %1315 = vmatprep.subr.mxu0 %v1019
  %1316 = vmatpush2.msra.mxu0 %v1018
  %1317 = vmatprep.subr.mxu0 %v1017
  %1318 = vmatpush2.msra.mxu0 %v1016
  %1319 = vmatprep.subr.mxu0 %v1015
  %1320 = vmatpush2.msra.mxu0 %v1014
  %1321 = vmatprep.mubr.f32.mxu0 %v913
  %1322 = vmatmul.mubr.f32.gmra.mxu0 %v912
  %v1323 = vpop.f32.mrf.mxu0
  %v1324 = vadd.f32 %v1253, %v1323
  %v1325 = vpop.f32.mrf.mxu0
  %v1326 = vadd.f32 %v1255, %v1325
  %1327 = vdwg.mxu0
  %1328 = vmatprep.subr.mxu0 %v1077
  %1329 = vmatpush1.msra.mxu0 %v1076
  %1330 = vmatprep.subr.mxu0 %v1075
  %1331 = vmatpush1.msra.mxu0 %v1074
  %1332 = vmatprep.subr.mxu0 %v1073
  %1333 = vmatpush1.msra.mxu0 %v1072
  %1334 = vmatprep.subr.mxu0 %v1071
  %1335 = vmatpush1.msra.mxu0 %v1070
  %1336 = vmatprep.subr.mxu0 %v1069
  %1337 = vmatpush1.msra.mxu0 %v1068
  %1338 = vmatprep.subr.mxu0 %v1067
  %1339 = vmatpush1.msra.mxu0 %v1066
  %1340 = vmatprep.subr.mxu0 %v1065
  %1341 = vmatpush1.msra.mxu0 %v1064
  %1342 = vmatprep.subr.mxu0 %v1063
  %1343 = vmatpush1.msra.mxu0 %v1062
  %1344 = vmatprep.subr.mxu0 %v1061
  %1345 = vmatpush1.msra.mxu0 %v1060
  %1346 = vmatprep.subr.mxu0 %v1059
  %1347 = vmatpush1.msra.mxu0 %v1058
  %1348 = vmatprep.subr.mxu0 %v1057
  %1349 = vmatpush1.msra.mxu0 %v1056
  %1350 = vmatprep.subr.mxu0 %v1055
  %1351 = vmatpush1.msra.mxu0 %v1054
  %1352 = vmatprep.subr.mxu0 %v1053
  %1353 = vmatpush1.msra.mxu0 %v1052
  %1354 = vmatprep.subr.mxu0 %v1051
  %1355 = vmatpush1.msra.mxu0 %v1050
  %1356 = vmatprep.subr.mxu0 %v1049
  %1357 = vmatpush1.msra.mxu0 %v1048
  %1358 = vmatprep.subr.mxu0 %v1047
  %1359 = vmatpush1.msra.mxu0 %v1046
  %1360 = vmatprep.subr.mxu0 %v1109
  %1361 = vmatpush2.msra.mxu0 %v1108
  %1362 = vmatprep.subr.mxu0 %v1107
  %1363 = vmatpush2.msra.mxu0 %v1106
  %1364 = vmatprep.subr.mxu0 %v1105
  %1365 = vmatpush2.msra.mxu0 %v1104
  %1366 = vmatprep.subr.mxu0 %v1103
  %1367 = vmatpush2.msra.mxu0 %v1102
  %1368 = vmatprep.subr.mxu0 %v1101
  %1369 = vmatpush2.msra.mxu0 %v1100
  %1370 = vmatprep.subr.mxu0 %v1099
  %1371 = vmatpush2.msra.mxu0 %v1098
  %1372 = vmatprep.subr.mxu0 %v1097
  %1373 = vmatpush2.msra.mxu0 %v1096
  %1374 = vmatprep.subr.mxu0 %v1095
  %1375 = vmatpush2.msra.mxu0 %v1094
  %1376 = vmatprep.subr.mxu0 %v1093
  %1377 = vmatpush2.msra.mxu0 %v1092
  %1378 = vmatprep.subr.mxu0 %v1091
  %1379 = vmatpush2.msra.mxu0 %v1090
  %1380 = vmatprep.subr.mxu0 %v1089
  %1381 = vmatpush2.msra.mxu0 %v1088
  %1382 = vmatprep.subr.mxu0 %v1087
  %1383 = vmatpush2.msra.mxu0 %v1086
  %1384 = vmatprep.subr.mxu0 %v1085
  %1385 = vmatpush2.msra.mxu0 %v1084
  %1386 = vmatprep.subr.mxu0 %v1083
  %1387 = vmatpush2.msra.mxu0 %v1082
  %1388 = vmatprep.subr.mxu0 %v1081
  %1389 = vmatpush2.msra.mxu0 %v1080
  %1390 = vmatprep.subr.mxu0 %v1079
  %1391 = vmatpush2.msra.mxu0 %v1078
  %1392 = vmatprep.mubr.f32.mxu0 %v915
  %1393 = vmatmul.mubr.f32.gmra.mxu0 %v914
  %v1394 = vpop.f32.mrf.mxu0
  %v1395 = vadd.f32 %v1324, %v1394
  %v1396 = vpop.f32.mrf.mxu0
  %v1397 = vadd.f32 %v1326, %v1396
  %1398 = vdwg.mxu0
  %1399 = vmatprep.subr.mxu0 %v1141
  %1400 = vmatpush1.msra.mxu0 %v1140
  %1401 = vmatprep.subr.mxu0 %v1139
  %1402 = vmatpush1.msra.mxu0 %v1138
  %1403 = vmatprep.subr.mxu0 %v1137
  %1404 = vmatpush1.msra.mxu0 %v1136
  %1405 = vmatprep.subr.mxu0 %v1135
  %1406 = vmatpush1.msra.mxu0 %v1134
  %1407 = vmatprep.subr.mxu0 %v1133
  %1408 = vmatpush1.msra.mxu0 %v1132
  %1409 = vmatprep.subr.mxu0 %v1131
  %1410 = vmatpush1.msra.mxu0 %v1130
  %1411 = vmatprep.subr.mxu0 %v1129
  %1412 = vmatpush1.msra.mxu0 %v1128
  %1413 = vmatprep.subr.mxu0 %v1127
  %1414 = vmatpush1.msra.mxu0 %v1126
  %1415 = vmatprep.subr.mxu0 %v1125
  %1416 = vmatpush1.msra.mxu0 %v1124
  %1417 = vmatprep.subr.mxu0 %v1123
  %1418 = vmatpush1.msra.mxu0 %v1122
  %1419 = vmatprep.subr.mxu0 %v1121
  %1420 = vmatpush1.msra.mxu0 %v1120
  %1421 = vmatprep.subr.mxu0 %v1119
  %1422 = vmatpush1.msra.mxu0 %v1118
  %1423 = vmatprep.subr.mxu0 %v1117
  %1424 = vmatpush1.msra.mxu0 %v1116
  %1425 = vmatprep.subr.mxu0 %v1115
  %1426 = vmatpush1.msra.mxu0 %v1114
  %1427 = vmatprep.subr.mxu0 %v1113
  %1428 = vmatpush1.msra.mxu0 %v1112
  %1429 = vmatprep.subr.mxu0 %v1111
  %1430 = vmatpush1.msra.mxu0 %v1110
  %1431 = vmatprep.subr.mxu0 %v1173
  %1432 = vmatpush2.msra.mxu0 %v1172
  %1433 = vmatprep.subr.mxu0 %v1171
  %1434 = vmatpush2.msra.mxu0 %v1170
  %1435 = vmatprep.subr.mxu0 %v1169
  %1436 = vmatpush2.msra.mxu0 %v1168
  %1437 = vmatprep.subr.mxu0 %v1167
  %1438 = vmatpush2.msra.mxu0 %v1166
  %1439 = vmatprep.subr.mxu0 %v1165
  %1440 = vmatpush2.msra.mxu0 %v1164
  %1441 = vmatprep.subr.mxu0 %v1163
  %1442 = vmatpush2.msra.mxu0 %v1162
  %1443 = vmatprep.subr.mxu0 %v1161
  %1444 = vmatpush2.msra.mxu0 %v1160
  %1445 = vmatprep.subr.mxu0 %v1159
  %1446 = vmatpush2.msra.mxu0 %v1158
  %1447 = vmatprep.subr.mxu0 %v1157
  %1448 = vmatpush2.msra.mxu0 %v1156
  %1449 = vmatprep.subr.mxu0 %v1155
  %1450 = vmatpush2.msra.mxu0 %v1154
  %1451 = vmatprep.subr.mxu0 %v1153
  %1452 = vmatpush2.msra.mxu0 %v1152
  %1453 = vmatprep.subr.mxu0 %v1151
  %1454 = vmatpush2.msra.mxu0 %v1150
  %1455 = vmatprep.subr.mxu0 %v1149
  %1456 = vmatpush2.msra.mxu0 %v1148
  %1457 = vmatprep.subr.mxu0 %v1147
  %1458 = vmatpush2.msra.mxu0 %v1146
  %1459 = vmatprep.subr.mxu0 %v1145
  %1460 = vmatpush2.msra.mxu0 %v1144
  %1461 = vmatprep.subr.mxu0 %v1143
  %1462 = vmatpush2.msra.mxu0 %v1142
  %1463 = vmatprep.mubr.f32.mxu0 %v917
  %1464 = vmatmul.mubr.f32.gmra.mxu0 %v916
  %v1465 = vpop.f32.mrf.mxu0
  %v1466 = vadd.f32 %v1395, %v1465
  %v1467 = vpop.f32.mrf.mxu0
  %v1468 = vadd.f32 %v1397, %v1467
  %1469 = vdwg.mxu0
  %v1470 = vld [vmem:[%s1] sm:$0xff]
  %v1471 = vmax.f32 %v1466, 0.0
  %v1472 = vmax.f32 %v1468, 0.0
  %v1473 = vand.u32 2147483647, %v1466
  %v1474 = vand.u32 2147483647, %v1468
  %v1475 = vsub.f32 0.0, %v1473
  %v1476 = vsub.f32 0.0, %v1474
  %v1477 = vmul.f32 %v1475, 1.442695
  %v1478 = vpow.pop %v1477
  %v1479 = vmul.f32 %v1476, 1.442695
  %v1480 = vpow.pop %v1479
  %v1481 = vadd.f32 %v1478, 1.0
  %v1482 = vlog2.pop %v1481
  %v1483 = vmul.f32 %v1482, 0.6931472
  %v1484 = vmul.f32 -0.5, %v1478
  %v1485 = vadd.f32 %v1484, 1.0
  %v1486 = vmul.f32 %v1485, %v1478
  %v1487 = vand.u32 2147483647, %v1478
  %vm1488 = vcmp.lt.f32.partialorder %v1487, 0.0004427343
  %v1489 = vsel %vm1488, %v1486, %v1483
  %v1490 = vadd.f32 %v1480, 1.0
  %v1491 = vlog2.pop %v1490
  %v1492 = vmul.f32 %v1491, 0.6931472
  %v1493 = vmul.f32 -0.5, %v1480
  %v1494 = vadd.f32 %v1493, 1.0
  %v1495 = vmul.f32 %v1494, %v1480
  %v1496 = vand.u32 2147483647, %v1480
  %vm1497 = vcmp.lt.f32.partialorder %v1496, 0.0004427343
  %v1498 = vsel %vm1497, %v1495, %v1492
  %v1499 = vadd.f32 %v1471, %v1489
  %v1500 = vadd.f32 %v1472, %v1498
  %v1503 = vcombine.low %v1466, %v1468
  %v1505 = vmul.f32 %v1470, %v1503
  %v1507 = vcombine.high %v1505, %v1505
  %v1509 = vsub.f32 %v1499, %v1505
  %v1510 = vsub.f32 %v1500, %v1507
  %vm1511 = vcmask 1043456
  %v1512 = vsel %vm1511, %v1509, 0.0
  %v1513 = vsel %vm1511, %v1510, 0.0
  %v1514 = vadd.f32 %v1512, %v1513
  %1515 = vadd.xlane.f32.xlu0 %v1514
  %v1516 = vpop.xlane.xlu0 %1515
  %vm1517 = vcmask 3072
  %1518 = vst.msk [vmem:[%s12] sm:$0xf] %vm1517, %v1516
  // Predicated region
  $region50: #{coop_comm_forward.3} parent=0 // pred_check
    _
  $region51: #{coop_comm_forward.3} parent=0 // pred_check_branch
    %1520 = sbr.rel (0) target = $region53
  $region52: #{coop_comm_forward.3} parent=0 // pred_region
    _
  $region53: #{coop_comm_forward.3} parent=0 // pred_fallthru
    _
  // Predicated region
  $region54: #{coop_comm_forward.3} parent=0 // pred_check
    _
  $region55: #{coop_comm_forward.3} parent=0 // pred_check_branch
    %1522 = sbr.rel (0) target = $region57
  $region56: #{coop_comm_forward.3} parent=0 // pred_region
    _
  $region57: #{coop_comm_forward.3} parent=0 // pred_fallthru
    _

</llo_original>
